<compile_context>
chip_gen: v6e
topology: v6e:2x2x1
jax: 0.10.0
libtpu: 0.0.40
codegen_flags: <defaults>
</compile_context>

<pallas_src>
import functools

import jax
import jax.numpy as jnp
from jax import lax
from jax.experimental import pallas as pl
from jax.experimental.pallas import tpu as pltpu


def _round_up(x, m):
    return (x + m - 1) // m * m


# Safe on all generations (v5e/v6e: 128 MiB physical, v7x: 64 MiB physical).
_VMEM_LIMIT_BYTES = 32 * 1024 * 1024
_TM_CONV = 512   # target rows per conv matmul tile
_TM_HEAD = 128   # target batch rows per fused-head tile (review: 128-256)


def _choose_tile(m, target):
    """Balanced row tile: multiple of 8, >=2 grid steps whenever legal."""
    if m <= 8:
        return m                                     # single (full) block
    n_steps = max(2, pl.cdiv(m, target))
    tile = _round_up(pl.cdiv(m, n_steps), 8)
    return tile if tile < m else m


# ----------------------------------------------------------------------------
# Pallas kernel: out = relu(x @ w + b); bf16 MXU inputs, f32 accum + epilogue
# ----------------------------------------------------------------------------
def _matmul_bias_relu_kernel(x_ref, w_ref, b_ref, o_ref):
    acc = jnp.dot(x_ref[...], w_ref[...], preferred_element_type=jnp.float32)
    acc = jnp.maximum(acc + b_ref[...], 0.0)         # f32 bias + ReLU epilogue
    o_ref[...] = acc.astype(o_ref.dtype)


def pallas_matmul_bias_relu(x, w, b2, *, out_dtype=jnp.bfloat16,
                            target_tm=_TM_CONV):
    """x: (M, K) bf16, w: (K, N) bf16, b2: (1, N) f32 -> relu(x@w+b) (M, N)."""
    m, k = x.shape
    n = w.shape[1]
    tm = _choose_tile(m, target_tm)
    grid = (pl.cdiv(m, tm),)
    return pl.pallas_call(
        _matmul_bias_relu_kernel,
        out_shape=jax.ShapeDtypeStruct((m, n), out_dtype),
        grid=grid,
        in_specs=[
            pl.BlockSpec((tm, k), lambda i: (i, 0)),
            pl.BlockSpec((k, n), lambda i: (0, 0)),   # VMEM-resident weight
            pl.BlockSpec((1, n), lambda i: (0, 0)),   # VMEM-resident bias
        ],
        out_specs=pl.BlockSpec((tm, n), lambda i: (i, 0)),
        compiler_params=pltpu.CompilerParams(
            dimension_semantics=("parallel",),
            vmem_limit_bytes=_VMEM_LIMIT_BYTES),
    )(x, w, b2)


# ----------------------------------------------------------------------------
# Fused conv3 + fc1 + fc2 head (one pallas_call, batch-tiled)
# ----------------------------------------------------------------------------
def _conv3_fc_head_kernel(p3_ref, w3_ref, b3_ref, wf1_ref, bf1_ref,
                          wf2_ref, bf2_ref, o_ref, *, n_pos):
    # conv3 (bias + ReLU) and the fc1 partial product are evaluated per
    # spatial position, so the conv3 activation never leaves VMEM/vregs and
    # no in-kernel reshape is required; fc1 accumulates in f32.
    acc = None
    for p in range(n_pos):                           # n_pos = h3*w3 (small, static)
        z = jnp.dot(p3_ref[p], w3_ref[...],
                    preferred_element_type=jnp.float32)        # (TB, c3)
        z = jnp.maximum(z + b3_ref[...], 0.0)                   # f32 ReLU
        hp = jnp.dot(z.astype(jnp.bfloat16), wf1_ref[p],
                     preferred_element_type=jnp.float32)        # (TB, fc1)
        acc = hp if acc is None else acc + hp
    h = jnp.maximum(acc + bf1_ref[...], 0.0)                    # fc1 bias+ReLU
    out = jnp.dot(h.astype(jnp.bfloat16), wf2_ref[...],
                  preferred_element_type=jnp.float32)
    o_ref[...] = (out + bf2_ref[...]).astype(o_ref.dtype)


def pallas_conv3_fc_head(p3, w3, b3, wf1, bf1, wf2p, bf2p, *, n_actions,
                         target_tb=_TM_HEAD):
    """p3: (P, B, K3) bf16 spatial-major conv3 patches -> (B, n_actions) f32."""
    n_pos, batch, k3 = p3.shape
    c3 = w3.shape[1]
    fc1 = wf1.shape[2]
    n_pad = wf2p.shape[1]
    tb = _choose_tile(batch, target_tb)
    grid = (pl.cdiv(batch, tb),)
    kernel = functools.partial(_conv3_fc_head_kernel, n_pos=n_pos)
    out = pl.pallas_call(
        kernel,
        out_shape=jax.ShapeDtypeStruct((batch, n_pad), jnp.float32),
        grid=grid,
        in_specs=[
            pl.BlockSpec((n_pos, tb, k3), lambda i: (0, i, 0)),
            pl.BlockSpec((k3, c3), lambda i: (0, 0)),          # resident
            pl.BlockSpec((1, c3), lambda i: (0, 0)),
            pl.BlockSpec((n_pos, c3, fc1), lambda i: (0, 0, 0)),
            pl.BlockSpec((1, fc1), lambda i: (0, 0)),
            pl.BlockSpec((fc1, n_pad), lambda i: (0, 0)),
            pl.BlockSpec((1, n_pad), lambda i: (0, 0)),
        ],
        out_specs=pl.BlockSpec((tb, n_pad), lambda i: (i, 0)),
        compiler_params=pltpu.CompilerParams(
            dimension_semantics=("parallel",),
            vmem_limit_bytes=_VMEM_LIMIT_BYTES),
    )(p3, w3, b3, wf1, bf1, wf2p, bf2p)
    return out[:, :n_actions]


# ----------------------------------------------------------------------------
# im2col glue (plain JAX; pure layout plumbing in NHWC, materialized in bf16)
# ----------------------------------------------------------------------------
def im2col_nhwc(x, kh, kw, stride):
    """x: (B, H, W, C) -> patches (B*OH*OW, KH*KW*C), inner order (kh, kw, c)."""
    B, H, W, C = x.shape
    oh = (H - kh) // stride + 1
    ow = (W - kw) // stride + 1
    slabs = []
    for i in range(kh):
        for j in range(kw):
            slabs.append(
                x[:, i:i + stride * oh:stride, j:j + stride * ow:stride, :])
    p = jnp.stack(slabs, axis=3)                     # (B, oh, ow, kh*kw, C)
    return p.reshape(B * oh * ow, kh * kw * C), oh, ow


def im2col_conv3_spatial_major(x, kh, kw):
    """x: (B, H, W, C) -> (oh*ow, B, kh*kw*C) stride-1 patches (spatial-major)."""
    B, H, W, C = x.shape
    oh, ow = H - kh + 1, W - kw + 1
    slabs = [x[:, i:i + oh, j:j + ow, :] for i in range(kh) for j in range(kw)]
    p = jnp.stack(slabs, axis=3)                     # (B, oh, ow, kh*kw, C)
    p = p.transpose(1, 2, 0, 3, 4)                   # (oh, ow, B, kh*kw, C)
    return p.reshape(oh * ow, B, kh * kw * C)


def conv2d_relu_nhwc(x, w_big, b_big, *, kh, kw, stride, oc, group):
    """NHWC conv + bias + ReLU with lane-dense (128-wide) output stores.

    `group` consecutive output positions are folded into one matmul row
    against the block-diagonal weight `w_big` ((group*K, group*oc) bf16), so
    the Pallas output block is a full 128 lanes wide (unmasked vst)."""
    B = x.shape[0]
    patches, oh, ow = im2col_nhwc(x, kh, kw, stride)  # (M, K) bf16
    m, k = patches.shape
    g = group if (m % group == 0) else 1
    if g == 1:                                        # ragged fallback
        w_use, b_use, x_use = w_big[:k, :oc], b_big[:, :oc], patches
    else:
        w_use, b_use = w_big, b_big
        x_use = patches.reshape(m // g, g * k)        # contiguous, free
    y = pallas_matmul_bias_relu(x_use, w_use, b_use)
    return y.reshape(B, oh, ow, oc)                   # same flat (NHWC) order


# ----------------------------------------------------------------------------
# Full DeepQNetwork forward (jitted); params are pre-prepared once outside.
# ----------------------------------------------------------------------------
def dqn_forward(state_nchw, p, *, n_actions):
    """state: (B, C, H, W) f32 -> (B, n_actions) f32 Q-values."""
    # One layout transpose + one bf16 cast: every downstream patch matrix /
    # activation is materialized and DMA'd as bf16 (math stays f32 in-kernel).
    x = jnp.transpose(state_nchw, (0, 2, 3, 1)).astype(jnp.bfloat16)
    x = conv2d_relu_nhwc(x, p["w1"], p["b1"], kh=8, kw=8, stride=4, oc=32, group=4)
    x = conv2d_relu_nhwc(x, p["w2"], p["b2"], kh=4, kw=4, stride=2, oc=64, group=2)
    p3 = im2col_conv3_spatial_major(x, 3, 3)          # (h3*w3, B, 3*3*64) bf16
    return pallas_conv3_fc_head(p3, p["w3"], p["b3"], p["wf1"], p["bf1"],
                                p["wf2"], p["bf2"], n_actions=n_actions)


# ----------------------------------------------------------------------------
# One-time parameter preparation (outside the jitted forward)
# ----------------------------------------------------------------------------
def _conv_out_hw(h, w, k, s):
    return (h - k) // s + 1, (w - k) // s + 1


def _block_diag(w, g):
    k, n = w.shape
    out = jnp.zeros((g * k, g * n), w.dtype)
    for i in range(g):
        out = out.at[i * k:(i + 1) * k, i * n:(i + 1) * n].set(w)
    return out


def prepare_params(params, input_hw):
    """PyTorch-layout params -> matmul-ready bf16 weights / f32 (1,N) biases."""
    H, W = input_hw

    def conv_w(w):                                    # (OC,C,KH,KW)->(KH*KW*C,OC)
        oc, c, kh, kw = w.shape
        return w.transpose(2, 3, 1, 0).reshape(kh * kw * c, oc).astype(jnp.bfloat16)

    # conv1 / conv2: fold G = 128 // OC output positions per matmul row via a
    # block-diagonal weight -> 128-lane (unmasked) output stores.
    cw1 = conv_w(params["w1"]); g1 = 128 // cw1.shape[1]
    cw2 = conv_w(params["w2"]); g2 = 128 // cw2.shape[1]
    p = {
        "w1": _block_diag(cw1, g1),
        "b1": jnp.tile(params["b1"].reshape(1, -1).astype(jnp.float32), (1, g1)),
        "w2": _block_diag(cw2, g2),
        "b2": jnp.tile(params["b2"].reshape(1, -1).astype(jnp.float32), (1, g2)),
        # conv3's 128 output channels are already lane-dense.
        "w3": conv_w(params["w3"]),
        "b3": params["b3"].reshape(1, -1).astype(jnp.float32),
    }

    h1, w1_ = _conv_out_hw(H, W, 8, 4)
    h2, w2_ = _conv_out_hw(h1, w1_, 4, 2)
    h3, w3_ = _conv_out_hw(h2, w2_, 3, 1)
    c3 = params["w3"].shape[0]

    # fc1: PyTorch columns are (C,H,W)-ordered; regroup once to (h3*w3, c3, fc1)
    # so the fused head consumes conv3's per-position output with no reshape.
    wf1 = params["wf1"]                               # (fc1, C*H*W)
    fc1 = wf1.shape[0]
    wf1 = wf1.reshape(fc1, c3, h3, w3_).transpose(2, 3, 1, 0)   # (h3,w3,c3,fc1)
    p["wf1"] = wf1.reshape(h3 * w3_, c3, fc1).astype(jnp.bfloat16)
    p["bf1"] = params["bf1"].reshape(1, -1).astype(jnp.float32)

    # fc2: (n_actions, fc1) -> (fc1, N_pad) with N padded to 128 lanes.
    wf2 = params["wf2"].T                             # (fc1, n_actions)
    n_act = wf2.shape[1]
    n_pad = max(128, _round_up(n_act, 128))
    p["wf2"] = (jnp.zeros((fc1, n_pad), jnp.float32).at[:, :n_act].set(wf2)
                .astype(jnp.bfloat16))
    p["bf2"] = jnp.zeros((1, n_pad), jnp.float32).at[0, :n_act].set(params["bf2"])
    return p


# ----------------------------------------------------------------------------
# Pure-JAX reference (f32, NCHW — matches the PyTorch module)
# ----------------------------------------------------------------------------
def dqn_forward_ref(state, params):
    dn = ("NCHW", "OIHW", "NCHW")

    def conv(x, w, b, s):
        y = lax.conv_general_dilated(x, w, (s, s), "VALID", dimension_numbers=dn)
        return jnp.maximum(y + b[None, :, None, None], 0.0)

    x = conv(state, params["w1"], params["b1"], 4)
    x = conv(x, params["w2"], params["b2"], 2)
    x = conv(x, params["w3"], params["b3"], 1)
    flat = x.reshape(x.shape[0], -1)
    h = jnp.maximum(flat @ params["wf1"].T + params["bf1"], 0.0)
    return h @ params["wf2"].T + params["bf2"]


# ----------------------------------------------------------------------------
# Deterministic parameter init (synthetic; module __init__ gives the shapes)
# ----------------------------------------------------------------------------
def init_params(key, in_ch, fc_in, fc1_dims, n_actions):
    ks = jax.random.split(key, 10)
    f32 = jnp.float32

    def w(k, shape, scale):
        return (jax.random.normal(k, shape, f32) * scale).astype(f32)

    return {
        "w1": w(ks[0], (32, in_ch, 8, 8), 0.05),  "b1": w(ks[1], (32,), 0.05),
        "w2": w(ks[2], (64, 32, 4, 4), 0.05),     "b2": w(ks[3], (64,), 0.05),
        "w3": w(ks[4], (128, 64, 3, 3), 0.05),    "b3": w(ks[5], (128,), 0.05),
        "wf1": w(ks[6], (fc1_dims, fc_in), 0.05), "bf1": w(ks[7], (fc1_dims,), 0.05),
        "wf2": w(ks[8], (n_actions, fc1_dims), 0.05), "bf2": w(ks[9], (n_actions,), 0.05),
    }


if __name__ == "__main__":
    # Small shapes consistent with the module: input_dims=(4, 44, 44)
    #   conv1(8,s4): 44 -> 10 ; conv2(4,s2): 10 -> 4 ; conv3(3,s1): 4 -> 2
    #   fc_input_dims = 128 * 2 * 2 = 512
    B, C, H, W = 2, 4, 44, 44
    n_actions = 6
    fc1_dims = 512
    fc_in = 128 * 2 * 2

    key = jax.random.PRNGKey(0)
    k_x, k_p = jax.random.split(key)
    state = jax.random.normal(k_x, (B, C, H, W), jnp.float32)
    params = init_params(k_p, C, fc_in, fc1_dims, n_actions)

    prepped = prepare_params(params, (H, W))          # one-time, outside the jit
    fwd = jax.jit(functools.partial(dqn_forward, n_actions=n_actions))
    actions = jax.block_until_ready(fwd(state, prepped))

    ref = dqn_forward_ref(state, params)
    assert actions.shape == (B, n_actions)
    # Tolerance loosened because weights/activations feed the MXU in bf16
    # (accumulation, bias and ReLU remain f32).
    assert jnp.allclose(actions, ref, rtol=5e-2, atol=5e-2), (
        "Pallas output does not match JAX reference")

    print("KERNEL_OK")
</pallas_src>

<mosaic_0001>
module attributes {stable_mosaic.version = 11 : i64} {
  func.func @_matmul_bias_relu_kernel(%arg0: i32, %arg1: memref<32x1024xbf16, #tpu.memory_space<vmem>>, %arg2: memref<1024x128xbf16, #tpu.memory_space<vmem>>, %arg3: memref<1x128xf32, #tpu.memory_space<vmem>>, %arg4: memref<32x128xbf16, #tpu.memory_space<vmem>>) attributes {dimension_semantics = [#tpu.dimension_semantics<parallel>], iteration_bounds = array<i64: 2>, scalar_prefetch = 0 : i64, scratch_operands = 0 : i64, tpu.core_type = #tpu.core_type<tc>, window_params = [{transform_indices = @transform_0, window_bounds = array<i64: 32, 1024>}, {pipeline_mode = #tpu.pipeline_mode<synchronous>, transform_indices = @transform_1, window_bounds = array<i64: 1024, 128>}, {pipeline_mode = #tpu.pipeline_mode<synchronous>, transform_indices = @transform_2, window_bounds = array<i64: 1, 128>}, {transform_indices = @transform_3, window_bounds = array<i64: 32, 128>}]} {
    %c0 = arith.constant 0 : index
    %c0_0 = arith.constant 0 : index
    %0 = vector.load %arg1[%c0, %c0_0] : memref<32x1024xbf16, #tpu.memory_space<vmem>>, vector<32x1024xbf16>
    %c0_1 = arith.constant 0 : index
    %c0_2 = arith.constant 0 : index
    %1 = vector.load %arg2[%c0_1, %c0_2] : memref<1024x128xbf16, #tpu.memory_space<vmem>>, vector<1024x128xbf16>
    %cst = arith.constant dense<0.000000e+00> : vector<32x128xf32>
    %2 = tpu.matmul %0, %1, %cst {dimension_numbers = #tpu.dot_dimension_numbers<[1], [0], [0], [1], [0, 0, 1, 1], [], []>} : vector<32x1024xbf16>, vector<1024x128xbf16>, vector<32x128xf32> -> vector<32x128xf32>
    %c0_3 = arith.constant 0 : index
    %c0_4 = arith.constant 0 : index
    %3 = vector.load %arg3[%c0_3, %c0_4] : memref<1x128xf32, #tpu.memory_space<vmem>>, vector<1x128xf32>
    %4 = vector.broadcast %3 : vector<1x128xf32> to vector<32x128xf32>
    %5 = arith.addf %2, %4 : vector<32x128xf32>
    %cst_5 = arith.constant 0.000000e+00 : f32
    %6 = vector.broadcast %cst_5 : f32 to vector<32x128xf32>
    %7 = arith.maximumf %5, %6 : vector<32x128xf32>
    %8 = arith.truncf %7 : vector<32x128xf32> to vector<32x128xbf16>
    %c0_6 = arith.constant 0 : index
    %c0_7 = arith.constant 0 : index
    %9 = vector.load %arg4[%c0_6, %c0_7] : memref<32x128xbf16, #tpu.memory_space<vmem>>, vector<32x128xbf16>
    tpu.vector_store %arg4[%c0_6, %c0_7], %8 {strides = array<i32>} : memref<32x128xbf16, #tpu.memory_space<vmem>>, vector<32x128xbf16>,
    return
  }
  func.func @transform_0(%arg0: i32) -> (i32, i32) {
    %c0_i32 = arith.constant 0 : i32
    %c0_i32_0 = arith.constant 0 : i32
    return %arg0, %c0_i32 : i32, i32
  }
  func.func @transform_1(%arg0: i32) -> (i32, i32) {
    %c0_i32 = arith.constant 0 : i32
    %c0_i32_0 = arith.constant 0 : i32
    %c0_i32_1 = arith.constant 0 : i32
    return %c0_i32, %c0_i32_0 : i32, i32
  }
  func.func @transform_2(%arg0: i32) -> (i32, i32) {
    %c0_i32 = arith.constant 0 : i32
    %c0_i32_0 = arith.constant 0 : i32
    %c0_i32_1 = arith.constant 0 : i32
    return %c0_i32, %c0_i32_0 : i32, i32
  }
  func.func @transform_3(%arg0: i32) -> (i32, i32) {
    %c0_i32 = arith.constant 0 : i32
    %c0_i32_0 = arith.constant 0 : i32
    return %arg0, %c0_i32 : i32, i32
  }
}

module attributes {stable_mosaic.version = 11 : i64} {
  func.func @_matmul_bias_relu_kernel(%arg0: i32, %arg1: memref<8x1024xbf16, #tpu.memory_space<vmem>>, %arg2: memref<1024x128xbf16, #tpu.memory_space<vmem>>, %arg3: memref<1x128xf32, #tpu.memory_space<vmem>>, %arg4: memref<8x128xbf16, #tpu.memory_space<vmem>>) attributes {dimension_semantics = [#tpu.dimension_semantics<parallel>], iteration_bounds = array<i64: 2>, scalar_prefetch = 0 : i64, scratch_operands = 0 : i64, tpu.core_type = #tpu.core_type<tc>, window_params = [{transform_indices = @transform_0, window_bounds = array<i64: 8, 1024>}, {pipeline_mode = #tpu.pipeline_mode<synchronous>, transform_indices = @transform_1, window_bounds = array<i64: 1024, 128>}, {pipeline_mode = #tpu.pipeline_mode<synchronous>, transform_indices = @transform_2, window_bounds = array<i64: 1, 128>}, {transform_indices = @transform_3, window_bounds = array<i64: 8, 128>}]} {
    %c0 = arith.constant 0 : index
    %c0_0 = arith.constant 0 : index
    %0 = vector.load %arg1[%c0, %c0_0] : memref<8x1024xbf16, #tpu.memory_space<vmem>>, vector<8x1024xbf16>
    %c0_1 = arith.constant 0 : index
    %c0_2 = arith.constant 0 : index
    %1 = vector.load %arg2[%c0_1, %c0_2] : memref<1024x128xbf16, #tpu.memory_space<vmem>>, vector<1024x128xbf16>
    %cst = arith.constant dense<0.000000e+00> : vector<8x128xf32>
    %2 = tpu.matmul %0, %1, %cst {dimension_numbers = #tpu.dot_dimension_numbers<[1], [0], [0], [1], [0, 0, 1, 1], [], []>} : vector<8x1024xbf16>, vector<1024x128xbf16>, vector<8x128xf32> -> vector<8x128xf32>
    %c0_3 = arith.constant 0 : index
    %c0_4 = arith.constant 0 : index
    %3 = vector.load %arg3[%c0_3, %c0_4] : memref<1x128xf32, #tpu.memory_space<vmem>>, vector<1x128xf32>
    %4 = vector.broadcast %3 : vector<1x128xf32> to vector<8x128xf32>
    %5 = arith.addf %2, %4 : vector<8x128xf32>
    %cst_5 = arith.constant 0.000000e+00 : f32
    %6 = vector.broadcast %cst_5 : f32 to vector<8x128xf32>
    %7 = arith.maximumf %5, %6 : vector<8x128xf32>
    %8 = arith.truncf %7 : vector<8x128xf32> to vector<8x128xbf16>
    %c0_6 = arith.constant 0 : index
    %c0_7 = arith.constant 0 : index
    %9 = vector.load %arg4[%c0_6, %c0_7] : memref<8x128xbf16, #tpu.memory_space<vmem>>, vector<8x128xbf16>
    tpu.vector_store %arg4[%c0_6, %c0_7], %8 {strides = array<i32>} : memref<8x128xbf16, #tpu.memory_space<vmem>>, vector<8x128xbf16>,
    return
  }
  func.func @transform_0(%arg0: i32) -> (i32, i32) {
    %c0_i32 = arith.constant 0 : i32
    %c0_i32_0 = arith.constant 0 : i32
    return %arg0, %c0_i32 : i32, i32
  }
  func.func @transform_1(%arg0: i32) -> (i32, i32) {
    %c0_i32 = arith.constant 0 : i32
    %c0_i32_0 = arith.constant 0 : i32
    %c0_i32_1 = arith.constant 0 : i32
    return %c0_i32, %c0_i32_0 : i32, i32
  }
  func.func @transform_2(%arg0: i32) -> (i32, i32) {
    %c0_i32 = arith.constant 0 : i32
    %c0_i32_0 = arith.constant 0 : i32
    %c0_i32_1 = arith.constant 0 : i32
    return %c0_i32, %c0_i32_0 : i32, i32
  }
  func.func @transform_3(%arg0: i32) -> (i32, i32) {
    %c0_i32 = arith.constant 0 : i32
    %c0_i32_0 = arith.constant 0 : i32
    return %arg0, %c0_i32 : i32, i32
  }
}

module attributes {stable_mosaic.version = 11 : i64} {
  func.func @_conv3_fc_head_kernel(%arg0: i32, %arg1: memref<4x2x576xbf16, #tpu.memory_space<vmem>>, %arg2: memref<576x128xbf16, #tpu.memory_space<vmem>>, %arg3: memref<1x128xf32, #tpu.memory_space<vmem>>, %arg4: memref<4x128x512xbf16, #tpu.memory_space<vmem>>, %arg5: memref<1x512xf32, #tpu.memory_space<vmem>>, %arg6: memref<512x128xbf16, #tpu.memory_space<vmem>>, %arg7: memref<1x128xf32, #tpu.memory_space<vmem>>, %arg8: memref<2x128xf32, #tpu.memory_space<vmem>>) attributes {dimension_semantics = [#tpu.dimension_semantics<parallel>], iteration_bounds = array<i64: 1>, scalar_prefetch = 0 : i64, scratch_operands = 0 : i64, tpu.core_type = #tpu.core_type<tc>, window_params = [{transform_indices = @transform_0, window_bounds = array<i64: 4, 2, 576>}, {pipeline_mode = #tpu.pipeline_mode<synchronous>, transform_indices = @transform_1, window_bounds = array<i64: 576, 128>}, {pipeline_mode = #tpu.pipeline_mode<synchronous>, transform_indices = @transform_2, window_bounds = array<i64: 1, 128>}, {pipeline_mode = #tpu.pipeline_mode<synchronous>, transform_indices = @transform_3, window_bounds = array<i64: 4, 128, 512>}, {pipeline_mode = #tpu.pipeline_mode<synchronous>, transform_indices = @transform_4, window_bounds = array<i64: 1, 512>}, {pipeline_mode = #tpu.pipeline_mode<synchronous>, transform_indices = @transform_5, window_bounds = array<i64: 512, 128>}, {pipeline_mode = #tpu.pipeline_mode<synchronous>, transform_indices = @transform_6, window_bounds = array<i64: 1, 128>}, {transform_indices = @transform_7, window_bounds = array<i64: 2, 128>}]} {
    %c0 = arith.constant 0 : index
    %c0_0 = arith.constant 0 : index
    %c0_1 = arith.constant 0 : index
    %0 = vector.load %arg1[%c0, %c0_0, %c0_1] : memref<4x2x576xbf16, #tpu.memory_space<vmem>>, vector<1x2x576xbf16>
    %1 = vector.shape_cast %0 : vector<1x2x576xbf16> to vector<2x576xbf16>
    %c0_2 = arith.constant 0 : index
    %c0_3 = arith.constant 0 : index
    %2 = vector.load %arg2[%c0_2, %c0_3] : memref<576x128xbf16, #tpu.memory_space<vmem>>, vector<576x128xbf16>
    %cst = arith.constant dense<0.000000e+00> : vector<2x128xf32>
    %3 = tpu.matmul %1, %2, %cst {dimension_numbers = #tpu.dot_dimension_numbers<[1], [0], [0], [1], [0, 0, 1, 1], [], []>} : vector<2x576xbf16>, vector<576x128xbf16>, vector<2x128xf32> -> vector<2x128xf32>
    %c0_4 = arith.constant 0 : index
    %c0_5 = arith.constant 0 : index
    %4 = vector.load %arg3[%c0_4, %c0_5] : memref<1x128xf32, #tpu.memory_space<vmem>>, vector<1x128xf32>
    %5 = vector.broadcast %4 : vector<1x128xf32> to vector<2x128xf32>
    %6 = arith.addf %3, %5 : vector<2x128xf32>
    %cst_6 = arith.constant 0.000000e+00 : f32
    %7 = vector.broadcast %cst_6 : f32 to vector<2x128xf32>
    %8 = arith.maximumf %6, %7 : vector<2x128xf32>
    %9 = arith.truncf %8 : vector<2x128xf32> to vector<2x128xbf16>
    %c0_7 = arith.constant 0 : index
    %c0_8 = arith.constant 0 : index
    %c0_9 = arith.constant 0 : index
    %10 = vector.load %arg4[%c0_7, %c0_8, %c0_9] : memref<4x128x512xbf16, #tpu.memory_space<vmem>>, vector<1x128x512xbf16>
    %11 = vector.shape_cast %10 : vector<1x128x512xbf16> to vector<128x512xbf16>
    %cst_10 = arith.constant dense<0.000000e+00> : vector<2x512xf32>
    %12 = tpu.matmul %9, %11, %cst_10 {dimension_numbers = #tpu.dot_dimension_numbers<[1], [0], [0], [1], [0, 0, 1, 1], [], []>} : vector<2x128xbf16>, vector<128x512xbf16>, vector<2x512xf32> -> vector<2x512xf32>
    %c1 = arith.constant 1 : index
    %c0_11 = arith.constant 0 : index
    %c0_12 = arith.constant 0 : index
    %13 = vector.load %arg1[%c1, %c0_11, %c0_12] : memref<4x2x576xbf16, #tpu.memory_space<vmem>>, vector<1x2x576xbf16>
    %14 = vector.shape_cast %13 : vector<1x2x576xbf16> to vector<2x576xbf16>
    %c0_13 = arith.constant 0 : index
    %c0_14 = arith.constant 0 : index
    %15 = vector.load %arg2[%c0_13, %c0_14] : memref<576x128xbf16, #tpu.memory_space<vmem>>, vector<576x128xbf16>
    %cst_15 = arith.constant dense<0.000000e+00> : vector<2x128xf32>
    %16 = tpu.matmul %14, %15, %cst_15 {dimension_numbers = #tpu.dot_dimension_numbers<[1], [0], [0], [1], [0, 0, 1, 1], [], []>} : vector<2x576xbf16>, vector<576x128xbf16>, vector<2x128xf32> -> vector<2x128xf32>
    %c0_16 = arith.constant 0 : index
    %c0_17 = arith.constant 0 : index
    %17 = vector.load %arg3[%c0_16, %c0_17] : memref<1x128xf32, #tpu.memory_space<vmem>>, vector<1x128xf32>
    %18 = vector.broadcast %17 : vector<1x128xf32> to vector<2x128xf32>
    %19 = arith.addf %16, %18 : vector<2x128xf32>
    %cst_18 = arith.constant 0.000000e+00 : f32
    %20 = vector.broadcast %cst_18 : f32 to vector<2x128xf32>
    %21 = arith.maximumf %19, %20 : vector<2x128xf32>
    %22 = arith.truncf %21 : vector<2x128xf32> to vector<2x128xbf16>
    %c1_19 = arith.constant 1 : index
    %c0_20 = arith.constant 0 : index
    %c0_21 = arith.constant 0 : index
    %23 = vector.load %arg4[%c1_19, %c0_20, %c0_21] : memref<4x128x512xbf16, #tpu.memory_space<vmem>>, vector<1x128x512xbf16>
    %24 = vector.shape_cast %23 : vector<1x128x512xbf16> to vector<128x512xbf16>
    %cst_22 = arith.constant dense<0.000000e+00> : vector<2x512xf32>
    %25 = tpu.matmul %22, %24, %cst_22 {dimension_numbers = #tpu.dot_dimension_numbers<[1], [0], [0], [1], [0, 0, 1, 1], [], []>} : vector<2x128xbf16>, vector<128x512xbf16>, vector<2x512xf32> -> vector<2x512xf32>
    %26 = arith.addf %12, %25 : vector<2x512xf32>
    %c2 = arith.constant 2 : index
    %c0_23 = arith.constant 0 : index
    %c0_24 = arith.constant 0 : index
    %27 = vector.load %arg1[%c2, %c0_23, %c0_24] : memref<4x2x576xbf16, #tpu.memory_space<vmem>>, vector<1x2x576xbf16>
    %28 = vector.shape_cast %27 : vector<1x2x576xbf16> to vector<2x576xbf16>
    %c0_25 = arith.constant 0 : index
    %c0_26 = arith.constant 0 : index
    %29 = vector.load %arg2[%c0_25, %c0_26] : memref<576x128xbf16, #tpu.memory_space<vmem>>, vector<576x128xbf16>
    %cst_27 = arith.constant dense<0.000000e+00> : vector<2x128xf32>
    %30 = tpu.matmul %28, %29, %cst_27 {dimension_numbers = #tpu.dot_dimension_numbers<[1], [0], [0], [1], [0, 0, 1, 1], [], []>} : vector<2x576xbf16>, vector<576x128xbf16>, vector<2x128xf32> -> vector<2x128xf32>
    %c0_28 = arith.constant 0 : index
    %c0_29 = arith.constant 0 : index
    %31 = vector.load %arg3[%c0_28, %c0_29] : memref<1x128xf32, #tpu.memory_space<vmem>>, vector<1x128xf32>
    %32 = vector.broadcast %31 : vector<1x128xf32> to vector<2x128xf32>
    %33 = arith.addf %30, %32 : vector<2x128xf32>
    %cst_30 = arith.constant 0.000000e+00 : f32
    %34 = vector.broadcast %cst_30 : f32 to vector<2x128xf32>
    %35 = arith.maximumf %33, %34 : vector<2x128xf32>
    %36 = arith.truncf %35 : vector<2x128xf32> to vector<2x128xbf16>
    %c2_31 = arith.constant 2 : index
    %c0_32 = arith.constant 0 : index
    %c0_33 = arith.constant 0 : index
    %37 = vector.load %arg4[%c2_31, %c0_32, %c0_33] : memref<4x128x512xbf16, #tpu.memory_space<vmem>>, vector<1x128x512xbf16>
    %38 = vector.shape_cast %37 : vector<1x128x512xbf16> to vector<128x512xbf16>
    %cst_34 = arith.constant dense<0.000000e+00> : vector<2x512xf32>
    %39 = tpu.matmul %36, %38, %cst_34 {dimension_numbers = #tpu.dot_dimension_numbers<[1], [0], [0], [1], [0, 0, 1, 1], [], []>} : vector<2x128xbf16>, vector<128x512xbf16>, vector<2x512xf32> -> vector<2x512xf32>
    %40 = arith.addf %26, %39 : vector<2x512xf32>
    %c3 = arith.constant 3 : index
    %c0_35 = arith.constant 0 : index
    %c0_36 = arith.constant 0 : index
    %41 = vector.load %arg1[%c3, %c0_35, %c0_36] : memref<4x2x576xbf16, #tpu.memory_space<vmem>>, vector<1x2x576xbf16>
    %42 = vector.shape_cast %41 : vector<1x2x576xbf16> to vector<2x576xbf16>
    %c0_37 = arith.constant 0 : index
    %c0_38 = arith.constant 0 : index
    %43 = vector.load %arg2[%c0_37, %c0_38] : memref<576x128xbf16, #tpu.memory_space<vmem>>, vector<576x128xbf16>
    %cst_39 = arith.constant dense<0.000000e+00> : vector<2x128xf32>
    %44 = tpu.matmul %42, %43, %cst_39 {dimension_numbers = #tpu.dot_dimension_numbers<[1], [0], [0], [1], [0, 0, 1, 1], [], []>} : vector<2x576xbf16>, vector<576x128xbf16>, vector<2x128xf32> -> vector<2x128xf32>
    %c0_40 = arith.constant 0 : index
    %c0_41 = arith.constant 0 : index
    %45 = vector.load %arg3[%c0_40, %c0_41] : memref<1x128xf32, #tpu.memory_space<vmem>>, vector<1x128xf32>
    %46 = vector.broadcast %45 : vector<1x128xf32> to vector<2x128xf32>
    %47 = arith.addf %44, %46 : vector<2x128xf32>
    %cst_42 = arith.constant 0.000000e+00 : f32
    %48 = vector.broadcast %cst_42 : f32 to vector<2x128xf32>
    %49 = arith.maximumf %47, %48 : vector<2x128xf32>
    %50 = arith.truncf %49 : vector<2x128xf32> to vector<2x128xbf16>
    %c3_43 = arith.constant 3 : index
    %c0_44 = arith.constant 0 : index
    %c0_45 = arith.constant 0 : index
    %51 = vector.load %arg4[%c3_43, %c0_44, %c0_45] : memref<4x128x512xbf16, #tpu.memory_space<vmem>>, vector<1x128x512xbf16>
    %52 = vector.shape_cast %51 : vector<1x128x512xbf16> to vector<128x512xbf16>
    %cst_46 = arith.constant dense<0.000000e+00> : vector<2x512xf32>
    %53 = tpu.matmul %50, %52, %cst_46 {dimension_numbers = #tpu.dot_dimension_numbers<[1], [0], [0], [1], [0, 0, 1, 1], [], []>} : vector<2x128xbf16>, vector<128x512xbf16>, vector<2x512xf32> -> vector<2x512xf32>
    %54 = arith.addf %40, %53 : vector<2x512xf32>
    %c0_47 = arith.constant 0 : index
    %c0_48 = arith.constant 0 : index
    %55 = vector.load %arg5[%c0_47, %c0_48] : memref<1x512xf32, #tpu.memory_space<vmem>>, vector<1x512xf32>
    %56 = vector.broadcast %55 : vector<1x512xf32> to vector<2x512xf32>
    %57 = arith.addf %54, %56 : vector<2x512xf32>
    %cst_49 = arith.constant 0.000000e+00 : f32
    %58 = vector.broadcast %cst_49 : f32 to vector<2x512xf32>
    %59 = arith.maximumf %57, %58 : vector<2x512xf32>
    %60 = arith.truncf %59 : vector<2x512xf32> to vector<2x512xbf16>
    %c0_50 = arith.constant 0 : index
    %c0_51 = arith.constant 0 : index
    %61 = vector.load %arg6[%c0_50, %c0_51] : memref<512x128xbf16, #tpu.memory_space<vmem>>, vector<512x128xbf16>
    %cst_52 = arith.constant dense<0.000000e+00> : vector<2x128xf32>
    %62 = tpu.matmul %60, %61, %cst_52 {dimension_numbers = #tpu.dot_dimension_numbers<[1], [0], [0], [1], [0, 0, 1, 1], [], []>} : vector<2x512xbf16>, vector<512x128xbf16>, vector<2x128xf32> -> vector<2x128xf32>
    %c0_53 = arith.constant 0 : index
    %c0_54 = arith.constant 0 : index
    %63 = vector.load %arg7[%c0_53, %c0_54] : memref<1x128xf32, #tpu.memory_space<vmem>>, vector<1x128xf32>
    %64 = vector.broadcast %63 : vector<1x128xf32> to vector<2x128xf32>
    %65 = arith.addf %62, %64 : vector<2x128xf32>
    %c0_55 = arith.constant 0 : index
    %c0_56 = arith.constant 0 : index
    %66 = vector.load %arg8[%c0_55, %c0_56] : memref<2x128xf32, #tpu.memory_space<vmem>>, vector<2x128xf32>
    tpu.vector_store %arg8[%c0_55, %c0_56], %65 {strides = array<i32>} : memref<2x128xf32, #tpu.memory_space<vmem>>, vector<2x128xf32>,
    return
  }
  func.func @transform_0(%arg0: i32) -> (i32, i32, i32) {
    %c0_i32 = arith.constant 0 : i32
    %c0_i32_0 = arith.constant 0 : i32
    %c0_i32_1 = arith.constant 0 : i32
    return %c0_i32, %arg0, %c0_i32_0 : i32, i32, i32
  }
  func.func @transform_1(%arg0: i32) -> (i32, i32) {
    %c0_i32 = arith.constant 0 : i32
    %c0_i32_0 = arith.constant 0 : i32
    %c0_i32_1 = arith.constant 0 : i32
    return %c0_i32, %c0_i32_0 : i32, i32
  }
  func.func @transform_2(%arg0: i32) -> (i32, i32) {
    %c0_i32 = arith.constant 0 : i32
    %c0_i32_0 = arith.constant 0 : i32
    %c0_i32_1 = arith.constant 0 : i32
    return %c0_i32, %c0_i32_0 : i32, i32
  }
  func.func @transform_3(%arg0: i32) -> (i32, i32, i32) {
    %c0_i32 = arith.constant 0 : i32
    %c0_i32_0 = arith.constant 0 : i32
    %c0_i32_1 = arith.constant 0 : i32
    %c0_i32_2 = arith.constant 0 : i32
    return %c0_i32, %c0_i32_0, %c0_i32_1 : i32, i32, i32
  }
  func.func @transform_4(%arg0: i32) -> (i32, i32) {
    %c0_i32 = arith.constant 0 : i32
    %c0_i32_0 = arith.constant 0 : i32
    %c0_i32_1 = arith.constant 0 : i32
    return %c0_i32, %c0_i32_0 : i32, i32
  }
  func.func @transform_5(%arg0: i32) -> (i32, i32) {
    %c0_i32 = arith.constant 0 : i32
    %c0_i32_0 = arith.constant 0 : i32
    %c0_i32_1 = arith.constant 0 : i32
    return %c0_i32, %c0_i32_0 : i32, i32
  }
  func.func @transform_6(%arg0: i32) -> (i32, i32) {
    %c0_i32 = arith.constant 0 : i32
    %c0_i32_0 = arith.constant 0 : i32
    %c0_i32_1 = arith.constant 0 : i32
    return %c0_i32, %c0_i32_0 : i32, i32
  }
  func.func @transform_7(%arg0: i32) -> (i32, i32) {
    %c0_i32 = arith.constant 0 : i32
    %c0_i32_0 = arith.constant 0 : i32
    return %arg0, %c0_i32 : i32, i32
  }
}

</mosaic_0001>

<llo_original>
// kernel: dqn_forward.3
$region0: #{dqn_forward.3}
  #allocation0 [shape = 'u32[]', space=smem, size = 0x4, offset = 0x4, fixed_abs, tag = 'smem constant byte address 0x4 - core index']
  #allocation1 [shape = 'u32[144,128]{1,0:T(1,128)}', space=vmem, size = 0x12000, scoped, tag = 'internal scratch']
  %s0 = inlined_call_operand.vmem [shape: bf16[50,1024], index: 0, kind: input, shape index: {}]
  %s1 = inlined_call_operand.vmem [shape: bf16[1024,128], index: 1, kind: input, shape index: {}]
  %s2 = inlined_call_operand.vmem [shape: f32[1,128], index: 2, kind: input, shape index: {}]
  %s3 = inlined_call_operand.vmem [shape: bf16[50,128], index: 3, kind: output, shape index: {}]
  %s4 = sld [smem:[#allocation0]]
  $region89: #{dqn_forward.3} parent=0
    _
  %s6 = ssub.s32 1, %s4
  %s7 = scalar_select 0, %s6, %s4
  $region1: #{dqn_forward.3} parent=0
    #allocation2 [shape = 'u8[16384]{0}', space=vmem, size = 0x4000, scoped, tag = 'output window, operand 0']
    loop: start=0, step=1, limit=4
    $region2: #{dqn_forward.3} parent=1 // loop_pre_header
      _
    $region3: #{dqn_forward.3} parent=1 // loop_header
      %s9 = sphi 0, %s13
      %p10 = scmp.ge.s32.totalorder %s9, 4
      %s19 = sphi 0, %s21
      %s22 = sphi 0, %s19
      %s23 = sphi 0, %s22
      %s39 = sphi 0, %s23
      %s43 = sphi 0, %s43
      %s45 = sphi 0, %s43
      %s46 = sphi 0, %s45
      %s60 = sphi 0, %s46
      %s64 = sphi 0, %s64
      %s66 = sphi 0, %s64
      %s67 = sphi 0, %s66
      %s81 = sphi 0, %s67
      %s87 = sphi 0, %s89
      %s90 = sphi 0, %s87
      %s91 = sphi 0, %s90
      %s107 = sphi 0, %s91
    $region4: #{dqn_forward.3} parent=1 // loop_header_branch
      %12 = sbr.rel (%p10) target = $region8
    $region5: #{dqn_forward.3} parent=1 // loop_body
      %s14 = ssub.s32 %s9, 1
      %s15 = ssub.s32 %s9, 2
      %s16 = sadd.s32 %s9, 1
      %s17 = ssub.s32 %s9, %s16
      %p18 = scmp.eq.s32.totalorder %s17, 0
      %s20 = sadd.s32 %s19, 1
      %s21 = scalar_select %p18, %s19, %s20
      %p24 = pneg %p18
      %p25 = scmp.eq.s32.totalorder %s9, 1
      %p26 = por %p24, %p25
      %p27 = scmp.ne.s32.totalorder %s19, %s22
      %p28 = scmp.eq.s32.totalorder %s9, 0
      %p29 = por %p27, %p28
      %p30 = scmp.ne.s32.totalorder %s19, %s22
      %p31 = scmp.eq.s32.totalorder %s14, 1
      %p32 = por %p30, %p31
      %p33 = scmp.ne.s32.totalorder %s22, %s23
      %p34 = scmp.eq.s32.totalorder %s14, 0
      %p35 = por %p33, %p34
      %p36 = scmp.ne.s32.totalorder %s22, %s23
      %p37 = scmp.eq.s32.totalorder %s15, 1
      %p38 = por %p36, %p37
      %p40 = scmp.ne.s32.totalorder %s23, %s39
      %p41 = scmp.eq.s32.totalorder %s15, 0
      %p42 = por %p40, %p41
      %s44 = sadd.s32 %s43, 1
      %p47 = scmp.eq.s32.totalorder %s9, 1
      %p48 = scmp.ne.s32.totalorder %s43, %s45
      %p49 = scmp.eq.s32.totalorder %s9, 0
      %p50 = por %p48, %p49
      %p51 = scmp.ne.s32.totalorder %s43, %s45
      %p52 = scmp.eq.s32.totalorder %s14, 1
      %p53 = por %p51, %p52
      %p54 = scmp.ne.s32.totalorder %s45, %s46
      %p55 = scmp.eq.s32.totalorder %s14, 0
      %p56 = por %p54, %p55
      %p57 = scmp.ne.s32.totalorder %s45, %s46
      %p58 = scmp.eq.s32.totalorder %s15, 1
      %p59 = por %p57, %p58
      %p61 = scmp.ne.s32.totalorder %s46, %s60
      %p62 = scmp.eq.s32.totalorder %s15, 0
      %p63 = por %p61, %p62
      %s65 = sadd.s32 %s64, 1
      %p68 = scmp.eq.s32.totalorder %s9, 1
      %p69 = scmp.ne.s32.totalorder %s64, %s66
      %p70 = scmp.eq.s32.totalorder %s9, 0
      %p71 = por %p69, %p70
      %p72 = scmp.ne.s32.totalorder %s64, %s66
      %p73 = scmp.eq.s32.totalorder %s14, 1
      %p74 = por %p72, %p73
      %p75 = scmp.ne.s32.totalorder %s66, %s67
      %p76 = scmp.eq.s32.totalorder %s14, 0
      %p77 = por %p75, %p76
      %p78 = scmp.ne.s32.totalorder %s66, %s67
      %p79 = scmp.eq.s32.totalorder %s15, 1
      %p80 = por %p78, %p79
      %p82 = scmp.ne.s32.totalorder %s67, %s81
      %p83 = scmp.eq.s32.totalorder %s15, 0
      %p84 = por %p82, %p83
      %s85 = ssub.s32 %s9, %s16
      %p86 = scmp.eq.s32.totalorder %s85, 0
      %s88 = sadd.s32 %s87, 1
      %s89 = scalar_select %p86, %s87, %s88
      %p92 = pneg %p86
      %p93 = scmp.eq.s32.totalorder %s9, 1
      %p94 = por %p92, %p93
      %p95 = scmp.ne.s32.totalorder %s87, %s90
      %p96 = scmp.eq.s32.totalorder %s9, 0
      %p97 = por %p95, %p96
      %p98 = scmp.ne.s32.totalorder %s87, %s90
      %p99 = scmp.eq.s32.totalorder %s14, 1
      %p100 = por %p98, %p99
      %p101 = scmp.ne.s32.totalorder %s90, %s91
      %p102 = scmp.eq.s32.totalorder %s14, 0
      %p103 = por %p101, %p102
      %p104 = scmp.ne.s32.totalorder %s90, %s91
      %p105 = scmp.eq.s32.totalorder %s15, 1
      %p106 = por %p104, %p105
      %p108 = scmp.ne.s32.totalorder %s91, %s107
      %p109 = scmp.eq.s32.totalorder %s15, 0
      %p110 = por %p108, %p109
      %p111 = scmp.le.s32.totalorder 1, %s9
      %p112 = scmp.lt.s32.totalorder %s9, 3
      %p113 = pnand %p111, %p112
      %p114 = pneg %p113
      // Predicated region
      $region9: #{dqn_forward.3} parent=5 // pred_check
        _
      $region10: #{dqn_forward.3} parent=5 // pred_check_branch
        %116 = sbr.rel (%p113) target = $region12
      $region11: #{dqn_forward.3} parent=5 // pred_region
        %s117 = ssub.s32 %s9, 1
        // Predicated region
        $region13: #{dqn_forward.3} parent=11 // pred_check
          %p118 = pneg %p56
        $region14: #{dqn_forward.3} parent=11 // pred_check_branch
          %120 = sbr.rel (%p118) target = $region16
        $region15: #{dqn_forward.3} parent=11 // pred_region
          _
        $region16: #{dqn_forward.3} parent=11 // pred_fallthru
          _
        // Predicated region
        $region17: #{dqn_forward.3} parent=11 // pred_check
          %p121 = pneg %p77
        $region18: #{dqn_forward.3} parent=11 // pred_check_branch
          %123 = sbr.rel (%p121) target = $region20
        $region19: #{dqn_forward.3} parent=11 // pred_region
          _
        $region20: #{dqn_forward.3} parent=11 // pred_fallthru
          _
      $region12: #{dqn_forward.3} parent=5 // pred_fallthru
        _
      %p124 = scmp.lt.s32.totalorder %s9, 2
      // Predicated region
      $region21: #{dqn_forward.3} parent=5 // pred_check
        %p125 = pneg %p124
      $region22: #{dqn_forward.3} parent=5 // pred_check_branch
        %127 = sbr.rel (%p125) target = $region24
      $region23: #{dqn_forward.3} parent=5 // pred_region
        // Predicated region
        $region25: #{dqn_forward.3} parent=23 // pred_check
          %p128 = pneg %p29
        $region26: #{dqn_forward.3} parent=23 // pred_check_branch
          %130 = sbr.rel (%p128) target = $region28
        $region27: #{dqn_forward.3} parent=23 // pred_region
          %s131 = smul.u32 4, %s9
          %s132 = ssub.s32 7, %s131
          %p133 = scmp.lt.s32.totalorder %s132, 4
          %s134 = scalar_select %p133, %s132, 4
          %s135 = smul.u32 64, %s134
          %s136 = smul.u32 %s135, 8
          %p137 = scmp.lt.s32.totalorder %s131, 6
          %s138 = scalar_select %p137, %s131, 6
          %s139 = smul.addr %s138, 8
          %s140 = smul.addr %s139, 4
          %s141 = scalar_lea.vmem %s0, %s140
          %s142 = smul.u32 4, %s9
          %s143 = ssub.s32 7, %s142
          %p144 = scmp.lt.s32.totalorder %s143, 4
          %s145 = scalar_select %p144, %s143, 4
          %s146 = smul.u32 64, %s145
          %s147 = smul.u32 %s146, 8
        $region28: #{dqn_forward.3} parent=23 // pred_fallthru
          _
      $region24: #{dqn_forward.3} parent=5 // pred_fallthru
        _
      %p148 = scmp.le.s32.totalorder 1, %s9
      %p149 = scmp.lt.s32.totalorder %s9, 3
      %p150 = pnand %p148, %p149
      %p151 = pneg %p150
      // Predicated region
      $region29: #{dqn_forward.3} parent=5 // pred_check
        _
      $region30: #{dqn_forward.3} parent=5 // pred_check_branch
        %153 = sbr.rel (%p150) target = $region32
      $region31: #{dqn_forward.3} parent=5 // pred_region
        %s154 = ssub.s32 %s9, 1
        %s155 = smul.u32 4, %s14
        %s156 = ssub.s32 7, %s155
        %p157 = scmp.lt.s32.totalorder %s156, 4
        %s158 = scalar_select %p157, %s156, 4
        %s159 = smul.u32 64, %s158
        %s160 = smul.u32 %s159, 8
        %p161 = scmp.lt.s32.totalorder %s155, 6
        %s162 = scalar_select %p161, %s155, 6
        %s163 = smul.addr %s162, 8
        %s164 = smul.addr %s163, 4
        %s165 = scalar_lea.vmem %s0, %s164
        %p166 = pneg %p35
        %p167 = pneg %p32
        %p168 = pneg %p56
        %p169 = pneg %p53
        %p170 = pneg %p77
        %p171 = pneg %p74
        %p172 = pneg %p103
        %p173 = pneg %p100
        %s174 = sand.u32 %s90, 1
        %s175 = sand.u32 %s90, 1
        %s176 = smul.addr %s175, 16
        %s177 = scalar_lea.vmem [#allocation2], %s176
        %s178 = smul.u32 4, %s14
        %s179 = ssub.s32 7, %s178
        %p180 = scmp.lt.s32.totalorder %s179, 4
        %s181 = scalar_select %p180, %s179, 4
        %s182 = smul.u32 64, %s181
        %s183 = smul.u32 %s182, 8
        %p184 = scmp.lt.s32.totalorder %s178, 6
        %s185 = scalar_select %p184, %s178, 6
        %s186 = smul.addr %s185, 8
        %s187 = smul.addr %s186, 4
        %s188 = scalar_lea.vmem %s0, %s187
        %s189 = smul.u32 4, %s14
        %s190 = ssub.s32 7, %s189
        %p191 = scmp.lt.s32.totalorder %s190, 4
        %s192 = scalar_select %p191, %s190, 4
        %s193 = smul.u32 64, %s192
        %s194 = smul.u32 %s193, 8
        %s195 = smul.u32 4, %s14
        %s196 = ssub.s32 7, %s195
        %p197 = scmp.lt.s32.totalorder %s196, 4
        %s198 = scalar_select %p197, %s196, 4
        %s199 = smul.u32 64, %s198
        %v201 = vld [vmem:[%s188] sm:$0xff]
        %v202 = vld [vmem:[%s188 + $0x8] sm:$0xff]
        %v203 = vld [vmem:[%s188 + $0x10] sm:$0xff]
        %v204 = vld [vmem:[%s188 + $0x18] sm:$0xff]
        %v205 = vld [vmem:[%s188 + $0x20] sm:$0xff]
        %v206 = vld [vmem:[%s188 + $0x28] sm:$0xff]
        %v207 = vld [vmem:[%s188 + $0x30] sm:$0xff]
        %v208 = vld [vmem:[%s188 + $0x38] sm:$0xff]
        %v209 = vld [vmem:[%s188 + $0x40] sm:$0xff]
        %v210 = vld [vmem:[%s188 + $0x48] sm:$0xff]
        %v211 = vld [vmem:[%s188 + $0x50] sm:$0xff]
        %v212 = vld [vmem:[%s188 + $0x58] sm:$0xff]
        %v213 = vld [vmem:[%s188 + $0x60] sm:$0xff]
        %v214 = vld [vmem:[%s188 + $0x68] sm:$0xff]
        %v215 = vld [vmem:[%s188 + $0x70] sm:$0xff]
        %v216 = vld [vmem:[%s188 + $0x78] sm:$0xff]
        %v217 = vld [vmem:[%s1] sm:$0xf]
        %v218 = vld [vmem:[%s1 + $0x4] sm:$0xf]
        %v219 = vld [vmem:[%s1 + $0x8] sm:$0xf]
        %v220 = vld [vmem:[%s1 + $0xc] sm:$0xf]
        %v221 = vld [vmem:[%s1 + $0x10] sm:$0xf]
        %v222 = vld [vmem:[%s1 + $0x14] sm:$0xf]
        %v223 = vld [vmem:[%s1 + $0x18] sm:$0xf]
        %v224 = vld [vmem:[%s1 + $0x1c] sm:$0xf]
        %v225 = vld [vmem:[%s1 + $0x20] sm:$0xf]
        %v226 = vld [vmem:[%s1 + $0x24] sm:$0xf]
        %v227 = vld [vmem:[%s1 + $0x28] sm:$0xf]
        %v228 = vld [vmem:[%s1 + $0x2c] sm:$0xf]
        %v229 = vld [vmem:[%s1 + $0x30] sm:$0xf]
        %v230 = vld [vmem:[%s1 + $0x34] sm:$0xf]
        %v231 = vld [vmem:[%s1 + $0x38] sm:$0xf]
        %v232 = vld [vmem:[%s1 + $0x3c] sm:$0xf]
        %v233 = vld [vmem:[%s1 + $0x40] sm:$0xf]
        %v234 = vld [vmem:[%s1 + $0x44] sm:$0xf]
        %v235 = vld [vmem:[%s1 + $0x48] sm:$0xf]
        %v236 = vld [vmem:[%s1 + $0x4c] sm:$0xf]
        %v237 = vld [vmem:[%s1 + $0x50] sm:$0xf]
        %v238 = vld [vmem:[%s1 + $0x54] sm:$0xf]
        %v239 = vld [vmem:[%s1 + $0x58] sm:$0xf]
        %v240 = vld [vmem:[%s1 + $0x5c] sm:$0xf]
        %v241 = vld [vmem:[%s1 + $0x60] sm:$0xf]
        %v242 = vld [vmem:[%s1 + $0x64] sm:$0xf]
        %v243 = vld [vmem:[%s1 + $0x68] sm:$0xf]
        %v244 = vld [vmem:[%s1 + $0x6c] sm:$0xf]
        %v245 = vld [vmem:[%s1 + $0x70] sm:$0xf]
        %v246 = vld [vmem:[%s1 + $0x74] sm:$0xf]
        %v247 = vld [vmem:[%s1 + $0x78] sm:$0xf]
        %v248 = vld [vmem:[%s1 + $0x7c] sm:$0xf]
        %v249 = vld [vmem:[%s1 + $0x80] sm:$0xf]
        %v250 = vld [vmem:[%s1 + $0x84] sm:$0xf]
        %v251 = vld [vmem:[%s1 + $0x88] sm:$0xf]
        %v252 = vld [vmem:[%s1 + $0x8c] sm:$0xf]
        %v253 = vld [vmem:[%s1 + $0x90] sm:$0xf]
        %v254 = vld [vmem:[%s1 + $0x94] sm:$0xf]
        %v255 = vld [vmem:[%s1 + $0x98] sm:$0xf]
        %v256 = vld [vmem:[%s1 + $0x9c] sm:$0xf]
        %v257 = vld [vmem:[%s1 + $0xa0] sm:$0xf]
        %v258 = vld [vmem:[%s1 + $0xa4] sm:$0xf]
        %v259 = vld [vmem:[%s1 + $0xa8] sm:$0xf]
        %v260 = vld [vmem:[%s1 + $0xac] sm:$0xf]
        %v261 = vld [vmem:[%s1 + $0xb0] sm:$0xf]
        %v262 = vld [vmem:[%s1 + $0xb4] sm:$0xf]
        %v263 = vld [vmem:[%s1 + $0xb8] sm:$0xf]
        %v264 = vld [vmem:[%s1 + $0xbc] sm:$0xf]
        %v265 = vld [vmem:[%s1 + $0xc0] sm:$0xf]
        %v266 = vld [vmem:[%s1 + $0xc4] sm:$0xf]
        %v267 = vld [vmem:[%s1 + $0xc8] sm:$0xf]
        %v268 = vld [vmem:[%s1 + $0xcc] sm:$0xf]
        %v269 = vld [vmem:[%s1 + $0xd0] sm:$0xf]
        %v270 = vld [vmem:[%s1 + $0xd4] sm:$0xf]
        %v271 = vld [vmem:[%s1 + $0xd8] sm:$0xf]
        %v272 = vld [vmem:[%s1 + $0xdc] sm:$0xf]
        %v273 = vld [vmem:[%s1 + $0xe0] sm:$0xf]
        %v274 = vld [vmem:[%s1 + $0xe4] sm:$0xf]
        %v275 = vld [vmem:[%s1 + $0xe8] sm:$0xf]
        %v276 = vld [vmem:[%s1 + $0xec] sm:$0xf]
        %v277 = vld [vmem:[%s1 + $0xf0] sm:$0xf]
        %v278 = vld [vmem:[%s1 + $0xf4] sm:$0xf]
        %v279 = vld [vmem:[%s1 + $0xf8] sm:$0xf]
        %v280 = vld [vmem:[%s1 + $0xfc] sm:$0xf]
        %v281 = vld [vmem:[%s1 + $0x100] sm:$0xf]
        %v282 = vld [vmem:[%s1 + $0x104] sm:$0xf]
        %v283 = vld [vmem:[%s1 + $0x108] sm:$0xf]
        %v284 = vld [vmem:[%s1 + $0x10c] sm:$0xf]
        %v285 = vld [vmem:[%s1 + $0x110] sm:$0xf]
        %v286 = vld [vmem:[%s1 + $0x114] sm:$0xf]
        %v287 = vld [vmem:[%s1 + $0x118] sm:$0xf]
        %v288 = vld [vmem:[%s1 + $0x11c] sm:$0xf]
        %v289 = vld [vmem:[%s1 + $0x120] sm:$0xf]
        %v290 = vld [vmem:[%s1 + $0x124] sm:$0xf]
        %v291 = vld [vmem:[%s1 + $0x128] sm:$0xf]
        %v292 = vld [vmem:[%s1 + $0x12c] sm:$0xf]
        %v293 = vld [vmem:[%s1 + $0x130] sm:$0xf]
        %v294 = vld [vmem:[%s1 + $0x134] sm:$0xf]
        %v295 = vld [vmem:[%s1 + $0x138] sm:$0xf]
        %v296 = vld [vmem:[%s1 + $0x13c] sm:$0xf]
        %v297 = vld [vmem:[%s1 + $0x140] sm:$0xf]
        %v298 = vld [vmem:[%s1 + $0x144] sm:$0xf]
        %v299 = vld [vmem:[%s1 + $0x148] sm:$0xf]
        %v300 = vld [vmem:[%s1 + $0x14c] sm:$0xf]
        %v301 = vld [vmem:[%s1 + $0x150] sm:$0xf]
        %v302 = vld [vmem:[%s1 + $0x154] sm:$0xf]
        %v303 = vld [vmem:[%s1 + $0x158] sm:$0xf]
        %v304 = vld [vmem:[%s1 + $0x15c] sm:$0xf]
        %v305 = vld [vmem:[%s1 + $0x160] sm:$0xf]
        %v306 = vld [vmem:[%s1 + $0x164] sm:$0xf]
        %v307 = vld [vmem:[%s1 + $0x168] sm:$0xf]
        %v308 = vld [vmem:[%s1 + $0x16c] sm:$0xf]
        %v309 = vld [vmem:[%s1 + $0x170] sm:$0xf]
        %v310 = vld [vmem:[%s1 + $0x174] sm:$0xf]
        %v311 = vld [vmem:[%s1 + $0x178] sm:$0xf]
        %v312 = vld [vmem:[%s1 + $0x17c] sm:$0xf]
        %v313 = vld [vmem:[%s1 + $0x180] sm:$0xf]
        %v314 = vld [vmem:[%s1 + $0x184] sm:$0xf]
        %v315 = vld [vmem:[%s1 + $0x188] sm:$0xf]
        %v316 = vld [vmem:[%s1 + $0x18c] sm:$0xf]
        %v317 = vld [vmem:[%s1 + $0x190] sm:$0xf]
        %v318 = vld [vmem:[%s1 + $0x194] sm:$0xf]
        %v319 = vld [vmem:[%s1 + $0x198] sm:$0xf]
        %v320 = vld [vmem:[%s1 + $0x19c] sm:$0xf]
        %v321 = vld [vmem:[%s1 + $0x1a0] sm:$0xf]
        %v322 = vld [vmem:[%s1 + $0x1a4] sm:$0xf]
        %v323 = vld [vmem:[%s1 + $0x1a8] sm:$0xf]
        %v324 = vld [vmem:[%s1 + $0x1ac] sm:$0xf]
        %v325 = vld [vmem:[%s1 + $0x1b0] sm:$0xf]
        %v326 = vld [vmem:[%s1 + $0x1b4] sm:$0xf]
        %v327 = vld [vmem:[%s1 + $0x1b8] sm:$0xf]
        %v328 = vld [vmem:[%s1 + $0x1bc] sm:$0xf]
        %v329 = vld [vmem:[%s1 + $0x1c0] sm:$0xf]
        %v330 = vld [vmem:[%s1 + $0x1c4] sm:$0xf]
        %v331 = vld [vmem:[%s1 + $0x1c8] sm:$0xf]
        %v332 = vld [vmem:[%s1 + $0x1cc] sm:$0xf]
        %v333 = vld [vmem:[%s1 + $0x1d0] sm:$0xf]
        %v334 = vld [vmem:[%s1 + $0x1d4] sm:$0xf]
        %v335 = vld [vmem:[%s1 + $0x1d8] sm:$0xf]
        %v336 = vld [vmem:[%s1 + $0x1dc] sm:$0xf]
        %v337 = vld [vmem:[%s1 + $0x1e0] sm:$0xf]
        %v338 = vld [vmem:[%s1 + $0x1e4] sm:$0xf]
        %v339 = vld [vmem:[%s1 + $0x1e8] sm:$0xf]
        %v340 = vld [vmem:[%s1 + $0x1ec] sm:$0xf]
        %v341 = vld [vmem:[%s1 + $0x1f0] sm:$0xf]
        %v342 = vld [vmem:[%s1 + $0x1f4] sm:$0xf]
        %v343 = vld [vmem:[%s1 + $0x1f8] sm:$0xf]
        %v344 = vld [vmem:[%s1 + $0x1fc] sm:$0xf]
        %v345 = vld [vmem:[%s2] sm:$0x1]
        %v347 = vlaneseq
        %v348 = vshrl.u32 %v347, 7
        %v349 = vsub.s32 0, %v348
        %v350 = vrot.slane %v345, %v349
        %v368 = vunpack.c.l.b16 %v201
        %v369 = vunpack.c.h.b16 %v201
        %v370 = vunpack.c.l.b16 %v202
        %v371 = vunpack.c.h.b16 %v202
        %v372 = vunpack.c.l.b16 %v203
        %v373 = vunpack.c.h.b16 %v203
        %v374 = vunpack.c.l.b16 %v204
        %v375 = vunpack.c.h.b16 %v204
        %v376 = vunpack.c.l.b16 %v205
        %v377 = vunpack.c.h.b16 %v205
        %v378 = vunpack.c.l.b16 %v206
        %v379 = vunpack.c.h.b16 %v206
        %v380 = vunpack.c.l.b16 %v207
        %v381 = vunpack.c.h.b16 %v207
        %v382 = vunpack.c.l.b16 %v208
        %v383 = vunpack.c.h.b16 %v208
        %v384 = vunpack.c.l.b16 %v209
        %v385 = vunpack.c.h.b16 %v209
        %v386 = vunpack.c.l.b16 %v210
        %v387 = vunpack.c.h.b16 %v210
        %v388 = vunpack.c.l.b16 %v211
        %v389 = vunpack.c.h.b16 %v211
        %v390 = vunpack.c.l.b16 %v212
        %v391 = vunpack.c.h.b16 %v212
        %v392 = vunpack.c.l.b16 %v213
        %v393 = vunpack.c.h.b16 %v213
        %v394 = vunpack.c.l.b16 %v214
        %v395 = vunpack.c.h.b16 %v214
        %v396 = vunpack.c.l.b16 %v215
        %v397 = vunpack.c.h.b16 %v215
        %v398 = vunpack.c.l.b16 %v216
        %v399 = vunpack.c.h.b16 %v216
        %v400 = vpack.c.b16 %v376, %v368
        %v401 = vpack.c.b16 %v377, %v369
        %v402 = vpack.c.b16 %v378, %v370
        %v403 = vpack.c.b16 %v379, %v371
        %v404 = vpack.c.b16 %v380, %v372
        %v405 = vpack.c.b16 %v381, %v373
        %v406 = vpack.c.b16 %v382, %v374
        %v407 = vpack.c.b16 %v383, %v375
        %v408 = vpack.c.b16 %v392, %v384
        %v409 = vpack.c.b16 %v393, %v385
        %v410 = vpack.c.b16 %v394, %v386
        %v411 = vpack.c.b16 %v395, %v387
        %v412 = vpack.c.b16 %v396, %v388
        %v413 = vpack.c.b16 %v397, %v389
        %v414 = vpack.c.b16 %v398, %v390
        %v415 = vpack.c.b16 %v399, %v391
        %v560 = vunpack.c.l.b16 %v217
        %v561 = vunpack.c.l.b16 %v218
        %v562 = vunpack.c.l.b16 %v219
        %v563 = vunpack.c.l.b16 %v220
        %v564 = vunpack.c.l.b16 %v221
        %v565 = vunpack.c.l.b16 %v222
        %v566 = vunpack.c.l.b16 %v223
        %v567 = vunpack.c.l.b16 %v224
        %v568 = vunpack.c.l.b16 %v225
        %v569 = vunpack.c.l.b16 %v226
        %v570 = vunpack.c.l.b16 %v227
        %v571 = vunpack.c.l.b16 %v228
        %v572 = vunpack.c.l.b16 %v229
        %v573 = vunpack.c.l.b16 %v230
        %v574 = vunpack.c.l.b16 %v231
        %v575 = vunpack.c.l.b16 %v232
        %v576 = vunpack.c.l.b16 %v233
        %v577 = vunpack.c.l.b16 %v234
        %v578 = vunpack.c.l.b16 %v235
        %v579 = vunpack.c.l.b16 %v236
        %v580 = vunpack.c.l.b16 %v237
        %v581 = vunpack.c.l.b16 %v238
        %v582 = vunpack.c.l.b16 %v239
        %v583 = vunpack.c.l.b16 %v240
        %v584 = vunpack.c.l.b16 %v241
        %v585 = vunpack.c.l.b16 %v242
        %v586 = vunpack.c.l.b16 %v243
        %v587 = vunpack.c.l.b16 %v244
        %v588 = vunpack.c.l.b16 %v245
        %v589 = vunpack.c.l.b16 %v246
        %v590 = vunpack.c.l.b16 %v247
        %v591 = vunpack.c.l.b16 %v248
        %v592 = vunpack.c.l.b16 %v249
        %v593 = vunpack.c.l.b16 %v250
        %v594 = vunpack.c.l.b16 %v251
        %v595 = vunpack.c.l.b16 %v252
        %v596 = vunpack.c.l.b16 %v253
        %v597 = vunpack.c.l.b16 %v254
        %v598 = vunpack.c.l.b16 %v255
        %v599 = vunpack.c.l.b16 %v256
        %v600 = vunpack.c.l.b16 %v257
        %v601 = vunpack.c.l.b16 %v258
        %v602 = vunpack.c.l.b16 %v259
        %v603 = vunpack.c.l.b16 %v260
        %v604 = vunpack.c.l.b16 %v261
        %v605 = vunpack.c.l.b16 %v262
        %v606 = vunpack.c.l.b16 %v263
        %v607 = vunpack.c.l.b16 %v264
        %v608 = vunpack.c.l.b16 %v265
        %v609 = vunpack.c.l.b16 %v266
        %v610 = vunpack.c.l.b16 %v267
        %v611 = vunpack.c.l.b16 %v268
        %v612 = vunpack.c.l.b16 %v269
        %v613 = vunpack.c.l.b16 %v270
        %v614 = vunpack.c.l.b16 %v271
        %v615 = vunpack.c.l.b16 %v272
        %v616 = vunpack.c.l.b16 %v273
        %v617 = vunpack.c.l.b16 %v274
        %v618 = vunpack.c.l.b16 %v275
        %v619 = vunpack.c.l.b16 %v276
        %v620 = vunpack.c.l.b16 %v277
        %v621 = vunpack.c.l.b16 %v278
        %v622 = vunpack.c.l.b16 %v279
        %v623 = vunpack.c.l.b16 %v280
        %v624 = vunpack.c.l.b16 %v281
        %v625 = vunpack.c.l.b16 %v282
        %v626 = vunpack.c.l.b16 %v283
        %v627 = vunpack.c.l.b16 %v284
        %v628 = vunpack.c.l.b16 %v285
        %v629 = vunpack.c.l.b16 %v286
        %v630 = vunpack.c.l.b16 %v287
        %v631 = vunpack.c.l.b16 %v288
        %v632 = vunpack.c.l.b16 %v289
        %v633 = vunpack.c.l.b16 %v290
        %v634 = vunpack.c.l.b16 %v291
        %v635 = vunpack.c.l.b16 %v292
        %v636 = vunpack.c.l.b16 %v293
        %v637 = vunpack.c.l.b16 %v294
        %v638 = vunpack.c.l.b16 %v295
        %v639 = vunpack.c.l.b16 %v296
        %v640 = vunpack.c.l.b16 %v297
        %v641 = vunpack.c.l.b16 %v298
        %v642 = vunpack.c.l.b16 %v299
        %v643 = vunpack.c.l.b16 %v300
        %v644 = vunpack.c.l.b16 %v301
        %v645 = vunpack.c.l.b16 %v302
        %v646 = vunpack.c.l.b16 %v303
        %v647 = vunpack.c.l.b16 %v304
        %v648 = vunpack.c.l.b16 %v305
        %v649 = vunpack.c.l.b16 %v306
        %v650 = vunpack.c.l.b16 %v307
        %v651 = vunpack.c.l.b16 %v308
        %v652 = vunpack.c.l.b16 %v309
        %v653 = vunpack.c.l.b16 %v310
        %v654 = vunpack.c.l.b16 %v311
        %v655 = vunpack.c.l.b16 %v312
        %v656 = vunpack.c.l.b16 %v313
        %v657 = vunpack.c.l.b16 %v314
        %v658 = vunpack.c.l.b16 %v315
        %v659 = vunpack.c.l.b16 %v316
        %v660 = vunpack.c.l.b16 %v317
        %v661 = vunpack.c.l.b16 %v318
        %v662 = vunpack.c.l.b16 %v319
        %v663 = vunpack.c.l.b16 %v320
        %v664 = vunpack.c.l.b16 %v321
        %v665 = vunpack.c.l.b16 %v322
        %v666 = vunpack.c.l.b16 %v323
        %v667 = vunpack.c.l.b16 %v324
        %v668 = vunpack.c.l.b16 %v325
        %v669 = vunpack.c.l.b16 %v326
        %v670 = vunpack.c.l.b16 %v327
        %v671 = vunpack.c.l.b16 %v328
        %v672 = vunpack.c.l.b16 %v329
        %v673 = vunpack.c.l.b16 %v330
        %v674 = vunpack.c.l.b16 %v331
        %v675 = vunpack.c.l.b16 %v332
        %v676 = vunpack.c.l.b16 %v333
        %v677 = vunpack.c.l.b16 %v334
        %v678 = vunpack.c.l.b16 %v335
        %v679 = vunpack.c.l.b16 %v336
        %v680 = vunpack.c.l.b16 %v337
        %v681 = vunpack.c.l.b16 %v338
        %v682 = vunpack.c.l.b16 %v339
        %v683 = vunpack.c.l.b16 %v340
        %v684 = vunpack.c.l.b16 %v341
        %v685 = vunpack.c.l.b16 %v342
        %v686 = vunpack.c.l.b16 %v343
        %v687 = vunpack.c.l.b16 %v344
        %v688 = vpack.c.b16 %v561, %v560
        %v689 = vpack.c.b16 %v563, %v562
        %v690 = vpack.c.b16 %v565, %v564
        %v691 = vpack.c.b16 %v567, %v566
        %v692 = vpack.c.b16 %v569, %v568
        %v693 = vpack.c.b16 %v571, %v570
        %v694 = vpack.c.b16 %v573, %v572
        %v695 = vpack.c.b16 %v575, %v574
        %v696 = vpack.c.b16 %v577, %v576
        %v697 = vpack.c.b16 %v579, %v578
        %v698 = vpack.c.b16 %v581, %v580
        %v699 = vpack.c.b16 %v583, %v582
        %v700 = vpack.c.b16 %v585, %v584
        %v701 = vpack.c.b16 %v587, %v586
        %v702 = vpack.c.b16 %v589, %v588
        %v703 = vpack.c.b16 %v591, %v590
        %v704 = vpack.c.b16 %v593, %v592
        %v705 = vpack.c.b16 %v595, %v594
        %v706 = vpack.c.b16 %v597, %v596
        %v707 = vpack.c.b16 %v599, %v598
        %v708 = vpack.c.b16 %v601, %v600
        %v709 = vpack.c.b16 %v603, %v602
        %v710 = vpack.c.b16 %v605, %v604
        %v711 = vpack.c.b16 %v607, %v606
        %v712 = vpack.c.b16 %v609, %v608
        %v713 = vpack.c.b16 %v611, %v610
        %v714 = vpack.c.b16 %v613, %v612
        %v715 = vpack.c.b16 %v615, %v614
        %v716 = vpack.c.b16 %v617, %v616
        %v717 = vpack.c.b16 %v619, %v618
        %v718 = vpack.c.b16 %v621, %v620
        %v719 = vpack.c.b16 %v623, %v622
        %v720 = vpack.c.b16 %v625, %v624
        %v721 = vpack.c.b16 %v627, %v626
        %v722 = vpack.c.b16 %v629, %v628
        %v723 = vpack.c.b16 %v631, %v630
        %v724 = vpack.c.b16 %v633, %v632
        %v725 = vpack.c.b16 %v635, %v634
        %v726 = vpack.c.b16 %v637, %v636
        %v727 = vpack.c.b16 %v639, %v638
        %v728 = vpack.c.b16 %v641, %v640
        %v729 = vpack.c.b16 %v643, %v642
        %v730 = vpack.c.b16 %v645, %v644
        %v731 = vpack.c.b16 %v647, %v646
        %v732 = vpack.c.b16 %v649, %v648
        %v733 = vpack.c.b16 %v651, %v650
        %v734 = vpack.c.b16 %v653, %v652
        %v735 = vpack.c.b16 %v655, %v654
        %v736 = vpack.c.b16 %v657, %v656
        %v737 = vpack.c.b16 %v659, %v658
        %v738 = vpack.c.b16 %v661, %v660
        %v739 = vpack.c.b16 %v663, %v662
        %v740 = vpack.c.b16 %v665, %v664
        %v741 = vpack.c.b16 %v667, %v666
        %v742 = vpack.c.b16 %v669, %v668
        %v743 = vpack.c.b16 %v671, %v670
        %v744 = vpack.c.b16 %v673, %v672
        %v745 = vpack.c.b16 %v675, %v674
        %v746 = vpack.c.b16 %v677, %v676
        %v747 = vpack.c.b16 %v679, %v678
        %v748 = vpack.c.b16 %v681, %v680
        %v749 = vpack.c.b16 %v683, %v682
        %v750 = vpack.c.b16 %v685, %v684
        %v751 = vpack.c.b16 %v687, %v686
        %816 = vmatprep.subr.bf16.mxu0 0
        %817 = vmatpush1.bf16.msra.mxu0 %v695
        %818 = vmatprep.subr.bf16.mxu0 0
        %819 = vmatpush1.bf16.msra.mxu0 %v694
        %820 = vmatprep.subr.bf16.mxu0 0
        %821 = vmatpush1.bf16.msra.mxu0 %v693
        %822 = vmatprep.subr.bf16.mxu0 0
        %823 = vmatpush1.bf16.msra.mxu0 %v692
        %824 = vmatprep.subr.bf16.mxu0 0
        %825 = vmatpush1.bf16.msra.mxu0 %v691
        %826 = vmatprep.subr.bf16.mxu0 0
        %827 = vmatpush1.bf16.msra.mxu0 %v690
        %828 = vmatprep.subr.bf16.mxu0 0
        %829 = vmatpush1.bf16.msra.mxu0 %v689
        %830 = vmatprep.subr.bf16.mxu0 0
        %831 = vmatpush1.bf16.msra.mxu0 %v688
        %832 = vmatprep.subr.bf16.mxu0 0
        %833 = vmatpush2.bf16.msra.mxu0 %v703
        %834 = vmatprep.subr.bf16.mxu0 0
        %835 = vmatpush2.bf16.msra.mxu0 %v702
        %836 = vmatprep.subr.bf16.mxu0 0
        %837 = vmatpush2.bf16.msra.mxu0 %v701
        %838 = vmatprep.subr.bf16.mxu0 0
        %839 = vmatpush2.bf16.msra.mxu0 %v700
        %840 = vmatprep.subr.bf16.mxu0 0
        %841 = vmatpush2.bf16.msra.mxu0 %v699
        %842 = vmatprep.subr.bf16.mxu0 0
        %843 = vmatpush2.bf16.msra.mxu0 %v698
        %844 = vmatprep.subr.bf16.mxu0 0
        %845 = vmatpush2.bf16.msra.mxu0 %v697
        %846 = vmatprep.subr.bf16.mxu0 0
        %847 = vmatpush2.bf16.msra.mxu0 %v696
        %848 = vmatprep.mubr.bf16.mxu0 %v401
        %849 = vmatmul.mubr.bf16.gmra.mxu0 %v400
        %v850 = vpop.f32.mrf.mxu0
        %v851 = vadd.f32 %v350, %v850
        %v852 = vpop.f32.mrf.mxu0
        %v853 = vpop.f32.mrf.mxu0
        %v854 = vadd.f32 %v350, %v853
        %v855 = vpop.f32.mrf.mxu0
        %856 = vmatprep.mubr.bf16.mxu0 %v409
        %857 = vmatmul.mubr.bf16.gmra.mxu0 %v408
        %v858 = vpop.f32.mrf.mxu0
        %v859 = vadd.f32 %v350, %v858
        %v860 = vpop.f32.mrf.mxu0
        %v861 = vpop.f32.mrf.mxu0
        %v862 = vadd.f32 %v350, %v861
        %v863 = vpop.f32.mrf.mxu0
        %864 = vdwg.mxu0
        %865 = vmatprep.subr.bf16.mxu0 0
        %866 = vmatpush1.bf16.msra.mxu0 %v711
        %867 = vmatprep.subr.bf16.mxu0 0
        %868 = vmatpush1.bf16.msra.mxu0 %v710
        %869 = vmatprep.subr.bf16.mxu0 0
        %870 = vmatpush1.bf16.msra.mxu0 %v709
        %871 = vmatprep.subr.bf16.mxu0 0
        %872 = vmatpush1.bf16.msra.mxu0 %v708
        %873 = vmatprep.subr.bf16.mxu0 0
        %874 = vmatpush1.bf16.msra.mxu0 %v707
        %875 = vmatprep.subr.bf16.mxu0 0
        %876 = vmatpush1.bf16.msra.mxu0 %v706
        %877 = vmatprep.subr.bf16.mxu0 0
        %878 = vmatpush1.bf16.msra.mxu0 %v705
        %879 = vmatprep.subr.bf16.mxu0 0
        %880 = vmatpush1.bf16.msra.mxu0 %v704
        %881 = vmatprep.subr.bf16.mxu0 0
        %882 = vmatpush2.bf16.msra.mxu0 %v719
        %883 = vmatprep.subr.bf16.mxu0 0
        %884 = vmatpush2.bf16.msra.mxu0 %v718
        %885 = vmatprep.subr.bf16.mxu0 0
        %886 = vmatpush2.bf16.msra.mxu0 %v717
        %887 = vmatprep.subr.bf16.mxu0 0
        %888 = vmatpush2.bf16.msra.mxu0 %v716
        %889 = vmatprep.subr.bf16.mxu0 0
        %890 = vmatpush2.bf16.msra.mxu0 %v715
        %891 = vmatprep.subr.bf16.mxu0 0
        %892 = vmatpush2.bf16.msra.mxu0 %v714
        %893 = vmatprep.subr.bf16.mxu0 0
        %894 = vmatpush2.bf16.msra.mxu0 %v713
        %895 = vmatprep.subr.bf16.mxu0 0
        %896 = vmatpush2.bf16.msra.mxu0 %v712
        %897 = vmatprep.mubr.bf16.mxu0 %v403
        %898 = vmatmul.mubr.bf16.gmra.mxu0 %v402
        %v899 = vpop.f32.mrf.mxu0
        %v900 = vadd.f32 %v851, %v899
        %v901 = vpop.f32.mrf.mxu0
        %v902 = vpop.f32.mrf.mxu0
        %v903 = vadd.f32 %v854, %v902
        %v904 = vpop.f32.mrf.mxu0
        %905 = vmatprep.mubr.bf16.mxu0 %v411
        %906 = vmatmul.mubr.bf16.gmra.mxu0 %v410
        %v907 = vpop.f32.mrf.mxu0
        %v908 = vadd.f32 %v859, %v907
        %v909 = vpop.f32.mrf.mxu0
        %v910 = vpop.f32.mrf.mxu0
        %v911 = vadd.f32 %v862, %v910
        %v912 = vpop.f32.mrf.mxu0
        %913 = vdwg.mxu0
        %914 = vmatprep.subr.bf16.mxu0 0
        %915 = vmatpush1.bf16.msra.mxu0 %v727
        %916 = vmatprep.subr.bf16.mxu0 0
        %917 = vmatpush1.bf16.msra.mxu0 %v726
        %918 = vmatprep.subr.bf16.mxu0 0
        %919 = vmatpush1.bf16.msra.mxu0 %v725
        %920 = vmatprep.subr.bf16.mxu0 0
        %921 = vmatpush1.bf16.msra.mxu0 %v724
        %922 = vmatprep.subr.bf16.mxu0 0
        %923 = vmatpush1.bf16.msra.mxu0 %v723
        %924 = vmatprep.subr.bf16.mxu0 0
        %925 = vmatpush1.bf16.msra.mxu0 %v722
        %926 = vmatprep.subr.bf16.mxu0 0
        %927 = vmatpush1.bf16.msra.mxu0 %v721
        %928 = vmatprep.subr.bf16.mxu0 0
        %929 = vmatpush1.bf16.msra.mxu0 %v720
        %930 = vmatprep.subr.bf16.mxu0 0
        %931 = vmatpush2.bf16.msra.mxu0 %v735
        %932 = vmatprep.subr.bf16.mxu0 0
        %933 = vmatpush2.bf16.msra.mxu0 %v734
        %934 = vmatprep.subr.bf16.mxu0 0
        %935 = vmatpush2.bf16.msra.mxu0 %v733
        %936 = vmatprep.subr.bf16.mxu0 0
        %937 = vmatpush2.bf16.msra.mxu0 %v732
        %938 = vmatprep.subr.bf16.mxu0 0
        %939 = vmatpush2.bf16.msra.mxu0 %v731
        %940 = vmatprep.subr.bf16.mxu0 0
        %941 = vmatpush2.bf16.msra.mxu0 %v730
        %942 = vmatprep.subr.bf16.mxu0 0
        %943 = vmatpush2.bf16.msra.mxu0 %v729
        %944 = vmatprep.subr.bf16.mxu0 0
        %945 = vmatpush2.bf16.msra.mxu0 %v728
        %946 = vmatprep.mubr.bf16.mxu0 %v405
        %947 = vmatmul.mubr.bf16.gmra.mxu0 %v404
        %v948 = vpop.f32.mrf.mxu0
        %v949 = vadd.f32 %v900, %v948
        %v950 = vpop.f32.mrf.mxu0
        %v951 = vpop.f32.mrf.mxu0
        %v952 = vadd.f32 %v903, %v951
        %v953 = vpop.f32.mrf.mxu0
        %954 = vmatprep.mubr.bf16.mxu0 %v413
        %955 = vmatmul.mubr.bf16.gmra.mxu0 %v412
        %v956 = vpop.f32.mrf.mxu0
        %v957 = vadd.f32 %v908, %v956
        %v958 = vpop.f32.mrf.mxu0
        %v959 = vpop.f32.mrf.mxu0
        %v960 = vadd.f32 %v911, %v959
        %v961 = vpop.f32.mrf.mxu0
        %962 = vdwg.mxu0
        %963 = vmatprep.subr.bf16.mxu0 0
        %964 = vmatpush1.bf16.msra.mxu0 %v743
        %965 = vmatprep.subr.bf16.mxu0 0
        %966 = vmatpush1.bf16.msra.mxu0 %v742
        %967 = vmatprep.subr.bf16.mxu0 0
        %968 = vmatpush1.bf16.msra.mxu0 %v741
        %969 = vmatprep.subr.bf16.mxu0 0
        %970 = vmatpush1.bf16.msra.mxu0 %v740
        %971 = vmatprep.subr.bf16.mxu0 0
        %972 = vmatpush1.bf16.msra.mxu0 %v739
        %973 = vmatprep.subr.bf16.mxu0 0
        %974 = vmatpush1.bf16.msra.mxu0 %v738
        %975 = vmatprep.subr.bf16.mxu0 0
        %976 = vmatpush1.bf16.msra.mxu0 %v737
        %977 = vmatprep.subr.bf16.mxu0 0
        %978 = vmatpush1.bf16.msra.mxu0 %v736
        %979 = vmatprep.subr.bf16.mxu0 0
        %980 = vmatpush2.bf16.msra.mxu0 %v751
        %981 = vmatprep.subr.bf16.mxu0 0
        %982 = vmatpush2.bf16.msra.mxu0 %v750
        %983 = vmatprep.subr.bf16.mxu0 0
        %984 = vmatpush2.bf16.msra.mxu0 %v749
        %985 = vmatprep.subr.bf16.mxu0 0
        %986 = vmatpush2.bf16.msra.mxu0 %v748
        %987 = vmatprep.subr.bf16.mxu0 0
        %988 = vmatpush2.bf16.msra.mxu0 %v747
        %989 = vmatprep.subr.bf16.mxu0 0
        %990 = vmatpush2.bf16.msra.mxu0 %v746
        %991 = vmatprep.subr.bf16.mxu0 0
        %992 = vmatpush2.bf16.msra.mxu0 %v745
        %993 = vmatprep.subr.bf16.mxu0 0
        %994 = vmatpush2.bf16.msra.mxu0 %v744
        %995 = vmatprep.mubr.bf16.mxu0 %v407
        %996 = vmatmul.mubr.bf16.gmra.mxu0 %v406
        %v997 = vpop.f32.mrf.mxu0
        %v998 = vadd.f32 %v949, %v997
        %v999 = vpop.f32.mrf.mxu0
        %v1000 = vpop.f32.mrf.mxu0
        %v1001 = vadd.f32 %v952, %v1000
        %v1002 = vpop.f32.mrf.mxu0
        %1003 = vmatprep.mubr.bf16.mxu0 %v415
        %1004 = vmatmul.mubr.bf16.gmra.mxu0 %v414
        %v1005 = vpop.f32.mrf.mxu0
        %v1006 = vadd.f32 %v957, %v1005
        %v1007 = vpop.f32.mrf.mxu0
        %v1008 = vpop.f32.mrf.mxu0
        %v1009 = vadd.f32 %v960, %v1008
        %v1010 = vpop.f32.mrf.mxu0
        %1011 = vdwg.mxu0
        %v1012 = vmax.f32 %v998, 0.0
        %v1013 = vmax.f32 %v1001, 0.0
        %v1014 = vmax.f32 %v1006, 0.0
        %v1015 = vmax.f32 %v1009, 0.0
        %v1016 = vpack.c.bf16 %v1013, %v1012
        %v1017 = vpack.c.bf16 %v1015, %v1014
        %v1020 = vunpack.c.l.b16 %v1016
        %v1021 = vunpack.c.h.b16 %v1016
        %v1022 = vunpack.c.l.b16 %v1017
        %v1023 = vunpack.c.h.b16 %v1017
        %v1024 = vpack.c.b16 %v1020, %v1020
        %v1025 = vpack.c.b16 %v1021, %v1021
        %v1026 = vpack.c.b16 %v1022, %v1022
        %v1027 = vpack.c.b16 %v1023, %v1023
        %1032 = vst [vmem:[%s177] sm:$0xf] %v1024
        %1033 = vst [vmem:[%s177 + $0x4] sm:$0xf] %v1025
        %1034 = vst [vmem:[%s177 + $0x8] sm:$0xf] %v1026
        %1035 = vst [vmem:[%s177 + $0xc] sm:$0xf] %v1027
        %s1036 = sand.u32 %s90, 1
        %s1037 = sand.u32 %s90, 1
        %s1038 = smul.addr %s1037, 16
        %s1039 = scalar_lea.vmem [#allocation2], %s1038
        // Predicated region
        $region33: #{dqn_forward.3} parent=31 // pred_check
          %p1040 = pneg %p100
        $region34: #{dqn_forward.3} parent=31 // pred_check_branch
          %1042 = sbr.rel (%p1040) target = $region36
        $region35: #{dqn_forward.3} parent=31 // pred_region
          %s1043 = smul.u32 4, %s14
          %s1044 = ssub.s32 7, %s1043
          %p1045 = scmp.lt.s32.totalorder %s1044, 4
          %s1046 = scalar_select %p1045, %s1044, 4
          %s1047 = smul.u32 64, %s1046
          %p1048 = scmp.ne.s32.totalorder 0, %s1047
          %s1049 = smul.addr %s1043, 4
          %s1050 = scalar_lea.vmem %s3, %s1049
          // Predicated region
          $region37: #{dqn_forward.3} parent=35 // pred_check
            %p1051 = pneg %p1048
          $region38: #{dqn_forward.3} parent=35 // pred_check_branch
            %1053 = sbr.rel (%p1051) target = $region40
          $region39: #{dqn_forward.3} parent=35 // pred_region
            // Predicated region
            $region41: #{dqn_forward.3} parent=39 // pred_check
              _
            $region42: #{dqn_forward.3} parent=39 // pred_check_branch
              %1055 = sbr.rel target = $region44
            $region43: #{dqn_forward.3} parent=39 // pred_region
              // Predicated region
              $region63: #{dqn_forward.3} parent=43 // pred_check
                _
              $region64: #{dqn_forward.3} parent=43 // pred_check_branch
                %1111 = sbr.rel (0) target = $region66
              $region65: #{dqn_forward.3} parent=43 // pred_region
                %s1113 = ssub.s32 16, 1
                %s1114 = sshrl.u32 %s1046, 2
                // While loop
                $region67: #{dqn_forward.3} parent=65 // loop_pre_header
                  _
                $region68: #{dqn_forward.3} parent=65 // loop_header
                  %s1116 = sphi 0, %s1118
                  %p1117 = scmp.ge.s32.totalorder %s1116, %s1114
                  %s1121 = sphi 0, %s1134
                  %s1122 = sphi %s1039, %s1137
                  %s1123 = sphi %s1050, %s1138
                $region69: #{dqn_forward.3} parent=65 // loop_header_branch
                  %1120 = sbr.rel (%p1117) target = $region73
                $region70: #{dqn_forward.3} parent=65 // loop_body
                  %v1124 = vld [vmem:[%s1122] sm:%s1113]
                  %1125 = vst [vmem:[%s1123] sm:%s1113] %v1124
                  %v1126 = vld [vmem:[%s1122 + $0x4] sm:%s1113]
                  %1127 = vst [vmem:[%s1123 + $0x4] sm:%s1113] %v1126
                  %v1128 = vld [vmem:[%s1122 + $0x8] sm:%s1113]
                  %1129 = vst [vmem:[%s1123 + $0x8] sm:%s1113] %v1128
                  %v1130 = vld [vmem:[%s1122 + $0xc] sm:%s1113]
                  %1131 = vst [vmem:[%s1123 + $0xc] sm:%s1113] %v1130
                  %s1132 = sadd.s32 1, %s1121
                  %p1133 = scmp.ge.s32.totalorder %s1132, %s1114
                  %s1134 = scalar_select %p1133, 0, %s1132
                  %s1135 = smul.u32 %s1134, 16
                  %s1136 = smul.u32 %s1134, 16
                  %s1137 = scalar_lea.vmem %s1039, %s1135 [#allocation2]
                  %s1138 = scalar_lea.vmem %s1050, %s1136
                $region71: #{dqn_forward.3} parent=65 // loop_footer
                  %s1118 = sadd.s32 %s1116, 1
                $region72: #{dqn_forward.3} parent=65 // loop_footer_branch
                  %1115 = sbr.rel target = $region68
                $region73: #{dqn_forward.3} parent=65 // loop_exit
                  _
                %s1139 = sshrl.u32 %s1046, 2
                %s1140 = sand.u32 %s1046, 3
                %s1141 = smul.u32 %s1139, 4
                %s1142 = smul.u32 4, %s1141
                %s1143 = scalar_lea.vmem %s1039, %s1142 [#allocation2]
                %s1144 = smul.u32 4, %s1141
                %s1145 = scalar_lea.vmem %s1050, %s1144
                // While loop
                $region74: #{dqn_forward.3} parent=65 // loop_pre_header
                  _
                $region75: #{dqn_forward.3} parent=65 // loop_header
                  %s1147 = sphi 0, %s1149
                  %p1148 = scmp.ge.s32.totalorder %s1147, %s1140
                  %s1152 = sphi 0, %s1159
                  %s1153 = sphi %s1143, %s1162
                  %s1154 = sphi %s1145, %s1163
                $region76: #{dqn_forward.3} parent=65 // loop_header_branch
                  %1151 = sbr.rel (%p1148) target = $region80
                $region77: #{dqn_forward.3} parent=65 // loop_body
                  %v1155 = vld [vmem:[%s1153] sm:%s1113]
                  %1156 = vst [vmem:[%s1154] sm:%s1113] %v1155
                  %s1157 = sadd.s32 1, %s1152
                  %p1158 = scmp.ge.s32.totalorder %s1157, %s1140
                  %s1159 = scalar_select %p1158, 0, %s1157
                  %s1160 = smul.u32 %s1159, 4
                  %s1161 = smul.u32 %s1159, 4
                  %s1162 = scalar_lea.vmem %s1143, %s1160 [#allocation2]
                  %s1163 = scalar_lea.vmem %s1145, %s1161
                $region78: #{dqn_forward.3} parent=65 // loop_footer
                  %s1149 = sadd.s32 %s1147, 1
                $region79: #{dqn_forward.3} parent=65 // loop_footer_branch
                  %1146 = sbr.rel target = $region75
                $region80: #{dqn_forward.3} parent=65 // loop_exit
                  _
              $region66: #{dqn_forward.3} parent=43 // pred_fallthru
                _
            $region44: #{dqn_forward.3} parent=39 // pred_fallthru
              _
            // Predicated region
            $region45: #{dqn_forward.3} parent=39 // pred_check
              _
            $region46: #{dqn_forward.3} parent=39 // pred_check_branch
              %1057 = sbr.rel (0) target = $region48
            $region47: #{dqn_forward.3} parent=39 // pred_region
              %s1059 = ssub.s32 16, 1
              %s1060 = sshrl.u32 %s1046, 2
              // While loop
              $region49: #{dqn_forward.3} parent=47 // loop_pre_header
                _
              $region50: #{dqn_forward.3} parent=47 // loop_header
                %s1062 = sphi 0, %s1064
                %p1063 = scmp.ge.s32.totalorder %s1062, %s1060
                %s1067 = sphi 0, %s1080
                %s1068 = sphi %s1039, %s1083
                %s1069 = sphi %s1050, %s1084
              $region51: #{dqn_forward.3} parent=47 // loop_header_branch
                %1066 = sbr.rel (%p1063) target = $region55
              $region52: #{dqn_forward.3} parent=47 // loop_body
                %v1070 = vld [vmem:[%s1068] sm:%s1059]
                %1071 = vst [vmem:[%s1069] sm:%s1059] %v1070
                %v1072 = vld [vmem:[%s1068 + $0x4] sm:%s1059]
                %1073 = vst [vmem:[%s1069 + $0x4] sm:%s1059] %v1072
                %v1074 = vld [vmem:[%s1068 + $0x8] sm:%s1059]
                %1075 = vst [vmem:[%s1069 + $0x8] sm:%s1059] %v1074
                %v1076 = vld [vmem:[%s1068 + $0xc] sm:%s1059]
                %1077 = vst [vmem:[%s1069 + $0xc] sm:%s1059] %v1076
                %s1078 = sadd.s32 1, %s1067
                %p1079 = scmp.ge.s32.totalorder %s1078, %s1060
                %s1080 = scalar_select %p1079, 0, %s1078
                %s1081 = smul.u32 %s1080, 16
                %s1082 = smul.u32 %s1080, 16
                %s1083 = scalar_lea.vmem %s1039, %s1081 [#allocation2]
                %s1084 = scalar_lea.vmem %s1050, %s1082
              $region53: #{dqn_forward.3} parent=47 // loop_footer
                %s1064 = sadd.s32 %s1062, 1
              $region54: #{dqn_forward.3} parent=47 // loop_footer_branch
                %1061 = sbr.rel target = $region50
              $region55: #{dqn_forward.3} parent=47 // loop_exit
                _
              %s1085 = sshrl.u32 %s1046, 2
              %s1086 = sand.u32 %s1046, 3
              %s1087 = smul.u32 %s1085, 4
              %s1088 = smul.u32 4, %s1087
              %s1089 = scalar_lea.vmem %s1039, %s1088 [#allocation2]
              %s1090 = smul.u32 4, %s1087
              %s1091 = scalar_lea.vmem %s1050, %s1090
              // While loop
              $region56: #{dqn_forward.3} parent=47 // loop_pre_header
                _
              $region57: #{dqn_forward.3} parent=47 // loop_header
                %s1093 = sphi 0, %s1095
                %p1094 = scmp.ge.s32.totalorder %s1093, %s1086
                %s1098 = sphi 0, %s1105
                %s1099 = sphi %s1089, %s1108
                %s1100 = sphi %s1091, %s1109
              $region58: #{dqn_forward.3} parent=47 // loop_header_branch
                %1097 = sbr.rel (%p1094) target = $region62
              $region59: #{dqn_forward.3} parent=47 // loop_body
                %v1101 = vld [vmem:[%s1099] sm:%s1059]
                %1102 = vst [vmem:[%s1100] sm:%s1059] %v1101
                %s1103 = sadd.s32 1, %s1098
                %p1104 = scmp.ge.s32.totalorder %s1103, %s1086
                %s1105 = scalar_select %p1104, 0, %s1103
                %s1106 = smul.u32 %s1105, 4
                %s1107 = smul.u32 %s1105, 4
                %s1108 = scalar_lea.vmem %s1089, %s1106 [#allocation2]
                %s1109 = scalar_lea.vmem %s1091, %s1107
              $region60: #{dqn_forward.3} parent=47 // loop_footer
                %s1095 = sadd.s32 %s1093, 1
              $region61: #{dqn_forward.3} parent=47 // loop_footer_branch
                %1092 = sbr.rel target = $region57
              $region62: #{dqn_forward.3} parent=47 // loop_exit
                _
            $region48: #{dqn_forward.3} parent=39 // pred_fallthru
              _
          $region40: #{dqn_forward.3} parent=35 // pred_fallthru
            _
          %1164 = vnop
        $region36: #{dqn_forward.3} parent=31 // pred_fallthru
          _
      $region32: #{dqn_forward.3} parent=5 // pred_fallthru
        _
      %p1165 = scmp.le.s32.totalorder 2, %s9
      // Predicated region
      $region81: #{dqn_forward.3} parent=5 // pred_check
        %p1166 = pneg %p1165
      $region82: #{dqn_forward.3} parent=5 // pred_check_branch
        %1168 = sbr.rel (%p1166) target = $region84
      $region83: #{dqn_forward.3} parent=5 // pred_region
        %s1169 = ssub.s32 %s9, 2
        // Predicated region
        $region85: #{dqn_forward.3} parent=83 // pred_check
          %p1170 = pneg %p106
        $region86: #{dqn_forward.3} parent=83 // pred_check_branch
          %1172 = sbr.rel (%p1170) target = $region88
        $region87: #{dqn_forward.3} parent=83 // pred_region
          %s1173 = sand.u32 %s91, 1
          %s1174 = sand.u32 %s91, 1
          %s1175 = smul.addr %s1174, 16
          %s1176 = scalar_lea.vmem [#allocation2], %s1175
        $region88: #{dqn_forward.3} parent=83 // pred_fallthru
          _
      $region84: #{dqn_forward.3} parent=5 // pred_fallthru
        _
    $region6: #{dqn_forward.3} parent=1 // loop_footer
      %s13 = sadd.s32 1, %s9
    $region7: #{dqn_forward.3} parent=1 // loop_footer_branch
      %8 = sbr.rel target = $region3
    $region8: #{dqn_forward.3} parent=1 // loop_exit
      _

// kernel: dqn_forward.4
$region0: #{dqn_forward.4}
  #allocation0 [shape = 'u32[]', space=smem, size = 0x4, offset = 0x4, fixed_abs, tag = 'smem constant byte address 0x4 - core index']
  #allocation1 [shape = 'u32[144,128]{1,0:T(1,128)}', space=vmem, size = 0x12000, scoped, tag = 'internal scratch']
  %s0 = inlined_call_operand.vmem [shape: bf16[16,1024], index: 0, kind: input, shape index: {}]
  %s1 = inlined_call_operand.vmem [shape: bf16[1024,128], index: 1, kind: input, shape index: {}]
  %s2 = inlined_call_operand.vmem [shape: f32[1,128], index: 2, kind: input, shape index: {}]
  %s3 = inlined_call_operand.vmem [shape: bf16[16,128], index: 3, kind: output, shape index: {}]
  %s4 = sld [smem:[#allocation0]]
  $region45: #{dqn_forward.4} parent=0
    _
  %s6 = ssub.s32 1, %s4
  %s7 = scalar_select 0, %s6, %s4
  loop: start=0, step=1, limit=4
  $region2: #{dqn_forward.4} parent=0 // loop_pre_header
    _
  $region3: #{dqn_forward.4} parent=0 // loop_header
    %s9 = sphi 0, %s13
    %p10 = scmp.ge.s32.totalorder %s9, 4
    %s19 = sphi 0, %s21
    %s22 = sphi 0, %s19
    %s23 = sphi 0, %s22
    %s39 = sphi 0, %s23
    %s43 = sphi 0, %s43
    %s45 = sphi 0, %s43
    %s46 = sphi 0, %s45
    %s60 = sphi 0, %s46
    %s64 = sphi 0, %s64
    %s66 = sphi 0, %s64
    %s67 = sphi 0, %s66
    %s81 = sphi 0, %s67
    %s87 = sphi 0, %s89
    %s90 = sphi 0, %s87
    %s91 = sphi 0, %s90
    %s107 = sphi 0, %s91
  $region4: #{dqn_forward.4} parent=0 // loop_header_branch
    %12 = sbr.rel (%p10) target = $region8
  $region5: #{dqn_forward.4} parent=0 // loop_body
    %s14 = ssub.s32 %s9, 1
    %s15 = ssub.s32 %s9, 2
    %s16 = sadd.s32 %s9, 1
    %s17 = ssub.s32 %s9, %s16
    %p18 = scmp.eq.s32.totalorder %s17, 0
    %s20 = sadd.s32 %s19, 1
    %s21 = scalar_select %p18, %s19, %s20
    %p24 = pneg %p18
    %p25 = scmp.eq.s32.totalorder %s9, 1
    %p26 = por %p24, %p25
    %p27 = scmp.ne.s32.totalorder %s19, %s22
    %p28 = scmp.eq.s32.totalorder %s9, 0
    %p29 = por %p27, %p28
    %p30 = scmp.ne.s32.totalorder %s19, %s22
    %p31 = scmp.eq.s32.totalorder %s14, 1
    %p32 = por %p30, %p31
    %p33 = scmp.ne.s32.totalorder %s22, %s23
    %p34 = scmp.eq.s32.totalorder %s14, 0
    %p35 = por %p33, %p34
    %p36 = scmp.ne.s32.totalorder %s22, %s23
    %p37 = scmp.eq.s32.totalorder %s15, 1
    %p38 = por %p36, %p37
    %p40 = scmp.ne.s32.totalorder %s23, %s39
    %p41 = scmp.eq.s32.totalorder %s15, 0
    %p42 = por %p40, %p41
    %s44 = sadd.s32 %s43, 1
    %p47 = scmp.eq.s32.totalorder %s9, 1
    %p48 = scmp.ne.s32.totalorder %s43, %s45
    %p49 = scmp.eq.s32.totalorder %s9, 0
    %p50 = por %p48, %p49
    %p51 = scmp.ne.s32.totalorder %s43, %s45
    %p52 = scmp.eq.s32.totalorder %s14, 1
    %p53 = por %p51, %p52
    %p54 = scmp.ne.s32.totalorder %s45, %s46
    %p55 = scmp.eq.s32.totalorder %s14, 0
    %p56 = por %p54, %p55
    %p57 = scmp.ne.s32.totalorder %s45, %s46
    %p58 = scmp.eq.s32.totalorder %s15, 1
    %p59 = por %p57, %p58
    %p61 = scmp.ne.s32.totalorder %s46, %s60
    %p62 = scmp.eq.s32.totalorder %s15, 0
    %p63 = por %p61, %p62
    %s65 = sadd.s32 %s64, 1
    %p68 = scmp.eq.s32.totalorder %s9, 1
    %p69 = scmp.ne.s32.totalorder %s64, %s66
    %p70 = scmp.eq.s32.totalorder %s9, 0
    %p71 = por %p69, %p70
    %p72 = scmp.ne.s32.totalorder %s64, %s66
    %p73 = scmp.eq.s32.totalorder %s14, 1
    %p74 = por %p72, %p73
    %p75 = scmp.ne.s32.totalorder %s66, %s67
    %p76 = scmp.eq.s32.totalorder %s14, 0
    %p77 = por %p75, %p76
    %p78 = scmp.ne.s32.totalorder %s66, %s67
    %p79 = scmp.eq.s32.totalorder %s15, 1
    %p80 = por %p78, %p79
    %p82 = scmp.ne.s32.totalorder %s67, %s81
    %p83 = scmp.eq.s32.totalorder %s15, 0
    %p84 = por %p82, %p83
    %s85 = ssub.s32 %s9, %s16
    %p86 = scmp.eq.s32.totalorder %s85, 0
    %s88 = sadd.s32 %s87, 1
    %s89 = scalar_select %p86, %s87, %s88
    %p92 = pneg %p86
    %p93 = scmp.eq.s32.totalorder %s9, 1
    %p94 = por %p92, %p93
    %p95 = scmp.ne.s32.totalorder %s87, %s90
    %p96 = scmp.eq.s32.totalorder %s9, 0
    %p97 = por %p95, %p96
    %p98 = scmp.ne.s32.totalorder %s87, %s90
    %p99 = scmp.eq.s32.totalorder %s14, 1
    %p100 = por %p98, %p99
    %p101 = scmp.ne.s32.totalorder %s90, %s91
    %p102 = scmp.eq.s32.totalorder %s14, 0
    %p103 = por %p101, %p102
    %p104 = scmp.ne.s32.totalorder %s90, %s91
    %p105 = scmp.eq.s32.totalorder %s15, 1
    %p106 = por %p104, %p105
    %p108 = scmp.ne.s32.totalorder %s91, %s107
    %p109 = scmp.eq.s32.totalorder %s15, 0
    %p110 = por %p108, %p109
    %p111 = scmp.le.s32.totalorder 1, %s9
    %p112 = scmp.lt.s32.totalorder %s9, 3
    %p113 = pnand %p111, %p112
    %p114 = pneg %p113
    // Predicated region
    $region9: #{dqn_forward.4} parent=5 // pred_check
      _
    $region10: #{dqn_forward.4} parent=5 // pred_check_branch
      %116 = sbr.rel (%p113) target = $region12
    $region11: #{dqn_forward.4} parent=5 // pred_region
      %s117 = ssub.s32 %s9, 1
      // Predicated region
      $region13: #{dqn_forward.4} parent=11 // pred_check
        %p118 = pneg %p56
      $region14: #{dqn_forward.4} parent=11 // pred_check_branch
        %120 = sbr.rel (%p118) target = $region16
      $region15: #{dqn_forward.4} parent=11 // pred_region
        _
      $region16: #{dqn_forward.4} parent=11 // pred_fallthru
        _
      // Predicated region
      $region17: #{dqn_forward.4} parent=11 // pred_check
        %p121 = pneg %p77
      $region18: #{dqn_forward.4} parent=11 // pred_check_branch
        %123 = sbr.rel (%p121) target = $region20
      $region19: #{dqn_forward.4} parent=11 // pred_region
        _
      $region20: #{dqn_forward.4} parent=11 // pred_fallthru
        _
    $region12: #{dqn_forward.4} parent=5 // pred_fallthru
      _
    %p124 = scmp.lt.s32.totalorder %s9, 2
    // Predicated region
    $region21: #{dqn_forward.4} parent=5 // pred_check
      %p125 = pneg %p124
    $region22: #{dqn_forward.4} parent=5 // pred_check_branch
      %127 = sbr.rel (%p125) target = $region24
    $region23: #{dqn_forward.4} parent=5 // pred_region
      // Predicated region
      $region25: #{dqn_forward.4} parent=23 // pred_check
        %p128 = pneg %p29
      $region26: #{dqn_forward.4} parent=23 // pred_check_branch
        %130 = sbr.rel (%p128) target = $region28
      $region27: #{dqn_forward.4} parent=23 // pred_region
        %p131 = scmp.lt.s32.totalorder %s9, 1
        %s132 = scalar_select %p131, %s9, 1
        %s133 = smul.addr %s132, 8
        %s134 = smul.addr %s133, 4
        %s135 = scalar_lea.vmem %s0, %s134
      $region28: #{dqn_forward.4} parent=23 // pred_fallthru
        _
    $region24: #{dqn_forward.4} parent=5 // pred_fallthru
      _
    %p136 = scmp.le.s32.totalorder 1, %s9
    %p137 = scmp.lt.s32.totalorder %s9, 3
    %p138 = pnand %p136, %p137
    %p139 = pneg %p138
    // Predicated region
    $region29: #{dqn_forward.4} parent=5 // pred_check
      _
    $region30: #{dqn_forward.4} parent=5 // pred_check_branch
      %141 = sbr.rel (%p138) target = $region32
    $region31: #{dqn_forward.4} parent=5 // pred_region
      %s142 = ssub.s32 %s9, 1
      %p143 = scmp.lt.s32.totalorder %s14, 1
      %s144 = scalar_select %p143, %s14, 1
      %s145 = smul.addr %s144, 8
      %s146 = smul.addr %s145, 4
      %s147 = scalar_lea.vmem %s0, %s146
      %p148 = pneg %p35
      %p149 = pneg %p32
      %p150 = pneg %p56
      %p151 = pneg %p53
      %p152 = pneg %p77
      %p153 = pneg %p74
      %p154 = pneg %p103
      %p155 = pneg %p100
      %p156 = scmp.lt.s32.totalorder %s14, 1
      %s157 = scalar_select %p156, %s14, 1
      %s158 = smul.addr %s157, 4
      %s159 = scalar_lea.vmem %s3, %s158
      %p160 = scmp.lt.s32.totalorder %s14, 1
      %s161 = scalar_select %p160, %s14, 1
      %s162 = smul.addr %s161, 8
      %s163 = smul.addr %s162, 4
      %s164 = scalar_lea.vmem %s0, %s163
      %p165 = scmp.lt.s32.totalorder %s14, 1
      %s166 = scalar_select %p165, %s14, 1
      %s167 = smul.addr %s166, 4
      %s168 = scalar_lea.vmem %s3, %s167
      %v170 = vld [vmem:[%s164] sm:$0xff]
      %v171 = vld [vmem:[%s164 + $0x8] sm:$0xff]
      %v172 = vld [vmem:[%s164 + $0x10] sm:$0xff]
      %v173 = vld [vmem:[%s164 + $0x18] sm:$0xff]
      %v174 = vld [vmem:[%s1] sm:$0xf]
      %v175 = vld [vmem:[%s1 + $0x4] sm:$0xf]
      %v176 = vld [vmem:[%s1 + $0x8] sm:$0xf]
      %v177 = vld [vmem:[%s1 + $0xc] sm:$0xf]
      %v178 = vld [vmem:[%s1 + $0x10] sm:$0xf]
      %v179 = vld [vmem:[%s1 + $0x14] sm:$0xf]
      %v180 = vld [vmem:[%s1 + $0x18] sm:$0xf]
      %v181 = vld [vmem:[%s1 + $0x1c] sm:$0xf]
      %v182 = vld [vmem:[%s1 + $0x20] sm:$0xf]
      %v183 = vld [vmem:[%s1 + $0x24] sm:$0xf]
      %v184 = vld [vmem:[%s1 + $0x28] sm:$0xf]
      %v185 = vld [vmem:[%s1 + $0x2c] sm:$0xf]
      %v186 = vld [vmem:[%s1 + $0x30] sm:$0xf]
      %v187 = vld [vmem:[%s1 + $0x34] sm:$0xf]
      %v188 = vld [vmem:[%s1 + $0x38] sm:$0xf]
      %v189 = vld [vmem:[%s1 + $0x3c] sm:$0xf]
      %v190 = vld [vmem:[%s1 + $0x40] sm:$0xf]
      %v191 = vld [vmem:[%s1 + $0x44] sm:$0xf]
      %v192 = vld [vmem:[%s1 + $0x48] sm:$0xf]
      %v193 = vld [vmem:[%s1 + $0x4c] sm:$0xf]
      %v194 = vld [vmem:[%s1 + $0x50] sm:$0xf]
      %v195 = vld [vmem:[%s1 + $0x54] sm:$0xf]
      %v196 = vld [vmem:[%s1 + $0x58] sm:$0xf]
      %v197 = vld [vmem:[%s1 + $0x5c] sm:$0xf]
      %v198 = vld [vmem:[%s1 + $0x60] sm:$0xf]
      %v199 = vld [vmem:[%s1 + $0x64] sm:$0xf]
      %v200 = vld [vmem:[%s1 + $0x68] sm:$0xf]
      %v201 = vld [vmem:[%s1 + $0x6c] sm:$0xf]
      %v202 = vld [vmem:[%s1 + $0x70] sm:$0xf]
      %v203 = vld [vmem:[%s1 + $0x74] sm:$0xf]
      %v204 = vld [vmem:[%s1 + $0x78] sm:$0xf]
      %v205 = vld [vmem:[%s1 + $0x7c] sm:$0xf]
      %v206 = vld [vmem:[%s1 + $0x80] sm:$0xf]
      %v207 = vld [vmem:[%s1 + $0x84] sm:$0xf]
      %v208 = vld [vmem:[%s1 + $0x88] sm:$0xf]
      %v209 = vld [vmem:[%s1 + $0x8c] sm:$0xf]
      %v210 = vld [vmem:[%s1 + $0x90] sm:$0xf]
      %v211 = vld [vmem:[%s1 + $0x94] sm:$0xf]
      %v212 = vld [vmem:[%s1 + $0x98] sm:$0xf]
      %v213 = vld [vmem:[%s1 + $0x9c] sm:$0xf]
      %v214 = vld [vmem:[%s1 + $0xa0] sm:$0xf]
      %v215 = vld [vmem:[%s1 + $0xa4] sm:$0xf]
      %v216 = vld [vmem:[%s1 + $0xa8] sm:$0xf]
      %v217 = vld [vmem:[%s1 + $0xac] sm:$0xf]
      %v218 = vld [vmem:[%s1 + $0xb0] sm:$0xf]
      %v219 = vld [vmem:[%s1 + $0xb4] sm:$0xf]
      %v220 = vld [vmem:[%s1 + $0xb8] sm:$0xf]
      %v221 = vld [vmem:[%s1 + $0xbc] sm:$0xf]
      %v222 = vld [vmem:[%s1 + $0xc0] sm:$0xf]
      %v223 = vld [vmem:[%s1 + $0xc4] sm:$0xf]
      %v224 = vld [vmem:[%s1 + $0xc8] sm:$0xf]
      %v225 = vld [vmem:[%s1 + $0xcc] sm:$0xf]
      %v226 = vld [vmem:[%s1 + $0xd0] sm:$0xf]
      %v227 = vld [vmem:[%s1 + $0xd4] sm:$0xf]
      %v228 = vld [vmem:[%s1 + $0xd8] sm:$0xf]
      %v229 = vld [vmem:[%s1 + $0xdc] sm:$0xf]
      %v230 = vld [vmem:[%s1 + $0xe0] sm:$0xf]
      %v231 = vld [vmem:[%s1 + $0xe4] sm:$0xf]
      %v232 = vld [vmem:[%s1 + $0xe8] sm:$0xf]
      %v233 = vld [vmem:[%s1 + $0xec] sm:$0xf]
      %v234 = vld [vmem:[%s1 + $0xf0] sm:$0xf]
      %v235 = vld [vmem:[%s1 + $0xf4] sm:$0xf]
      %v236 = vld [vmem:[%s1 + $0xf8] sm:$0xf]
      %v237 = vld [vmem:[%s1 + $0xfc] sm:$0xf]
      %v238 = vld [vmem:[%s1 + $0x100] sm:$0xf]
      %v239 = vld [vmem:[%s1 + $0x104] sm:$0xf]
      %v240 = vld [vmem:[%s1 + $0x108] sm:$0xf]
      %v241 = vld [vmem:[%s1 + $0x10c] sm:$0xf]
      %v242 = vld [vmem:[%s1 + $0x110] sm:$0xf]
      %v243 = vld [vmem:[%s1 + $0x114] sm:$0xf]
      %v244 = vld [vmem:[%s1 + $0x118] sm:$0xf]
      %v245 = vld [vmem:[%s1 + $0x11c] sm:$0xf]
      %v246 = vld [vmem:[%s1 + $0x120] sm:$0xf]
      %v247 = vld [vmem:[%s1 + $0x124] sm:$0xf]
      %v248 = vld [vmem:[%s1 + $0x128] sm:$0xf]
      %v249 = vld [vmem:[%s1 + $0x12c] sm:$0xf]
      %v250 = vld [vmem:[%s1 + $0x130] sm:$0xf]
      %v251 = vld [vmem:[%s1 + $0x134] sm:$0xf]
      %v252 = vld [vmem:[%s1 + $0x138] sm:$0xf]
      %v253 = vld [vmem:[%s1 + $0x13c] sm:$0xf]
      %v254 = vld [vmem:[%s1 + $0x140] sm:$0xf]
      %v255 = vld [vmem:[%s1 + $0x144] sm:$0xf]
      %v256 = vld [vmem:[%s1 + $0x148] sm:$0xf]
      %v257 = vld [vmem:[%s1 + $0x14c] sm:$0xf]
      %v258 = vld [vmem:[%s1 + $0x150] sm:$0xf]
      %v259 = vld [vmem:[%s1 + $0x154] sm:$0xf]
      %v260 = vld [vmem:[%s1 + $0x158] sm:$0xf]
      %v261 = vld [vmem:[%s1 + $0x15c] sm:$0xf]
      %v262 = vld [vmem:[%s1 + $0x160] sm:$0xf]
      %v263 = vld [vmem:[%s1 + $0x164] sm:$0xf]
      %v264 = vld [vmem:[%s1 + $0x168] sm:$0xf]
      %v265 = vld [vmem:[%s1 + $0x16c] sm:$0xf]
      %v266 = vld [vmem:[%s1 + $0x170] sm:$0xf]
      %v267 = vld [vmem:[%s1 + $0x174] sm:$0xf]
      %v268 = vld [vmem:[%s1 + $0x178] sm:$0xf]
      %v269 = vld [vmem:[%s1 + $0x17c] sm:$0xf]
      %v270 = vld [vmem:[%s1 + $0x180] sm:$0xf]
      %v271 = vld [vmem:[%s1 + $0x184] sm:$0xf]
      %v272 = vld [vmem:[%s1 + $0x188] sm:$0xf]
      %v273 = vld [vmem:[%s1 + $0x18c] sm:$0xf]
      %v274 = vld [vmem:[%s1 + $0x190] sm:$0xf]
      %v275 = vld [vmem:[%s1 + $0x194] sm:$0xf]
      %v276 = vld [vmem:[%s1 + $0x198] sm:$0xf]
      %v277 = vld [vmem:[%s1 + $0x19c] sm:$0xf]
      %v278 = vld [vmem:[%s1 + $0x1a0] sm:$0xf]
      %v279 = vld [vmem:[%s1 + $0x1a4] sm:$0xf]
      %v280 = vld [vmem:[%s1 + $0x1a8] sm:$0xf]
      %v281 = vld [vmem:[%s1 + $0x1ac] sm:$0xf]
      %v282 = vld [vmem:[%s1 + $0x1b0] sm:$0xf]
      %v283 = vld [vmem:[%s1 + $0x1b4] sm:$0xf]
      %v284 = vld [vmem:[%s1 + $0x1b8] sm:$0xf]
      %v285 = vld [vmem:[%s1 + $0x1bc] sm:$0xf]
      %v286 = vld [vmem:[%s1 + $0x1c0] sm:$0xf]
      %v287 = vld [vmem:[%s1 + $0x1c4] sm:$0xf]
      %v288 = vld [vmem:[%s1 + $0x1c8] sm:$0xf]
      %v289 = vld [vmem:[%s1 + $0x1cc] sm:$0xf]
      %v290 = vld [vmem:[%s1 + $0x1d0] sm:$0xf]
      %v291 = vld [vmem:[%s1 + $0x1d4] sm:$0xf]
      %v292 = vld [vmem:[%s1 + $0x1d8] sm:$0xf]
      %v293 = vld [vmem:[%s1 + $0x1dc] sm:$0xf]
      %v294 = vld [vmem:[%s1 + $0x1e0] sm:$0xf]
      %v295 = vld [vmem:[%s1 + $0x1e4] sm:$0xf]
      %v296 = vld [vmem:[%s1 + $0x1e8] sm:$0xf]
      %v297 = vld [vmem:[%s1 + $0x1ec] sm:$0xf]
      %v298 = vld [vmem:[%s1 + $0x1f0] sm:$0xf]
      %v299 = vld [vmem:[%s1 + $0x1f4] sm:$0xf]
      %v300 = vld [vmem:[%s1 + $0x1f8] sm:$0xf]
      %v301 = vld [vmem:[%s1 + $0x1fc] sm:$0xf]
      %v302 = vld [vmem:[%s2] sm:$0x1]
      %v304 = vlaneseq
      %v305 = vshrl.u32 %v304, 7
      %v306 = vsub.s32 0, %v305
      %v307 = vrot.slane %v302, %v306
      %v313 = vunpack.c.l.b16 %v170
      %v314 = vunpack.c.h.b16 %v170
      %v315 = vunpack.c.l.b16 %v171
      %v316 = vunpack.c.h.b16 %v171
      %v317 = vunpack.c.l.b16 %v172
      %v318 = vunpack.c.h.b16 %v172
      %v319 = vunpack.c.l.b16 %v173
      %v320 = vunpack.c.h.b16 %v173
      %v321 = vpack.c.b16 %v313, %v313
      %v322 = vpack.c.b16 %v314, %v314
      %v323 = vpack.c.b16 %v315, %v315
      %v324 = vpack.c.b16 %v316, %v316
      %v325 = vpack.c.b16 %v317, %v317
      %v326 = vpack.c.b16 %v318, %v318
      %v327 = vpack.c.b16 %v319, %v319
      %v328 = vpack.c.b16 %v320, %v320
      %v465 = vunpack.c.l.b16 %v174
      %v466 = vunpack.c.l.b16 %v175
      %v467 = vunpack.c.l.b16 %v176
      %v468 = vunpack.c.l.b16 %v177
      %v469 = vunpack.c.l.b16 %v178
      %v470 = vunpack.c.l.b16 %v179
      %v471 = vunpack.c.l.b16 %v180
      %v472 = vunpack.c.l.b16 %v181
      %v473 = vunpack.c.l.b16 %v182
      %v474 = vunpack.c.l.b16 %v183
      %v475 = vunpack.c.l.b16 %v184
      %v476 = vunpack.c.l.b16 %v185
      %v477 = vunpack.c.l.b16 %v186
      %v478 = vunpack.c.l.b16 %v187
      %v479 = vunpack.c.l.b16 %v188
      %v480 = vunpack.c.l.b16 %v189
      %v481 = vunpack.c.l.b16 %v190
      %v482 = vunpack.c.l.b16 %v191
      %v483 = vunpack.c.l.b16 %v192
      %v484 = vunpack.c.l.b16 %v193
      %v485 = vunpack.c.l.b16 %v194
      %v486 = vunpack.c.l.b16 %v195
      %v487 = vunpack.c.l.b16 %v196
      %v488 = vunpack.c.l.b16 %v197
      %v489 = vunpack.c.l.b16 %v198
      %v490 = vunpack.c.l.b16 %v199
      %v491 = vunpack.c.l.b16 %v200
      %v492 = vunpack.c.l.b16 %v201
      %v493 = vunpack.c.l.b16 %v202
      %v494 = vunpack.c.l.b16 %v203
      %v495 = vunpack.c.l.b16 %v204
      %v496 = vunpack.c.l.b16 %v205
      %v497 = vunpack.c.l.b16 %v206
      %v498 = vunpack.c.l.b16 %v207
      %v499 = vunpack.c.l.b16 %v208
      %v500 = vunpack.c.l.b16 %v209
      %v501 = vunpack.c.l.b16 %v210
      %v502 = vunpack.c.l.b16 %v211
      %v503 = vunpack.c.l.b16 %v212
      %v504 = vunpack.c.l.b16 %v213
      %v505 = vunpack.c.l.b16 %v214
      %v506 = vunpack.c.l.b16 %v215
      %v507 = vunpack.c.l.b16 %v216
      %v508 = vunpack.c.l.b16 %v217
      %v509 = vunpack.c.l.b16 %v218
      %v510 = vunpack.c.l.b16 %v219
      %v511 = vunpack.c.l.b16 %v220
      %v512 = vunpack.c.l.b16 %v221
      %v513 = vunpack.c.l.b16 %v222
      %v514 = vunpack.c.l.b16 %v223
      %v515 = vunpack.c.l.b16 %v224
      %v516 = vunpack.c.l.b16 %v225
      %v517 = vunpack.c.l.b16 %v226
      %v518 = vunpack.c.l.b16 %v227
      %v519 = vunpack.c.l.b16 %v228
      %v520 = vunpack.c.l.b16 %v229
      %v521 = vunpack.c.l.b16 %v230
      %v522 = vunpack.c.l.b16 %v231
      %v523 = vunpack.c.l.b16 %v232
      %v524 = vunpack.c.l.b16 %v233
      %v525 = vunpack.c.l.b16 %v234
      %v526 = vunpack.c.l.b16 %v235
      %v527 = vunpack.c.l.b16 %v236
      %v528 = vunpack.c.l.b16 %v237
      %v529 = vunpack.c.l.b16 %v238
      %v530 = vunpack.c.l.b16 %v239
      %v531 = vunpack.c.l.b16 %v240
      %v532 = vunpack.c.l.b16 %v241
      %v533 = vunpack.c.l.b16 %v242
      %v534 = vunpack.c.l.b16 %v243
      %v535 = vunpack.c.l.b16 %v244
      %v536 = vunpack.c.l.b16 %v245
      %v537 = vunpack.c.l.b16 %v246
      %v538 = vunpack.c.l.b16 %v247
      %v539 = vunpack.c.l.b16 %v248
      %v540 = vunpack.c.l.b16 %v249
      %v541 = vunpack.c.l.b16 %v250
      %v542 = vunpack.c.l.b16 %v251
      %v543 = vunpack.c.l.b16 %v252
      %v544 = vunpack.c.l.b16 %v253
      %v545 = vunpack.c.l.b16 %v254
      %v546 = vunpack.c.l.b16 %v255
      %v547 = vunpack.c.l.b16 %v256
      %v548 = vunpack.c.l.b16 %v257
      %v549 = vunpack.c.l.b16 %v258
      %v550 = vunpack.c.l.b16 %v259
      %v551 = vunpack.c.l.b16 %v260
      %v552 = vunpack.c.l.b16 %v261
      %v553 = vunpack.c.l.b16 %v262
      %v554 = vunpack.c.l.b16 %v263
      %v555 = vunpack.c.l.b16 %v264
      %v556 = vunpack.c.l.b16 %v265
      %v557 = vunpack.c.l.b16 %v266
      %v558 = vunpack.c.l.b16 %v267
      %v559 = vunpack.c.l.b16 %v268
      %v560 = vunpack.c.l.b16 %v269
      %v561 = vunpack.c.l.b16 %v270
      %v562 = vunpack.c.l.b16 %v271
      %v563 = vunpack.c.l.b16 %v272
      %v564 = vunpack.c.l.b16 %v273
      %v565 = vunpack.c.l.b16 %v274
      %v566 = vunpack.c.l.b16 %v275
      %v567 = vunpack.c.l.b16 %v276
      %v568 = vunpack.c.l.b16 %v277
      %v569 = vunpack.c.l.b16 %v278
      %v570 = vunpack.c.l.b16 %v279
      %v571 = vunpack.c.l.b16 %v280
      %v572 = vunpack.c.l.b16 %v281
      %v573 = vunpack.c.l.b16 %v282
      %v574 = vunpack.c.l.b16 %v283
      %v575 = vunpack.c.l.b16 %v284
      %v576 = vunpack.c.l.b16 %v285
      %v577 = vunpack.c.l.b16 %v286
      %v578 = vunpack.c.l.b16 %v287
      %v579 = vunpack.c.l.b16 %v288
      %v580 = vunpack.c.l.b16 %v289
      %v581 = vunpack.c.l.b16 %v290
      %v582 = vunpack.c.l.b16 %v291
      %v583 = vunpack.c.l.b16 %v292
      %v584 = vunpack.c.l.b16 %v293
      %v585 = vunpack.c.l.b16 %v294
      %v586 = vunpack.c.l.b16 %v295
      %v587 = vunpack.c.l.b16 %v296
      %v588 = vunpack.c.l.b16 %v297
      %v589 = vunpack.c.l.b16 %v298
      %v590 = vunpack.c.l.b16 %v299
      %v591 = vunpack.c.l.b16 %v300
      %v592 = vunpack.c.l.b16 %v301
      %v593 = vpack.c.b16 %v466, %v465
      %v594 = vpack.c.b16 %v468, %v467
      %v595 = vpack.c.b16 %v470, %v469
      %v596 = vpack.c.b16 %v472, %v471
      %v597 = vpack.c.b16 %v474, %v473
      %v598 = vpack.c.b16 %v476, %v475
      %v599 = vpack.c.b16 %v478, %v477
      %v600 = vpack.c.b16 %v480, %v479
      %v601 = vpack.c.b16 %v482, %v481
      %v602 = vpack.c.b16 %v484, %v483
      %v603 = vpack.c.b16 %v486, %v485
      %v604 = vpack.c.b16 %v488, %v487
      %v605 = vpack.c.b16 %v490, %v489
      %v606 = vpack.c.b16 %v492, %v491
      %v607 = vpack.c.b16 %v494, %v493
      %v608 = vpack.c.b16 %v496, %v495
      %v609 = vpack.c.b16 %v498, %v497
      %v610 = vpack.c.b16 %v500, %v499
      %v611 = vpack.c.b16 %v502, %v501
      %v612 = vpack.c.b16 %v504, %v503
      %v613 = vpack.c.b16 %v506, %v505
      %v614 = vpack.c.b16 %v508, %v507
      %v615 = vpack.c.b16 %v510, %v509
      %v616 = vpack.c.b16 %v512, %v511
      %v617 = vpack.c.b16 %v514, %v513
      %v618 = vpack.c.b16 %v516, %v515
      %v619 = vpack.c.b16 %v518, %v517
      %v620 = vpack.c.b16 %v520, %v519
      %v621 = vpack.c.b16 %v522, %v521
      %v622 = vpack.c.b16 %v524, %v523
      %v623 = vpack.c.b16 %v526, %v525
      %v624 = vpack.c.b16 %v528, %v527
      %v625 = vpack.c.b16 %v530, %v529
      %v626 = vpack.c.b16 %v532, %v531
      %v627 = vpack.c.b16 %v534, %v533
      %v628 = vpack.c.b16 %v536, %v535
      %v629 = vpack.c.b16 %v538, %v537
      %v630 = vpack.c.b16 %v540, %v539
      %v631 = vpack.c.b16 %v542, %v541
      %v632 = vpack.c.b16 %v544, %v543
      %v633 = vpack.c.b16 %v546, %v545
      %v634 = vpack.c.b16 %v548, %v547
      %v635 = vpack.c.b16 %v550, %v549
      %v636 = vpack.c.b16 %v552, %v551
      %v637 = vpack.c.b16 %v554, %v553
      %v638 = vpack.c.b16 %v556, %v555
      %v639 = vpack.c.b16 %v558, %v557
      %v640 = vpack.c.b16 %v560, %v559
      %v641 = vpack.c.b16 %v562, %v561
      %v642 = vpack.c.b16 %v564, %v563
      %v643 = vpack.c.b16 %v566, %v565
      %v644 = vpack.c.b16 %v568, %v567
      %v645 = vpack.c.b16 %v570, %v569
      %v646 = vpack.c.b16 %v572, %v571
      %v647 = vpack.c.b16 %v574, %v573
      %v648 = vpack.c.b16 %v576, %v575
      %v649 = vpack.c.b16 %v578, %v577
      %v650 = vpack.c.b16 %v580, %v579
      %v651 = vpack.c.b16 %v582, %v581
      %v652 = vpack.c.b16 %v584, %v583
      %v653 = vpack.c.b16 %v586, %v585
      %v654 = vpack.c.b16 %v588, %v587
      %v655 = vpack.c.b16 %v590, %v589
      %v656 = vpack.c.b16 %v592, %v591
      %721 = vmatprep.subr.bf16.mxu0 0
      %722 = vmatpush1.bf16.msra.mxu0 %v600
      %723 = vmatprep.subr.bf16.mxu0 0
      %724 = vmatpush1.bf16.msra.mxu0 %v599
      %725 = vmatprep.subr.bf16.mxu0 0
      %726 = vmatpush1.bf16.msra.mxu0 %v598
      %727 = vmatprep.subr.bf16.mxu0 0
      %728 = vmatpush1.bf16.msra.mxu0 %v597
      %729 = vmatprep.subr.bf16.mxu0 0
      %730 = vmatpush1.bf16.msra.mxu0 %v596
      %731 = vmatprep.subr.bf16.mxu0 0
      %732 = vmatpush1.bf16.msra.mxu0 %v595
      %733 = vmatprep.subr.bf16.mxu0 0
      %734 = vmatpush1.bf16.msra.mxu0 %v594
      %735 = vmatprep.subr.bf16.mxu0 0
      %736 = vmatpush1.bf16.msra.mxu0 %v593
      %737 = vmatprep.subr.bf16.mxu0 0
      %738 = vmatpush2.bf16.msra.mxu0 %v608
      %739 = vmatprep.subr.bf16.mxu0 0
      %740 = vmatpush2.bf16.msra.mxu0 %v607
      %741 = vmatprep.subr.bf16.mxu0 0
      %742 = vmatpush2.bf16.msra.mxu0 %v606
      %743 = vmatprep.subr.bf16.mxu0 0
      %744 = vmatpush2.bf16.msra.mxu0 %v605
      %745 = vmatprep.subr.bf16.mxu0 0
      %746 = vmatpush2.bf16.msra.mxu0 %v604
      %747 = vmatprep.subr.bf16.mxu0 0
      %748 = vmatpush2.bf16.msra.mxu0 %v603
      %749 = vmatprep.subr.bf16.mxu0 0
      %750 = vmatpush2.bf16.msra.mxu0 %v602
      %751 = vmatprep.subr.bf16.mxu0 0
      %752 = vmatpush2.bf16.msra.mxu0 %v601
      %753 = vmatprep.mubr.bf16.mxu0 %v322
      %754 = vmatmul.mubr.bf16.gmra.mxu0 %v321
      %v755 = vpop.f32.mrf.mxu0
      %v756 = vadd.f32 %v307, %v755
      %v757 = vpop.f32.mrf.mxu0
      %v758 = vpop.f32.mrf.mxu0
      %v759 = vpop.f32.mrf.mxu0
      %760 = vdwg.mxu0
      %761 = vmatprep.subr.bf16.mxu0 0
      %762 = vmatpush1.bf16.msra.mxu0 %v616
      %763 = vmatprep.subr.bf16.mxu0 0
      %764 = vmatpush1.bf16.msra.mxu0 %v615
      %765 = vmatprep.subr.bf16.mxu0 0
      %766 = vmatpush1.bf16.msra.mxu0 %v614
      %767 = vmatprep.subr.bf16.mxu0 0
      %768 = vmatpush1.bf16.msra.mxu0 %v613
      %769 = vmatprep.subr.bf16.mxu0 0
      %770 = vmatpush1.bf16.msra.mxu0 %v612
      %771 = vmatprep.subr.bf16.mxu0 0
      %772 = vmatpush1.bf16.msra.mxu0 %v611
      %773 = vmatprep.subr.bf16.mxu0 0
      %774 = vmatpush1.bf16.msra.mxu0 %v610
      %775 = vmatprep.subr.bf16.mxu0 0
      %776 = vmatpush1.bf16.msra.mxu0 %v609
      %777 = vmatprep.subr.bf16.mxu0 0
      %778 = vmatpush2.bf16.msra.mxu0 %v624
      %779 = vmatprep.subr.bf16.mxu0 0
      %780 = vmatpush2.bf16.msra.mxu0 %v623
      %781 = vmatprep.subr.bf16.mxu0 0
      %782 = vmatpush2.bf16.msra.mxu0 %v622
      %783 = vmatprep.subr.bf16.mxu0 0
      %784 = vmatpush2.bf16.msra.mxu0 %v621
      %785 = vmatprep.subr.bf16.mxu0 0
      %786 = vmatpush2.bf16.msra.mxu0 %v620
      %787 = vmatprep.subr.bf16.mxu0 0
      %788 = vmatpush2.bf16.msra.mxu0 %v619
      %789 = vmatprep.subr.bf16.mxu0 0
      %790 = vmatpush2.bf16.msra.mxu0 %v618
      %791 = vmatprep.subr.bf16.mxu0 0
      %792 = vmatpush2.bf16.msra.mxu0 %v617
      %793 = vmatprep.mubr.bf16.mxu0 %v324
      %794 = vmatmul.mubr.bf16.gmra.mxu0 %v323
      %v795 = vpop.f32.mrf.mxu0
      %v796 = vadd.f32 %v756, %v795
      %v797 = vpop.f32.mrf.mxu0
      %v798 = vpop.f32.mrf.mxu0
      %v799 = vpop.f32.mrf.mxu0
      %800 = vdwg.mxu0
      %801 = vmatprep.subr.bf16.mxu0 0
      %802 = vmatpush1.bf16.msra.mxu0 %v632
      %803 = vmatprep.subr.bf16.mxu0 0
      %804 = vmatpush1.bf16.msra.mxu0 %v631
      %805 = vmatprep.subr.bf16.mxu0 0
      %806 = vmatpush1.bf16.msra.mxu0 %v630
      %807 = vmatprep.subr.bf16.mxu0 0
      %808 = vmatpush1.bf16.msra.mxu0 %v629
      %809 = vmatprep.subr.bf16.mxu0 0
      %810 = vmatpush1.bf16.msra.mxu0 %v628
      %811 = vmatprep.subr.bf16.mxu0 0
      %812 = vmatpush1.bf16.msra.mxu0 %v627
      %813 = vmatprep.subr.bf16.mxu0 0
      %814 = vmatpush1.bf16.msra.mxu0 %v626
      %815 = vmatprep.subr.bf16.mxu0 0
      %816 = vmatpush1.bf16.msra.mxu0 %v625
      %817 = vmatprep.subr.bf16.mxu0 0
      %818 = vmatpush2.bf16.msra.mxu0 %v640
      %819 = vmatprep.subr.bf16.mxu0 0
      %820 = vmatpush2.bf16.msra.mxu0 %v639
      %821 = vmatprep.subr.bf16.mxu0 0
      %822 = vmatpush2.bf16.msra.mxu0 %v638
      %823 = vmatprep.subr.bf16.mxu0 0
      %824 = vmatpush2.bf16.msra.mxu0 %v637
      %825 = vmatprep.subr.bf16.mxu0 0
      %826 = vmatpush2.bf16.msra.mxu0 %v636
      %827 = vmatprep.subr.bf16.mxu0 0
      %828 = vmatpush2.bf16.msra.mxu0 %v635
      %829 = vmatprep.subr.bf16.mxu0 0
      %830 = vmatpush2.bf16.msra.mxu0 %v634
      %831 = vmatprep.subr.bf16.mxu0 0
      %832 = vmatpush2.bf16.msra.mxu0 %v633
      %833 = vmatprep.mubr.bf16.mxu0 %v326
      %834 = vmatmul.mubr.bf16.gmra.mxu0 %v325
      %v835 = vpop.f32.mrf.mxu0
      %v836 = vadd.f32 %v796, %v835
      %v837 = vpop.f32.mrf.mxu0
      %v838 = vpop.f32.mrf.mxu0
      %v839 = vpop.f32.mrf.mxu0
      %840 = vdwg.mxu0
      %841 = vmatprep.subr.bf16.mxu0 0
      %842 = vmatpush1.bf16.msra.mxu0 %v648
      %843 = vmatprep.subr.bf16.mxu0 0
      %844 = vmatpush1.bf16.msra.mxu0 %v647
      %845 = vmatprep.subr.bf16.mxu0 0
      %846 = vmatpush1.bf16.msra.mxu0 %v646
      %847 = vmatprep.subr.bf16.mxu0 0
      %848 = vmatpush1.bf16.msra.mxu0 %v645
      %849 = vmatprep.subr.bf16.mxu0 0
      %850 = vmatpush1.bf16.msra.mxu0 %v644
      %851 = vmatprep.subr.bf16.mxu0 0
      %852 = vmatpush1.bf16.msra.mxu0 %v643
      %853 = vmatprep.subr.bf16.mxu0 0
      %854 = vmatpush1.bf16.msra.mxu0 %v642
      %855 = vmatprep.subr.bf16.mxu0 0
      %856 = vmatpush1.bf16.msra.mxu0 %v641
      %857 = vmatprep.subr.bf16.mxu0 0
      %858 = vmatpush2.bf16.msra.mxu0 %v656
      %859 = vmatprep.subr.bf16.mxu0 0
      %860 = vmatpush2.bf16.msra.mxu0 %v655
      %861 = vmatprep.subr.bf16.mxu0 0
      %862 = vmatpush2.bf16.msra.mxu0 %v654
      %863 = vmatprep.subr.bf16.mxu0 0
      %864 = vmatpush2.bf16.msra.mxu0 %v653
      %865 = vmatprep.subr.bf16.mxu0 0
      %866 = vmatpush2.bf16.msra.mxu0 %v652
      %867 = vmatprep.subr.bf16.mxu0 0
      %868 = vmatpush2.bf16.msra.mxu0 %v651
      %869 = vmatprep.subr.bf16.mxu0 0
      %870 = vmatpush2.bf16.msra.mxu0 %v650
      %871 = vmatprep.subr.bf16.mxu0 0
      %872 = vmatpush2.bf16.msra.mxu0 %v649
      %873 = vmatprep.mubr.bf16.mxu0 %v328
      %874 = vmatmul.mubr.bf16.gmra.mxu0 %v327
      %v875 = vpop.f32.mrf.mxu0
      %v876 = vadd.f32 %v836, %v875
      %v877 = vpop.f32.mrf.mxu0
      %v878 = vpop.f32.mrf.mxu0
      %v879 = vpop.f32.mrf.mxu0
      %880 = vdwg.mxu0
      %v881 = vmax.f32 %v876, 0.0
      %v882 = vpack.c.bf16 %v881, %v881
      %883 = vst [vmem:[%s168] sm:$0xf] %v882
      %p884 = scmp.lt.s32.totalorder %s14, 1
      %s885 = scalar_select %p884, %s14, 1
      %s886 = smul.addr %s885, 4
      %s887 = scalar_lea.vmem %s3, %s886
      // Predicated region
      $region33: #{dqn_forward.4} parent=31 // pred_check
        %p888 = pneg %p100
      $region34: #{dqn_forward.4} parent=31 // pred_check_branch
        %890 = sbr.rel (%p888) target = $region36
      $region35: #{dqn_forward.4} parent=31 // pred_region
        _
      $region36: #{dqn_forward.4} parent=31 // pred_fallthru
        _
    $region32: #{dqn_forward.4} parent=5 // pred_fallthru
      _
    %p891 = scmp.le.s32.totalorder 2, %s9
    // Predicated region
    $region37: #{dqn_forward.4} parent=5 // pred_check
      %p892 = pneg %p891
    $region38: #{dqn_forward.4} parent=5 // pred_check_branch
      %894 = sbr.rel (%p892) target = $region40
    $region39: #{dqn_forward.4} parent=5 // pred_region
      %s895 = ssub.s32 %s9, 2
      // Predicated region
      $region41: #{dqn_forward.4} parent=39 // pred_check
        %p896 = pneg %p106
      $region42: #{dqn_forward.4} parent=39 // pred_check_branch
        %898 = sbr.rel (%p896) target = $region44
      $region43: #{dqn_forward.4} parent=39 // pred_region
        %p899 = scmp.lt.s32.totalorder %s15, 1
        %s900 = scalar_select %p899, %s15, 1
        %s901 = smul.addr %s900, 4
        %s902 = scalar_lea.vmem %s3, %s901
      $region44: #{dqn_forward.4} parent=39 // pred_fallthru
        _
    $region40: #{dqn_forward.4} parent=5 // pred_fallthru
      _
  $region6: #{dqn_forward.4} parent=0 // loop_footer
    %s13 = sadd.s32 1, %s9
  $region7: #{dqn_forward.4} parent=0 // loop_footer_branch
    %8 = sbr.rel target = $region3
  $region8: #{dqn_forward.4} parent=0 // loop_exit
    _

// kernel: dqn_forward.5
$region0: #{dqn_forward.5}
  #allocation0 [shape = 'u32[]', space=smem, size = 0x4, offset = 0x4, fixed_abs, tag = 'smem constant byte address 0x4 - core index']
  #allocation1 [shape = 'u32[144,128]{1,0:T(1,128)}', space=vmem, size = 0x12000, scoped, tag = 'internal scratch']
  %s0 = inlined_call_operand.vmem [shape: bf16[4,2,576], index: 0, kind: input, shape index: {}]
  %s1 = inlined_call_operand.vmem [shape: bf16[576,128], index: 1, kind: input, shape index: {}]
  %s2 = inlined_call_operand.vmem [shape: f32[1,128], index: 2, kind: input, shape index: {}]
  %s3 = inlined_call_operand.vmem [shape: bf16[4,128,512], index: 3, kind: input, shape index: {}]
  %s4 = inlined_call_operand.vmem [shape: f32[1,512], index: 4, kind: input, shape index: {}]
  %s5 = inlined_call_operand.vmem [shape: bf16[512,128], index: 5, kind: input, shape index: {}]
  %s6 = inlined_call_operand.vmem [shape: f32[1,128], index: 6, kind: input, shape index: {}]
  %s7 = inlined_call_operand.hbm [shape: f32[2,128], index: 7, kind: output, shape index: {}]
  %s8 = sld [smem:[#allocation0]]
  $region38: #{dqn_forward.5} parent=0
    _
  %s10 = ssub.s32 1, %s8
  %s11 = scalar_select 0, %s10, %s8
  $region1: #{dqn_forward.5} parent=0
    #allocation2 [shape = 'u8[1024]{0}', space=vmem, size = 0x400, scoped, tag = 'output window, operand 0, single buffered']
    #allocation3 [shape = 's32[1]{0}', space=sflag, size = 0x4, scoped, tag = 'scoped memory for dqn_forward.5']
    %12 = vsyncpa [#allocation3], 0
    // Predicated region
    $region2: #{dqn_forward.5} parent=1 // pred_check
      _
    $region3: #{dqn_forward.5} parent=1 // pred_check_branch
      %14 = sbr.rel (0) target = $region5
    $region4: #{dqn_forward.5} parent=1 // pred_region
      _
    $region5: #{dqn_forward.5} parent=1 // pred_fallthru
      _
    // Predicated region
    $region6: #{dqn_forward.5} parent=1 // pred_check
      _
    $region7: #{dqn_forward.5} parent=1 // pred_check_branch
      %16 = sbr.rel (0) target = $region9
    $region8: #{dqn_forward.5} parent=1 // pred_region
      _
    $region9: #{dqn_forward.5} parent=1 // pred_fallthru
      _
    // Predicated region
    $region10: #{dqn_forward.5} parent=1 // pred_check
      _
    $region11: #{dqn_forward.5} parent=1 // pred_check_branch
      %18 = sbr.rel (0) target = $region13
    $region12: #{dqn_forward.5} parent=1 // pred_region
      _
    $region13: #{dqn_forward.5} parent=1 // pred_fallthru
      _
    // Predicated region
    $region14: #{dqn_forward.5} parent=1 // pred_check
      _
    $region15: #{dqn_forward.5} parent=1 // pred_check_branch
      %20 = sbr.rel (0) target = $region17
    $region16: #{dqn_forward.5} parent=1 // pred_region
      _
    $region17: #{dqn_forward.5} parent=1 // pred_fallthru
      _
    // Predicated region
    $region18: #{dqn_forward.5} parent=1 // pred_check
      _
    $region19: #{dqn_forward.5} parent=1 // pred_check_branch
      %22 = sbr.rel (0) target = $region21
    $region20: #{dqn_forward.5} parent=1 // pred_region
      _
    $region21: #{dqn_forward.5} parent=1 // pred_fallthru
      _
    // Predicated region
    $region22: #{dqn_forward.5} parent=1 // pred_check
      _
    $region23: #{dqn_forward.5} parent=1 // pred_check_branch
      %24 = sbr.rel (0) target = $region25
    $region24: #{dqn_forward.5} parent=1 // pred_region
      _
    $region25: #{dqn_forward.5} parent=1 // pred_fallthru
      _
    // Predicated region
    $region26: #{dqn_forward.5} parent=1 // pred_check
      _
    $region27: #{dqn_forward.5} parent=1 // pred_check_branch
      %26 = sbr.rel (0) target = $region29
    $region28: #{dqn_forward.5} parent=1 // pred_region
      _
    $region29: #{dqn_forward.5} parent=1 // pred_fallthru
      _
    %v28 = vld [vmem:[%s0] sm:$0x1f]
    %v29 = vld [vmem:[%s1] sm:$0xf]
    %v30 = vld [vmem:[%s1 + $0x4] sm:$0xf]
    %v31 = vld [vmem:[%s1 + $0x8] sm:$0xf]
    %v32 = vld [vmem:[%s1 + $0xc] sm:$0xf]
    %v33 = vld [vmem:[%s1 + $0x10] sm:$0xf]
    %v34 = vld [vmem:[%s1 + $0x14] sm:$0xf]
    %v35 = vld [vmem:[%s1 + $0x18] sm:$0xf]
    %v36 = vld [vmem:[%s1 + $0x1c] sm:$0xf]
    %v37 = vld [vmem:[%s1 + $0x20] sm:$0xf]
    %v38 = vld [vmem:[%s1 + $0x24] sm:$0xf]
    %v39 = vld [vmem:[%s1 + $0x28] sm:$0xf]
    %v40 = vld [vmem:[%s1 + $0x2c] sm:$0xf]
    %v41 = vld [vmem:[%s1 + $0x30] sm:$0xf]
    %v42 = vld [vmem:[%s1 + $0x34] sm:$0xf]
    %v43 = vld [vmem:[%s1 + $0x38] sm:$0xf]
    %v44 = vld [vmem:[%s1 + $0x3c] sm:$0xf]
    %v45 = vld [vmem:[%s1 + $0x40] sm:$0xf]
    %v46 = vld [vmem:[%s1 + $0x44] sm:$0xf]
    %v47 = vld [vmem:[%s1 + $0x48] sm:$0xf]
    %v48 = vld [vmem:[%s1 + $0x4c] sm:$0xf]
    %v49 = vld [vmem:[%s1 + $0x50] sm:$0xf]
    %v50 = vld [vmem:[%s1 + $0x54] sm:$0xf]
    %v51 = vld [vmem:[%s1 + $0x58] sm:$0xf]
    %v52 = vld [vmem:[%s1 + $0x5c] sm:$0xf]
    %v53 = vld [vmem:[%s1 + $0x60] sm:$0xf]
    %v54 = vld [vmem:[%s1 + $0x64] sm:$0xf]
    %v55 = vld [vmem:[%s1 + $0x68] sm:$0xf]
    %v56 = vld [vmem:[%s1 + $0x6c] sm:$0xf]
    %v57 = vld [vmem:[%s1 + $0x70] sm:$0xf]
    %v58 = vld [vmem:[%s1 + $0x74] sm:$0xf]
    %v59 = vld [vmem:[%s1 + $0x78] sm:$0xf]
    %v60 = vld [vmem:[%s1 + $0x7c] sm:$0xf]
    %v61 = vld [vmem:[%s1 + $0x80] sm:$0xf]
    %v62 = vld [vmem:[%s1 + $0x84] sm:$0xf]
    %v63 = vld [vmem:[%s1 + $0x88] sm:$0xf]
    %v64 = vld [vmem:[%s1 + $0x8c] sm:$0xf]
    %v65 = vld [vmem:[%s1 + $0x90] sm:$0xf]
    %v66 = vld [vmem:[%s1 + $0x94] sm:$0xf]
    %v67 = vld [vmem:[%s1 + $0x98] sm:$0xf]
    %v68 = vld [vmem:[%s1 + $0x9c] sm:$0xf]
    %v69 = vld [vmem:[%s1 + $0xa0] sm:$0xf]
    %v70 = vld [vmem:[%s1 + $0xa4] sm:$0xf]
    %v71 = vld [vmem:[%s1 + $0xa8] sm:$0xf]
    %v72 = vld [vmem:[%s1 + $0xac] sm:$0xf]
    %v73 = vld [vmem:[%s1 + $0xb0] sm:$0xf]
    %v74 = vld [vmem:[%s1 + $0xb4] sm:$0xf]
    %v75 = vld [vmem:[%s1 + $0xb8] sm:$0xf]
    %v76 = vld [vmem:[%s1 + $0xbc] sm:$0xf]
    %v77 = vld [vmem:[%s1 + $0xc0] sm:$0xf]
    %v78 = vld [vmem:[%s1 + $0xc4] sm:$0xf]
    %v79 = vld [vmem:[%s1 + $0xc8] sm:$0xf]
    %v80 = vld [vmem:[%s1 + $0xcc] sm:$0xf]
    %v81 = vld [vmem:[%s1 + $0xd0] sm:$0xf]
    %v82 = vld [vmem:[%s1 + $0xd4] sm:$0xf]
    %v83 = vld [vmem:[%s1 + $0xd8] sm:$0xf]
    %v84 = vld [vmem:[%s1 + $0xdc] sm:$0xf]
    %v85 = vld [vmem:[%s1 + $0xe0] sm:$0xf]
    %v86 = vld [vmem:[%s1 + $0xe4] sm:$0xf]
    %v87 = vld [vmem:[%s1 + $0xe8] sm:$0xf]
    %v88 = vld [vmem:[%s1 + $0xec] sm:$0xf]
    %v89 = vld [vmem:[%s1 + $0xf0] sm:$0xf]
    %v90 = vld [vmem:[%s1 + $0xf4] sm:$0xf]
    %v91 = vld [vmem:[%s1 + $0xf8] sm:$0xf]
    %v92 = vld [vmem:[%s1 + $0xfc] sm:$0xf]
    %v93 = vld [vmem:[%s1 + $0x100] sm:$0xf]
    %v94 = vld [vmem:[%s1 + $0x104] sm:$0xf]
    %v95 = vld [vmem:[%s1 + $0x108] sm:$0xf]
    %v96 = vld [vmem:[%s1 + $0x10c] sm:$0xf]
    %v97 = vld [vmem:[%s1 + $0x110] sm:$0xf]
    %v98 = vld [vmem:[%s1 + $0x114] sm:$0xf]
    %v99 = vld [vmem:[%s1 + $0x118] sm:$0xf]
    %v100 = vld [vmem:[%s1 + $0x11c] sm:$0xf]
    %v101 = vld [vmem:[%s2] sm:$0x1]
    %v103 = vlaneseq
    %v104 = vshrl.u32 %v103, 7
    %v105 = vsub.s32 0, %v104
    %v106 = vrot.slane %v101, %v105
    %v109 = vcombine.high %v28, %v28
    %v111 = vunpack.c.l.s4 1966171168
    %v112 = vunpack.c.0.s8 %v111
    %v113 = vlaneseq
    %v114 = vshrl.u32 %v113, 7
    %v115 = vsub.s32 %v112, %v114
    %v116 = vrot.slane %v28, %v115
    %v118 = vunpack.c.l.s4 1966171168
    %v119 = vunpack.c.0.s8 %v118
    %v120 = vlaneseq
    %v121 = vshrl.u32 %v120, 7
    %v122 = vsub.s32 %v119, %v121
    %v123 = vrot.slane %v109, %v122
    %v124 = vcombine.high %v116, %v116
    %v126 = vunpack.c.l.s4 1966171168
    %v127 = vunpack.c.0.s8 %v126
    %v128 = vlaneseq
    %v129 = vshrl.u32 %v128, 7
    %v130 = vsub.s32 %v127, %v129
    %v131 = vrot.slane %v116, %v130
    %v133 = vunpack.c.l.s4 1966171168
    %v134 = vunpack.c.0.s8 %v133
    %v135 = vlaneseq
    %v136 = vshrl.u32 %v135, 7
    %v137 = vsub.s32 %v134, %v136
    %v138 = vrot.slane %v123, %v137
    %v140 = vunpack.c.l.s4 1966171168
    %v141 = vunpack.c.0.s8 %v140
    %v142 = vlaneseq
    %v143 = vshrl.u32 %v142, 7
    %v144 = vsub.s32 %v141, %v143
    %v145 = vrot.slane %v124, %v144
    %v146 = vcombine.high %v131, %v131
    %v147 = vcombine.high %v145, %v145
    %v224 = vunpack.c.l.b16 %v29
    %v225 = vunpack.c.l.b16 %v30
    %v226 = vunpack.c.l.b16 %v31
    %v227 = vunpack.c.l.b16 %v32
    %v228 = vunpack.c.l.b16 %v33
    %v229 = vunpack.c.l.b16 %v34
    %v230 = vunpack.c.l.b16 %v35
    %v231 = vunpack.c.l.b16 %v36
    %v232 = vunpack.c.l.b16 %v37
    %v233 = vunpack.c.l.b16 %v38
    %v234 = vunpack.c.l.b16 %v39
    %v235 = vunpack.c.l.b16 %v40
    %v236 = vunpack.c.l.b16 %v41
    %v237 = vunpack.c.l.b16 %v42
    %v238 = vunpack.c.l.b16 %v43
    %v239 = vunpack.c.l.b16 %v44
    %v240 = vunpack.c.l.b16 %v45
    %v241 = vunpack.c.l.b16 %v46
    %v242 = vunpack.c.l.b16 %v47
    %v243 = vunpack.c.l.b16 %v48
    %v244 = vunpack.c.l.b16 %v49
    %v245 = vunpack.c.l.b16 %v50
    %v246 = vunpack.c.l.b16 %v51
    %v247 = vunpack.c.l.b16 %v52
    %v248 = vunpack.c.l.b16 %v53
    %v249 = vunpack.c.l.b16 %v54
    %v250 = vunpack.c.l.b16 %v55
    %v251 = vunpack.c.l.b16 %v56
    %v252 = vunpack.c.l.b16 %v57
    %v253 = vunpack.c.l.b16 %v58
    %v254 = vunpack.c.l.b16 %v59
    %v255 = vunpack.c.l.b16 %v60
    %v256 = vunpack.c.l.b16 %v61
    %v257 = vunpack.c.l.b16 %v62
    %v258 = vunpack.c.l.b16 %v63
    %v259 = vunpack.c.l.b16 %v64
    %v260 = vunpack.c.l.b16 %v65
    %v261 = vunpack.c.l.b16 %v66
    %v262 = vunpack.c.l.b16 %v67
    %v263 = vunpack.c.l.b16 %v68
    %v264 = vunpack.c.l.b16 %v69
    %v265 = vunpack.c.l.b16 %v70
    %v266 = vunpack.c.l.b16 %v71
    %v267 = vunpack.c.l.b16 %v72
    %v268 = vunpack.c.l.b16 %v73
    %v269 = vunpack.c.l.b16 %v74
    %v270 = vunpack.c.l.b16 %v75
    %v271 = vunpack.c.l.b16 %v76
    %v272 = vunpack.c.l.b16 %v77
    %v273 = vunpack.c.l.b16 %v78
    %v274 = vunpack.c.l.b16 %v79
    %v275 = vunpack.c.l.b16 %v80
    %v276 = vunpack.c.l.b16 %v81
    %v277 = vunpack.c.l.b16 %v82
    %v278 = vunpack.c.l.b16 %v83
    %v279 = vunpack.c.l.b16 %v84
    %v280 = vunpack.c.l.b16 %v85
    %v281 = vunpack.c.l.b16 %v86
    %v282 = vunpack.c.l.b16 %v87
    %v283 = vunpack.c.l.b16 %v88
    %v284 = vunpack.c.l.b16 %v89
    %v285 = vunpack.c.l.b16 %v90
    %v286 = vunpack.c.l.b16 %v91
    %v287 = vunpack.c.l.b16 %v92
    %v288 = vunpack.c.l.b16 %v93
    %v289 = vunpack.c.l.b16 %v94
    %v290 = vunpack.c.l.b16 %v95
    %v291 = vunpack.c.l.b16 %v96
    %v292 = vunpack.c.l.b16 %v97
    %v293 = vunpack.c.l.b16 %v98
    %v294 = vunpack.c.l.b16 %v99
    %v295 = vunpack.c.l.b16 %v100
    %v296 = vpack.c.b16 %v225, %v224
    %v297 = vpack.c.b16 %v227, %v226
    %v298 = vpack.c.b16 %v229, %v228
    %v299 = vpack.c.b16 %v231, %v230
    %v300 = vpack.c.b16 %v233, %v232
    %v301 = vpack.c.b16 %v235, %v234
    %v302 = vpack.c.b16 %v237, %v236
    %v303 = vpack.c.b16 %v239, %v238
    %v304 = vpack.c.b16 %v241, %v240
    %v305 = vpack.c.b16 %v243, %v242
    %v306 = vpack.c.b16 %v245, %v244
    %v307 = vpack.c.b16 %v247, %v246
    %v308 = vpack.c.b16 %v249, %v248
    %v309 = vpack.c.b16 %v251, %v250
    %v310 = vpack.c.b16 %v253, %v252
    %v311 = vpack.c.b16 %v255, %v254
    %v312 = vpack.c.b16 %v257, %v256
    %v313 = vpack.c.b16 %v259, %v258
    %v314 = vpack.c.b16 %v261, %v260
    %v315 = vpack.c.b16 %v263, %v262
    %v316 = vpack.c.b16 %v265, %v264
    %v317 = vpack.c.b16 %v267, %v266
    %v318 = vpack.c.b16 %v269, %v268
    %v319 = vpack.c.b16 %v271, %v270
    %v320 = vpack.c.b16 %v273, %v272
    %v321 = vpack.c.b16 %v275, %v274
    %v322 = vpack.c.b16 %v277, %v276
    %v323 = vpack.c.b16 %v279, %v278
    %v324 = vpack.c.b16 %v281, %v280
    %v325 = vpack.c.b16 %v283, %v282
    %v326 = vpack.c.b16 %v285, %v284
    %v327 = vpack.c.b16 %v287, %v286
    %v328 = vpack.c.b16 %v289, %v288
    %v329 = vpack.c.b16 %v291, %v290
    %v330 = vpack.c.b16 %v293, %v292
    %v331 = vpack.c.b16 %v295, %v294
    %vm368 = vcmask 523264
    %v370 = vsel %vm368, %v138, 0
    %372 = vmatprep.subr.bf16.mxu0 0
    %373 = vmatpush1.bf16.msra.mxu0 %v303
    %374 = vmatprep.subr.bf16.mxu0 0
    %375 = vmatpush1.bf16.msra.mxu0 %v302
    %376 = vmatprep.subr.bf16.mxu0 0
    %377 = vmatpush1.bf16.msra.mxu0 %v301
    %378 = vmatprep.subr.bf16.mxu0 0
    %379 = vmatpush1.bf16.msra.mxu0 %v300
    %380 = vmatprep.subr.bf16.mxu0 0
    %381 = vmatpush1.bf16.msra.mxu0 %v299
    %382 = vmatprep.subr.bf16.mxu0 0
    %383 = vmatpush1.bf16.msra.mxu0 %v298
    %384 = vmatprep.subr.bf16.mxu0 0
    %385 = vmatpush1.bf16.msra.mxu0 %v297
    %386 = vmatprep.subr.bf16.mxu0 0
    %387 = vmatpush1.bf16.msra.mxu0 %v296
    %388 = vmatprep.subr.bf16.mxu0 0
    %389 = vmatpush2.bf16.msra.mxu0 %v311
    %390 = vmatprep.subr.bf16.mxu0 0
    %391 = vmatpush2.bf16.msra.mxu0 %v310
    %392 = vmatprep.subr.bf16.mxu0 0
    %393 = vmatpush2.bf16.msra.mxu0 %v309
    %394 = vmatprep.subr.bf16.mxu0 0
    %395 = vmatpush2.bf16.msra.mxu0 %v308
    %396 = vmatprep.subr.bf16.mxu0 0
    %397 = vmatpush2.bf16.msra.mxu0 %v307
    %398 = vmatprep.subr.bf16.mxu0 0
    %399 = vmatpush2.bf16.msra.mxu0 %v306
    %400 = vmatprep.subr.bf16.mxu0 0
    %401 = vmatpush2.bf16.msra.mxu0 %v305
    %402 = vmatprep.subr.bf16.mxu0 0
    %403 = vmatpush2.bf16.msra.mxu0 %v304
    %404 = vmatprep.mubr.bf16.mxu0 %v145
    %405 = vmatmul.mubr.bf16.gmra.mxu0 %v131
    %v406 = vpop.f32.mrf.mxu0
    %v407 = vadd.f32 %v106, %v406
    %v408 = vpop.f32.mrf.mxu0
    %v409 = vpop.f32.mrf.mxu0
    %v410 = vpop.f32.mrf.mxu0
    %411 = vdwg.mxu0
    %412 = vmatprep.subr.bf16.mxu0 0
    %413 = vmatpush1.bf16.msra.mxu0 %v319
    %414 = vmatprep.subr.bf16.mxu0 0
    %415 = vmatpush1.bf16.msra.mxu0 %v318
    %416 = vmatprep.subr.bf16.mxu0 0
    %417 = vmatpush1.bf16.msra.mxu0 %v317
    %418 = vmatprep.subr.bf16.mxu0 0
    %419 = vmatpush1.bf16.msra.mxu0 %v316
    %420 = vmatprep.subr.bf16.mxu0 0
    %421 = vmatpush1.bf16.msra.mxu0 %v315
    %422 = vmatprep.subr.bf16.mxu0 0
    %423 = vmatpush1.bf16.msra.mxu0 %v314
    %424 = vmatprep.subr.bf16.mxu0 0
    %425 = vmatpush1.bf16.msra.mxu0 %v313
    %426 = vmatprep.subr.bf16.mxu0 0
    %427 = vmatpush1.bf16.msra.mxu0 %v312
    %428 = vmatprep.subr.bf16.mxu0 0
    %429 = vmatpush2.bf16.msra.mxu0 %v327
    %430 = vmatprep.subr.bf16.mxu0 0
    %431 = vmatpush2.bf16.msra.mxu0 %v326
    %432 = vmatprep.subr.bf16.mxu0 0
    %433 = vmatpush2.bf16.msra.mxu0 %v325
    %434 = vmatprep.subr.bf16.mxu0 0
    %435 = vmatpush2.bf16.msra.mxu0 %v324
    %436 = vmatprep.subr.bf16.mxu0 0
    %437 = vmatpush2.bf16.msra.mxu0 %v323
    %438 = vmatprep.subr.bf16.mxu0 0
    %439 = vmatpush2.bf16.msra.mxu0 %v322
    %440 = vmatprep.subr.bf16.mxu0 0
    %441 = vmatpush2.bf16.msra.mxu0 %v321
    %442 = vmatprep.subr.bf16.mxu0 0
    %443 = vmatpush2.bf16.msra.mxu0 %v320
    %444 = vmatprep.mubr.bf16.mxu0 %v147
    %445 = vmatmul.mubr.bf16.gmra.mxu0 %v146
    %v446 = vpop.f32.mrf.mxu0
    %v447 = vadd.f32 %v407, %v446
    %v448 = vpop.f32.mrf.mxu0
    %v449 = vpop.f32.mrf.mxu0
    %v450 = vpop.f32.mrf.mxu0
    %451 = vdwg.mxu0
    %452 = vmatprep.subr.bf16.mxu0 0
    %453 = vmatpush1.bf16.msra.mxu0 0
    %454 = vmatprep.subr.bf16.mxu0 0
    %455 = vmatpush1.bf16.msra.mxu0 0
    %456 = vmatprep.subr.bf16.mxu0 0
    %457 = vmatpush1.bf16.msra.mxu0 0
    %458 = vmatprep.subr.bf16.mxu0 0
    %459 = vmatpush1.bf16.msra.mxu0 0
    %460 = vmatprep.subr.bf16.mxu0 0
    %461 = vmatpush1.bf16.msra.mxu0 %v331
    %462 = vmatprep.subr.bf16.mxu0 0
    %463 = vmatpush1.bf16.msra.mxu0 %v330
    %464 = vmatprep.subr.bf16.mxu0 0
    %465 = vmatpush1.bf16.msra.mxu0 %v329
    %466 = vmatprep.subr.bf16.mxu0 0
    %467 = vmatpush1.bf16.msra.mxu0 %v328
    %468 = vmatprep.subr.bf16.mxu0 0
    %469 = vmatpush2.bf16.msra.mxu0 0
    %470 = vmatprep.subr.bf16.mxu0 0
    %471 = vmatpush2.bf16.msra.mxu0 0
    %472 = vmatprep.subr.bf16.mxu0 0
    %473 = vmatpush2.bf16.msra.mxu0 0
    %474 = vmatprep.subr.bf16.mxu0 0
    %475 = vmatpush2.bf16.msra.mxu0 0
    %476 = vmatprep.subr.bf16.mxu0 0
    %477 = vmatpush2.bf16.msra.mxu0 0
    %478 = vmatprep.subr.bf16.mxu0 0
    %479 = vmatpush2.bf16.msra.mxu0 0
    %480 = vmatprep.subr.bf16.mxu0 0
    %481 = vmatpush2.bf16.msra.mxu0 0
    %482 = vmatprep.subr.bf16.mxu0 0
    %483 = vmatpush2.bf16.msra.mxu0 0
    %484 = vmatprep.mubr.bf16.mxu0 0
    %485 = vmatmul.mubr.bf16.gmra.mxu0 %v370
    %v486 = vpop.f32.mrf.mxu0
    %v487 = vadd.f32 %v447, %v486
    %v488 = vpop.f32.mrf.mxu0
    %v489 = vpop.f32.mrf.mxu0
    %v490 = vpop.f32.mrf.mxu0
    %491 = vdwg.mxu0
    %v492 = vmax.f32 %v487, 0.0
    %v493 = vpack.c.bf16 %v492, %v492
    %v494 = vld [vmem:[%s3] sm:$0xff]
    %v495 = vld [vmem:[%s3 + $0x8] sm:$0xff]
    %v496 = vld [vmem:[%s3 + $0x10] sm:$0xff]
    %v497 = vld [vmem:[%s3 + $0x18] sm:$0xff]
    %v498 = vld [vmem:[%s3 + $0x20] sm:$0xff]
    %v499 = vld [vmem:[%s3 + $0x28] sm:$0xff]
    %v500 = vld [vmem:[%s3 + $0x30] sm:$0xff]
    %v501 = vld [vmem:[%s3 + $0x38] sm:$0xff]
    %v502 = vld [vmem:[%s3 + $0x40] sm:$0xff]
    %v503 = vld [vmem:[%s3 + $0x48] sm:$0xff]
    %v504 = vld [vmem:[%s3 + $0x50] sm:$0xff]
    %v505 = vld [vmem:[%s3 + $0x58] sm:$0xff]
    %v506 = vld [vmem:[%s3 + $0x60] sm:$0xff]
    %v507 = vld [vmem:[%s3 + $0x68] sm:$0xff]
    %v508 = vld [vmem:[%s3 + $0x70] sm:$0xff]
    %v509 = vld [vmem:[%s3 + $0x78] sm:$0xff]
    %v510 = vld [vmem:[%s3 + $0x80] sm:$0xff]
    %v511 = vld [vmem:[%s3 + $0x88] sm:$0xff]
    %v512 = vld [vmem:[%s3 + $0x90] sm:$0xff]
    %v513 = vld [vmem:[%s3 + $0x98] sm:$0xff]
    %v514 = vld [vmem:[%s3 + $0xa0] sm:$0xff]
    %v515 = vld [vmem:[%s3 + $0xa8] sm:$0xff]
    %v516 = vld [vmem:[%s3 + $0xb0] sm:$0xff]
    %v517 = vld [vmem:[%s3 + $0xb8] sm:$0xff]
    %v518 = vld [vmem:[%s3 + $0xc0] sm:$0xff]
    %v519 = vld [vmem:[%s3 + $0xc8] sm:$0xff]
    %v520 = vld [vmem:[%s3 + $0xd0] sm:$0xff]
    %v521 = vld [vmem:[%s3 + $0xd8] sm:$0xff]
    %v522 = vld [vmem:[%s3 + $0xe0] sm:$0xff]
    %v523 = vld [vmem:[%s3 + $0xe8] sm:$0xff]
    %v524 = vld [vmem:[%s3 + $0xf0] sm:$0xff]
    %v525 = vld [vmem:[%s3 + $0xf8] sm:$0xff]
    %s526 = scalar_lea.vmem %s0, 5
    %v527 = vld [vmem:[%s526] sm:$0x1f]
    %v529 = vcombine.high %v527, %v527
    %v531 = vunpack.c.l.s4 1966171168
    %v532 = vunpack.c.0.s8 %v531
    %v533 = vlaneseq
    %v534 = vshrl.u32 %v533, 7
    %v535 = vsub.s32 %v532, %v534
    %v536 = vrot.slane %v527, %v535
    %v538 = vunpack.c.l.s4 1966171168
    %v539 = vunpack.c.0.s8 %v538
    %v540 = vlaneseq
    %v541 = vshrl.u32 %v540, 7
    %v542 = vsub.s32 %v539, %v541
    %v543 = vrot.slane %v529, %v542
    %v544 = vcombine.high %v536, %v536
    %v546 = vunpack.c.l.s4 1966171168
    %v547 = vunpack.c.0.s8 %v546
    %v548 = vlaneseq
    %v549 = vshrl.u32 %v548, 7
    %v550 = vsub.s32 %v547, %v549
    %v551 = vrot.slane %v536, %v550
    %v553 = vunpack.c.l.s4 1966171168
    %v554 = vunpack.c.0.s8 %v553
    %v555 = vlaneseq
    %v556 = vshrl.u32 %v555, 7
    %v557 = vsub.s32 %v554, %v556
    %v558 = vrot.slane %v543, %v557
    %v560 = vunpack.c.l.s4 1966171168
    %v561 = vunpack.c.0.s8 %v560
    %v562 = vlaneseq
    %v563 = vshrl.u32 %v562, 7
    %v564 = vsub.s32 %v561, %v563
    %v565 = vrot.slane %v544, %v564
    %v566 = vcombine.high %v551, %v551
    %v567 = vcombine.high %v565, %v565
    %v573 = vsel %vm368, %v558, 0
    %575 = vmatprep.subr.bf16.mxu0 0
    %576 = vmatpush1.bf16.msra.mxu0 %v303
    %577 = vmatprep.subr.bf16.mxu0 0
    %578 = vmatpush1.bf16.msra.mxu0 %v302
    %579 = vmatprep.subr.bf16.mxu0 0
    %580 = vmatpush1.bf16.msra.mxu0 %v301
    %581 = vmatprep.subr.bf16.mxu0 0
    %582 = vmatpush1.bf16.msra.mxu0 %v300
    %583 = vmatprep.subr.bf16.mxu0 0
    %584 = vmatpush1.bf16.msra.mxu0 %v299
    %585 = vmatprep.subr.bf16.mxu0 0
    %586 = vmatpush1.bf16.msra.mxu0 %v298
    %587 = vmatprep.subr.bf16.mxu0 0
    %588 = vmatpush1.bf16.msra.mxu0 %v297
    %589 = vmatprep.subr.bf16.mxu0 0
    %590 = vmatpush1.bf16.msra.mxu0 %v296
    %591 = vmatprep.subr.bf16.mxu0 0
    %592 = vmatpush2.bf16.msra.mxu0 %v311
    %593 = vmatprep.subr.bf16.mxu0 0
    %594 = vmatpush2.bf16.msra.mxu0 %v310
    %595 = vmatprep.subr.bf16.mxu0 0
    %596 = vmatpush2.bf16.msra.mxu0 %v309
    %597 = vmatprep.subr.bf16.mxu0 0
    %598 = vmatpush2.bf16.msra.mxu0 %v308
    %599 = vmatprep.subr.bf16.mxu0 0
    %600 = vmatpush2.bf16.msra.mxu0 %v307
    %601 = vmatprep.subr.bf16.mxu0 0
    %602 = vmatpush2.bf16.msra.mxu0 %v306
    %603 = vmatprep.subr.bf16.mxu0 0
    %604 = vmatpush2.bf16.msra.mxu0 %v305
    %605 = vmatprep.subr.bf16.mxu0 0
    %606 = vmatpush2.bf16.msra.mxu0 %v304
    %607 = vmatprep.mubr.bf16.mxu0 %v565
    %608 = vmatmul.mubr.bf16.gmra.mxu0 %v551
    %v609 = vpop.f32.mrf.mxu0
    %v610 = vadd.f32 %v106, %v609
    %v611 = vpop.f32.mrf.mxu0
    %v612 = vpop.f32.mrf.mxu0
    %v613 = vpop.f32.mrf.mxu0
    %614 = vdwg.mxu0
    %615 = vmatprep.subr.bf16.mxu0 0
    %616 = vmatpush1.bf16.msra.mxu0 %v319
    %617 = vmatprep.subr.bf16.mxu0 0
    %618 = vmatpush1.bf16.msra.mxu0 %v318
    %619 = vmatprep.subr.bf16.mxu0 0
    %620 = vmatpush1.bf16.msra.mxu0 %v317
    %621 = vmatprep.subr.bf16.mxu0 0
    %622 = vmatpush1.bf16.msra.mxu0 %v316
    %623 = vmatprep.subr.bf16.mxu0 0
    %624 = vmatpush1.bf16.msra.mxu0 %v315
    %625 = vmatprep.subr.bf16.mxu0 0
    %626 = vmatpush1.bf16.msra.mxu0 %v314
    %627 = vmatprep.subr.bf16.mxu0 0
    %628 = vmatpush1.bf16.msra.mxu0 %v313
    %629 = vmatprep.subr.bf16.mxu0 0
    %630 = vmatpush1.bf16.msra.mxu0 %v312
    %631 = vmatprep.subr.bf16.mxu0 0
    %632 = vmatpush2.bf16.msra.mxu0 %v327
    %633 = vmatprep.subr.bf16.mxu0 0
    %634 = vmatpush2.bf16.msra.mxu0 %v326
    %635 = vmatprep.subr.bf16.mxu0 0
    %636 = vmatpush2.bf16.msra.mxu0 %v325
    %637 = vmatprep.subr.bf16.mxu0 0
    %638 = vmatpush2.bf16.msra.mxu0 %v324
    %639 = vmatprep.subr.bf16.mxu0 0
    %640 = vmatpush2.bf16.msra.mxu0 %v323
    %641 = vmatprep.subr.bf16.mxu0 0
    %642 = vmatpush2.bf16.msra.mxu0 %v322
    %643 = vmatprep.subr.bf16.mxu0 0
    %644 = vmatpush2.bf16.msra.mxu0 %v321
    %645 = vmatprep.subr.bf16.mxu0 0
    %646 = vmatpush2.bf16.msra.mxu0 %v320
    %647 = vmatprep.mubr.bf16.mxu0 %v567
    %648 = vmatmul.mubr.bf16.gmra.mxu0 %v566
    %v649 = vpop.f32.mrf.mxu0
    %v650 = vadd.f32 %v610, %v649
    %v651 = vpop.f32.mrf.mxu0
    %v652 = vpop.f32.mrf.mxu0
    %v653 = vpop.f32.mrf.mxu0
    %654 = vdwg.mxu0
    %655 = vmatprep.subr.bf16.mxu0 0
    %656 = vmatpush1.bf16.msra.mxu0 0
    %657 = vmatprep.subr.bf16.mxu0 0
    %658 = vmatpush1.bf16.msra.mxu0 0
    %659 = vmatprep.subr.bf16.mxu0 0
    %660 = vmatpush1.bf16.msra.mxu0 0
    %661 = vmatprep.subr.bf16.mxu0 0
    %662 = vmatpush1.bf16.msra.mxu0 0
    %663 = vmatprep.subr.bf16.mxu0 0
    %664 = vmatpush1.bf16.msra.mxu0 %v331
    %665 = vmatprep.subr.bf16.mxu0 0
    %666 = vmatpush1.bf16.msra.mxu0 %v330
    %667 = vmatprep.subr.bf16.mxu0 0
    %668 = vmatpush1.bf16.msra.mxu0 %v329
    %669 = vmatprep.subr.bf16.mxu0 0
    %670 = vmatpush1.bf16.msra.mxu0 %v328
    %671 = vmatprep.subr.bf16.mxu0 0
    %672 = vmatpush2.bf16.msra.mxu0 0
    %673 = vmatprep.subr.bf16.mxu0 0
    %674 = vmatpush2.bf16.msra.mxu0 0
    %675 = vmatprep.subr.bf16.mxu0 0
    %676 = vmatpush2.bf16.msra.mxu0 0
    %677 = vmatprep.subr.bf16.mxu0 0
    %678 = vmatpush2.bf16.msra.mxu0 0
    %679 = vmatprep.subr.bf16.mxu0 0
    %680 = vmatpush2.bf16.msra.mxu0 0
    %681 = vmatprep.subr.bf16.mxu0 0
    %682 = vmatpush2.bf16.msra.mxu0 0
    %683 = vmatprep.subr.bf16.mxu0 0
    %684 = vmatpush2.bf16.msra.mxu0 0
    %685 = vmatprep.subr.bf16.mxu0 0
    %686 = vmatpush2.bf16.msra.mxu0 0
    %687 = vmatprep.mubr.bf16.mxu0 0
    %688 = vmatmul.mubr.bf16.gmra.mxu0 %v573
    %v689 = vpop.f32.mrf.mxu0
    %v690 = vadd.f32 %v650, %v689
    %v691 = vpop.f32.mrf.mxu0
    %v692 = vpop.f32.mrf.mxu0
    %v693 = vpop.f32.mrf.mxu0
    %694 = vdwg.mxu0
    %v695 = vmax.f32 %v690, 0.0
    %v696 = vpack.c.bf16 %v695, %v695
    %s697 = scalar_lea.vmem %s3, 256
    %v698 = vld [vmem:[%s697] sm:$0xff]
    %v699 = vld [vmem:[%s697 + $0x8] sm:$0xff]
    %v700 = vld [vmem:[%s697 + $0x10] sm:$0xff]
    %v701 = vld [vmem:[%s697 + $0x18] sm:$0xff]
    %v702 = vld [vmem:[%s697 + $0x20] sm:$0xff]
    %v703 = vld [vmem:[%s697 + $0x28] sm:$0xff]
    %v704 = vld [vmem:[%s697 + $0x30] sm:$0xff]
    %v705 = vld [vmem:[%s697 + $0x38] sm:$0xff]
    %v706 = vld [vmem:[%s697 + $0x40] sm:$0xff]
    %v707 = vld [vmem:[%s697 + $0x48] sm:$0xff]
    %v708 = vld [vmem:[%s697 + $0x50] sm:$0xff]
    %v709 = vld [vmem:[%s697 + $0x58] sm:$0xff]
    %v710 = vld [vmem:[%s697 + $0x60] sm:$0xff]
    %v711 = vld [vmem:[%s697 + $0x68] sm:$0xff]
    %v712 = vld [vmem:[%s697 + $0x70] sm:$0xff]
    %v713 = vld [vmem:[%s697 + $0x78] sm:$0xff]
    %v714 = vld [vmem:[%s697 + $0x80] sm:$0xff]
    %v715 = vld [vmem:[%s697 + $0x88] sm:$0xff]
    %v716 = vld [vmem:[%s697 + $0x90] sm:$0xff]
    %v717 = vld [vmem:[%s697 + $0x98] sm:$0xff]
    %v718 = vld [vmem:[%s697 + $0xa0] sm:$0xff]
    %v719 = vld [vmem:[%s697 + $0xa8] sm:$0xff]
    %v720 = vld [vmem:[%s697 + $0xb0] sm:$0xff]
    %v721 = vld [vmem:[%s697 + $0xb8] sm:$0xff]
    %v722 = vld [vmem:[%s697 + $0xc0] sm:$0xff]
    %v723 = vld [vmem:[%s697 + $0xc8] sm:$0xff]
    %v724 = vld [vmem:[%s697 + $0xd0] sm:$0xff]
    %v725 = vld [vmem:[%s697 + $0xd8] sm:$0xff]
    %v726 = vld [vmem:[%s697 + $0xe0] sm:$0xff]
    %v727 = vld [vmem:[%s697 + $0xe8] sm:$0xff]
    %v728 = vld [vmem:[%s697 + $0xf0] sm:$0xff]
    %v729 = vld [vmem:[%s697 + $0xf8] sm:$0xff]
    %v762 = vunpack.c.l.b16 %v698
    %v763 = vunpack.c.h.b16 %v698
    %v764 = vunpack.c.l.b16 %v699
    %v765 = vunpack.c.h.b16 %v699
    %v766 = vunpack.c.l.b16 %v700
    %v767 = vunpack.c.h.b16 %v700
    %v768 = vunpack.c.l.b16 %v701
    %v769 = vunpack.c.h.b16 %v701
    %v770 = vunpack.c.l.b16 %v702
    %v771 = vunpack.c.h.b16 %v702
    %v772 = vunpack.c.l.b16 %v703
    %v773 = vunpack.c.h.b16 %v703
    %v774 = vunpack.c.l.b16 %v704
    %v775 = vunpack.c.h.b16 %v704
    %v776 = vunpack.c.l.b16 %v705
    %v777 = vunpack.c.h.b16 %v705
    %v778 = vunpack.c.l.b16 %v706
    %v779 = vunpack.c.h.b16 %v706
    %v780 = vunpack.c.l.b16 %v707
    %v781 = vunpack.c.h.b16 %v707
    %v782 = vunpack.c.l.b16 %v708
    %v783 = vunpack.c.h.b16 %v708
    %v784 = vunpack.c.l.b16 %v709
    %v785 = vunpack.c.h.b16 %v709
    %v786 = vunpack.c.l.b16 %v710
    %v787 = vunpack.c.h.b16 %v710
    %v788 = vunpack.c.l.b16 %v711
    %v789 = vunpack.c.h.b16 %v711
    %v790 = vunpack.c.l.b16 %v712
    %v791 = vunpack.c.h.b16 %v712
    %v792 = vunpack.c.l.b16 %v713
    %v793 = vunpack.c.h.b16 %v713
    %v794 = vunpack.c.l.b16 %v714
    %v795 = vunpack.c.h.b16 %v714
    %v796 = vunpack.c.l.b16 %v715
    %v797 = vunpack.c.h.b16 %v715
    %v798 = vunpack.c.l.b16 %v716
    %v799 = vunpack.c.h.b16 %v716
    %v800 = vunpack.c.l.b16 %v717
    %v801 = vunpack.c.h.b16 %v717
    %v802 = vunpack.c.l.b16 %v718
    %v803 = vunpack.c.h.b16 %v718
    %v804 = vunpack.c.l.b16 %v719
    %v805 = vunpack.c.h.b16 %v719
    %v806 = vunpack.c.l.b16 %v720
    %v807 = vunpack.c.h.b16 %v720
    %v808 = vunpack.c.l.b16 %v721
    %v809 = vunpack.c.h.b16 %v721
    %v810 = vunpack.c.l.b16 %v722
    %v811 = vunpack.c.h.b16 %v722
    %v812 = vunpack.c.l.b16 %v723
    %v813 = vunpack.c.h.b16 %v723
    %v814 = vunpack.c.l.b16 %v724
    %v815 = vunpack.c.h.b16 %v724
    %v816 = vunpack.c.l.b16 %v725
    %v817 = vunpack.c.h.b16 %v725
    %v818 = vunpack.c.l.b16 %v726
    %v819 = vunpack.c.h.b16 %v726
    %v820 = vunpack.c.l.b16 %v727
    %v821 = vunpack.c.h.b16 %v727
    %v822 = vunpack.c.l.b16 %v728
    %v823 = vunpack.c.h.b16 %v728
    %v824 = vunpack.c.l.b16 %v729
    %v825 = vunpack.c.h.b16 %v729
    %v826 = vpack.c.b16 %v766, %v762
    %v827 = vpack.c.b16 %v767, %v763
    %v828 = vpack.c.b16 %v768, %v764
    %v829 = vpack.c.b16 %v769, %v765
    %v830 = vpack.c.b16 %v774, %v770
    %v831 = vpack.c.b16 %v775, %v771
    %v832 = vpack.c.b16 %v776, %v772
    %v833 = vpack.c.b16 %v777, %v773
    %v834 = vpack.c.b16 %v782, %v778
    %v835 = vpack.c.b16 %v783, %v779
    %v836 = vpack.c.b16 %v784, %v780
    %v837 = vpack.c.b16 %v785, %v781
    %v838 = vpack.c.b16 %v790, %v786
    %v839 = vpack.c.b16 %v791, %v787
    %v840 = vpack.c.b16 %v792, %v788
    %v841 = vpack.c.b16 %v793, %v789
    %v842 = vpack.c.b16 %v798, %v794
    %v843 = vpack.c.b16 %v799, %v795
    %v844 = vpack.c.b16 %v800, %v796
    %v845 = vpack.c.b16 %v801, %v797
    %v846 = vpack.c.b16 %v806, %v802
    %v847 = vpack.c.b16 %v807, %v803
    %v848 = vpack.c.b16 %v808, %v804
    %v849 = vpack.c.b16 %v809, %v805
    %v850 = vpack.c.b16 %v814, %v810
    %v851 = vpack.c.b16 %v815, %v811
    %v852 = vpack.c.b16 %v816, %v812
    %v853 = vpack.c.b16 %v817, %v813
    %v854 = vpack.c.b16 %v822, %v818
    %v855 = vpack.c.b16 %v823, %v819
    %v856 = vpack.c.b16 %v824, %v820
    %v857 = vpack.c.b16 %v825, %v821
    %890 = vmatprep.subr.bf16.mxu0 %v855
    %891 = vmatpush1.bf16.msra.mxu0 %v854
    %892 = vmatprep.subr.bf16.mxu0 %v851
    %893 = vmatpush1.bf16.msra.mxu0 %v850
    %894 = vmatprep.subr.bf16.mxu0 %v847
    %895 = vmatpush1.bf16.msra.mxu0 %v846
    %896 = vmatprep.subr.bf16.mxu0 %v843
    %897 = vmatpush1.bf16.msra.mxu0 %v842
    %898 = vmatprep.subr.bf16.mxu0 %v839
    %899 = vmatpush1.bf16.msra.mxu0 %v838
    %900 = vmatprep.subr.bf16.mxu0 %v835
    %901 = vmatpush1.bf16.msra.mxu0 %v834
    %902 = vmatprep.subr.bf16.mxu0 %v831
    %903 = vmatpush1.bf16.msra.mxu0 %v830
    %904 = vmatprep.subr.bf16.mxu0 %v827
    %905 = vmatpush1.bf16.msra.mxu0 %v826
    %906 = vmatprep.subr.bf16.mxu0 0
    %907 = vmatpush2.bf16.msra.mxu0 0
    %908 = vmatprep.subr.bf16.mxu0 0
    %909 = vmatpush2.bf16.msra.mxu0 0
    %910 = vmatprep.subr.bf16.mxu0 0
    %911 = vmatpush2.bf16.msra.mxu0 0
    %912 = vmatprep.subr.bf16.mxu0 0
    %913 = vmatpush2.bf16.msra.mxu0 0
    %914 = vmatprep.subr.bf16.mxu0 0
    %915 = vmatpush2.bf16.msra.mxu0 0
    %916 = vmatprep.subr.bf16.mxu0 0
    %917 = vmatpush2.bf16.msra.mxu0 0
    %918 = vmatprep.subr.bf16.mxu0 0
    %919 = vmatpush2.bf16.msra.mxu0 0
    %920 = vmatprep.subr.bf16.mxu0 0
    %921 = vmatpush2.bf16.msra.mxu0 0
    %922 = vmatprep.mubr.bf16.mxu0 0
    %923 = vmatmul.mubr.bf16.gmra.mxu0 %v696
    %v924 = vpop.f32.mrf.mxu0
    %v925 = vadd.f32 0.0, %v924
    %v926 = vpop.f32.mrf.mxu0
    %v927 = vadd.f32 0.0, %v926
    %v928 = vpop.f32.mrf.mxu0
    %v929 = vpop.f32.mrf.mxu0
    %930 = vdwg.mxu0
    %931 = vmatprep.subr.bf16.mxu0 %v857
    %932 = vmatpush1.bf16.msra.mxu0 %v856
    %933 = vmatprep.subr.bf16.mxu0 %v853
    %934 = vmatpush1.bf16.msra.mxu0 %v852
    %935 = vmatprep.subr.bf16.mxu0 %v849
    %936 = vmatpush1.bf16.msra.mxu0 %v848
    %937 = vmatprep.subr.bf16.mxu0 %v845
    %938 = vmatpush1.bf16.msra.mxu0 %v844
    %939 = vmatprep.subr.bf16.mxu0 %v841
    %940 = vmatpush1.bf16.msra.mxu0 %v840
    %941 = vmatprep.subr.bf16.mxu0 %v837
    %942 = vmatpush1.bf16.msra.mxu0 %v836
    %943 = vmatprep.subr.bf16.mxu0 %v833
    %944 = vmatpush1.bf16.msra.mxu0 %v832
    %945 = vmatprep.subr.bf16.mxu0 %v829
    %946 = vmatpush1.bf16.msra.mxu0 %v828
    %947 = vmatprep.subr.bf16.mxu0 0
    %948 = vmatpush2.bf16.msra.mxu0 0
    %949 = vmatprep.subr.bf16.mxu0 0
    %950 = vmatpush2.bf16.msra.mxu0 0
    %951 = vmatprep.subr.bf16.mxu0 0
    %952 = vmatpush2.bf16.msra.mxu0 0
    %953 = vmatprep.subr.bf16.mxu0 0
    %954 = vmatpush2.bf16.msra.mxu0 0
    %955 = vmatprep.subr.bf16.mxu0 0
    %956 = vmatpush2.bf16.msra.mxu0 0
    %957 = vmatprep.subr.bf16.mxu0 0
    %958 = vmatpush2.bf16.msra.mxu0 0
    %959 = vmatprep.subr.bf16.mxu0 0
    %960 = vmatpush2.bf16.msra.mxu0 0
    %961 = vmatprep.subr.bf16.mxu0 0
    %962 = vmatpush2.bf16.msra.mxu0 0
    %963 = vmatprep.mubr.bf16.mxu0 0
    %964 = vmatmul.mubr.bf16.gmra.mxu0 %v696
    %v965 = vpop.f32.mrf.mxu0
    %v966 = vadd.f32 0.0, %v965
    %v967 = vpop.f32.mrf.mxu0
    %v968 = vadd.f32 0.0, %v967
    %v969 = vpop.f32.mrf.mxu0
    %v970 = vpop.f32.mrf.mxu0
    %971 = vdwg.mxu0
    %v1004 = vunpack.c.l.b16 %v494
    %v1005 = vunpack.c.h.b16 %v494
    %v1006 = vunpack.c.l.b16 %v495
    %v1007 = vunpack.c.h.b16 %v495
    %v1008 = vunpack.c.l.b16 %v496
    %v1009 = vunpack.c.h.b16 %v496
    %v1010 = vunpack.c.l.b16 %v497
    %v1011 = vunpack.c.h.b16 %v497
    %v1012 = vunpack.c.l.b16 %v498
    %v1013 = vunpack.c.h.b16 %v498
    %v1014 = vunpack.c.l.b16 %v499
    %v1015 = vunpack.c.h.b16 %v499
    %v1016 = vunpack.c.l.b16 %v500
    %v1017 = vunpack.c.h.b16 %v500
    %v1018 = vunpack.c.l.b16 %v501
    %v1019 = vunpack.c.h.b16 %v501
    %v1020 = vunpack.c.l.b16 %v502
    %v1021 = vunpack.c.h.b16 %v502
    %v1022 = vunpack.c.l.b16 %v503
    %v1023 = vunpack.c.h.b16 %v503
    %v1024 = vunpack.c.l.b16 %v504
    %v1025 = vunpack.c.h.b16 %v504
    %v1026 = vunpack.c.l.b16 %v505
    %v1027 = vunpack.c.h.b16 %v505
    %v1028 = vunpack.c.l.b16 %v506
    %v1029 = vunpack.c.h.b16 %v506
    %v1030 = vunpack.c.l.b16 %v507
    %v1031 = vunpack.c.h.b16 %v507
    %v1032 = vunpack.c.l.b16 %v508
    %v1033 = vunpack.c.h.b16 %v508
    %v1034 = vunpack.c.l.b16 %v509
    %v1035 = vunpack.c.h.b16 %v509
    %v1036 = vunpack.c.l.b16 %v510
    %v1037 = vunpack.c.h.b16 %v510
    %v1038 = vunpack.c.l.b16 %v511
    %v1039 = vunpack.c.h.b16 %v511
    %v1040 = vunpack.c.l.b16 %v512
    %v1041 = vunpack.c.h.b16 %v512
    %v1042 = vunpack.c.l.b16 %v513
    %v1043 = vunpack.c.h.b16 %v513
    %v1044 = vunpack.c.l.b16 %v514
    %v1045 = vunpack.c.h.b16 %v514
    %v1046 = vunpack.c.l.b16 %v515
    %v1047 = vunpack.c.h.b16 %v515
    %v1048 = vunpack.c.l.b16 %v516
    %v1049 = vunpack.c.h.b16 %v516
    %v1050 = vunpack.c.l.b16 %v517
    %v1051 = vunpack.c.h.b16 %v517
    %v1052 = vunpack.c.l.b16 %v518
    %v1053 = vunpack.c.h.b16 %v518
    %v1054 = vunpack.c.l.b16 %v519
    %v1055 = vunpack.c.h.b16 %v519
    %v1056 = vunpack.c.l.b16 %v520
    %v1057 = vunpack.c.h.b16 %v520
    %v1058 = vunpack.c.l.b16 %v521
    %v1059 = vunpack.c.h.b16 %v521
    %v1060 = vunpack.c.l.b16 %v522
    %v1061 = vunpack.c.h.b16 %v522
    %v1062 = vunpack.c.l.b16 %v523
    %v1063 = vunpack.c.h.b16 %v523
    %v1064 = vunpack.c.l.b16 %v524
    %v1065 = vunpack.c.h.b16 %v524
    %v1066 = vunpack.c.l.b16 %v525
    %v1067 = vunpack.c.h.b16 %v525
    %v1068 = vpack.c.b16 %v1008, %v1004
    %v1069 = vpack.c.b16 %v1009, %v1005
    %v1070 = vpack.c.b16 %v1010, %v1006
    %v1071 = vpack.c.b16 %v1011, %v1007
    %v1072 = vpack.c.b16 %v1016, %v1012
    %v1073 = vpack.c.b16 %v1017, %v1013
    %v1074 = vpack.c.b16 %v1018, %v1014
    %v1075 = vpack.c.b16 %v1019, %v1015
    %v1076 = vpack.c.b16 %v1024, %v1020
    %v1077 = vpack.c.b16 %v1025, %v1021
    %v1078 = vpack.c.b16 %v1026, %v1022
    %v1079 = vpack.c.b16 %v1027, %v1023
    %v1080 = vpack.c.b16 %v1032, %v1028
    %v1081 = vpack.c.b16 %v1033, %v1029
    %v1082 = vpack.c.b16 %v1034, %v1030
    %v1083 = vpack.c.b16 %v1035, %v1031
    %v1084 = vpack.c.b16 %v1040, %v1036
    %v1085 = vpack.c.b16 %v1041, %v1037
    %v1086 = vpack.c.b16 %v1042, %v1038
    %v1087 = vpack.c.b16 %v1043, %v1039
    %v1088 = vpack.c.b16 %v1048, %v1044
    %v1089 = vpack.c.b16 %v1049, %v1045
    %v1090 = vpack.c.b16 %v1050, %v1046
    %v1091 = vpack.c.b16 %v1051, %v1047
    %v1092 = vpack.c.b16 %v1056, %v1052
    %v1093 = vpack.c.b16 %v1057, %v1053
    %v1094 = vpack.c.b16 %v1058, %v1054
    %v1095 = vpack.c.b16 %v1059, %v1055
    %v1096 = vpack.c.b16 %v1064, %v1060
    %v1097 = vpack.c.b16 %v1065, %v1061
    %v1098 = vpack.c.b16 %v1066, %v1062
    %v1099 = vpack.c.b16 %v1067, %v1063
    %1132 = vmatprep.subr.bf16.mxu0 %v1097
    %1133 = vmatpush1.bf16.msra.mxu0 %v1096
    %1134 = vmatprep.subr.bf16.mxu0 %v1093
    %1135 = vmatpush1.bf16.msra.mxu0 %v1092
    %1136 = vmatprep.subr.bf16.mxu0 %v1089
    %1137 = vmatpush1.bf16.msra.mxu0 %v1088
    %1138 = vmatprep.subr.bf16.mxu0 %v1085
    %1139 = vmatpush1.bf16.msra.mxu0 %v1084
    %1140 = vmatprep.subr.bf16.mxu0 %v1081
    %1141 = vmatpush1.bf16.msra.mxu0 %v1080
    %1142 = vmatprep.subr.bf16.mxu0 %v1077
    %1143 = vmatpush1.bf16.msra.mxu0 %v1076
    %1144 = vmatprep.subr.bf16.mxu0 %v1073
    %1145 = vmatpush1.bf16.msra.mxu0 %v1072
    %1146 = vmatprep.subr.bf16.mxu0 %v1069
    %1147 = vmatpush1.bf16.msra.mxu0 %v1068
    %1148 = vmatprep.subr.bf16.mxu0 0
    %1149 = vmatpush2.bf16.msra.mxu0 0
    %1150 = vmatprep.subr.bf16.mxu0 0
    %1151 = vmatpush2.bf16.msra.mxu0 0
    %1152 = vmatprep.subr.bf16.mxu0 0
    %1153 = vmatpush2.bf16.msra.mxu0 0
    %1154 = vmatprep.subr.bf16.mxu0 0
    %1155 = vmatpush2.bf16.msra.mxu0 0
    %1156 = vmatprep.subr.bf16.mxu0 0
    %1157 = vmatpush2.bf16.msra.mxu0 0
    %1158 = vmatprep.subr.bf16.mxu0 0
    %1159 = vmatpush2.bf16.msra.mxu0 0
    %1160 = vmatprep.subr.bf16.mxu0 0
    %1161 = vmatpush2.bf16.msra.mxu0 0
    %1162 = vmatprep.subr.bf16.mxu0 0
    %1163 = vmatpush2.bf16.msra.mxu0 0
    %1164 = vmatprep.mubr.bf16.mxu0 0
    %1165 = vmatmul.mubr.bf16.gmra.mxu0 %v493
    %v1166 = vpop.f32.mrf.mxu0
    %v1167 = vadd.f32 %v925, %v1166
    %v1168 = vpop.f32.mrf.mxu0
    %v1169 = vadd.f32 %v927, %v1168
    %v1170 = vpop.f32.mrf.mxu0
    %v1171 = vpop.f32.mrf.mxu0
    %1172 = vdwg.mxu0
    %1173 = vmatprep.subr.bf16.mxu0 %v1099
    %1174 = vmatpush1.bf16.msra.mxu0 %v1098
    %1175 = vmatprep.subr.bf16.mxu0 %v1095
    %1176 = vmatpush1.bf16.msra.mxu0 %v1094
    %1177 = vmatprep.subr.bf16.mxu0 %v1091
    %1178 = vmatpush1.bf16.msra.mxu0 %v1090
    %1179 = vmatprep.subr.bf16.mxu0 %v1087
    %1180 = vmatpush1.bf16.msra.mxu0 %v1086
    %1181 = vmatprep.subr.bf16.mxu0 %v1083
    %1182 = vmatpush1.bf16.msra.mxu0 %v1082
    %1183 = vmatprep.subr.bf16.mxu0 %v1079
    %1184 = vmatpush1.bf16.msra.mxu0 %v1078
    %1185 = vmatprep.subr.bf16.mxu0 %v1075
    %1186 = vmatpush1.bf16.msra.mxu0 %v1074
    %1187 = vmatprep.subr.bf16.mxu0 %v1071
    %1188 = vmatpush1.bf16.msra.mxu0 %v1070
    %1189 = vmatprep.subr.bf16.mxu0 0
    %1190 = vmatpush2.bf16.msra.mxu0 0
    %1191 = vmatprep.subr.bf16.mxu0 0
    %1192 = vmatpush2.bf16.msra.mxu0 0
    %1193 = vmatprep.subr.bf16.mxu0 0
    %1194 = vmatpush2.bf16.msra.mxu0 0
    %1195 = vmatprep.subr.bf16.mxu0 0
    %1196 = vmatpush2.bf16.msra.mxu0 0
    %1197 = vmatprep.subr.bf16.mxu0 0
    %1198 = vmatpush2.bf16.msra.mxu0 0
    %1199 = vmatprep.subr.bf16.mxu0 0
    %1200 = vmatpush2.bf16.msra.mxu0 0
    %1201 = vmatprep.subr.bf16.mxu0 0
    %1202 = vmatpush2.bf16.msra.mxu0 0
    %1203 = vmatprep.subr.bf16.mxu0 0
    %1204 = vmatpush2.bf16.msra.mxu0 0
    %1205 = vmatprep.mubr.bf16.mxu0 0
    %1206 = vmatmul.mubr.bf16.gmra.mxu0 %v493
    %v1207 = vpop.f32.mrf.mxu0
    %v1208 = vadd.f32 %v966, %v1207
    %v1209 = vpop.f32.mrf.mxu0
    %v1210 = vadd.f32 %v968, %v1209
    %v1211 = vpop.f32.mrf.mxu0
    %v1212 = vpop.f32.mrf.mxu0
    %1213 = vdwg.mxu0
    %s1214 = scalar_lea.vmem %s0, 10
    %v1215 = vld [vmem:[%s1214] sm:$0x1f]
    %v1217 = vcombine.high %v1215, %v1215
    %v1219 = vunpack.c.l.s4 1966171168
    %v1220 = vunpack.c.0.s8 %v1219
    %v1221 = vlaneseq
    %v1222 = vshrl.u32 %v1221, 7
    %v1223 = vsub.s32 %v1220, %v1222
    %v1224 = vrot.slane %v1215, %v1223
    %v1226 = vunpack.c.l.s4 1966171168
    %v1227 = vunpack.c.0.s8 %v1226
    %v1228 = vlaneseq
    %v1229 = vshrl.u32 %v1228, 7
    %v1230 = vsub.s32 %v1227, %v1229
    %v1231 = vrot.slane %v1217, %v1230
    %v1232 = vcombine.high %v1224, %v1224
    %v1234 = vunpack.c.l.s4 1966171168
    %v1235 = vunpack.c.0.s8 %v1234
    %v1236 = vlaneseq
    %v1237 = vshrl.u32 %v1236, 7
    %v1238 = vsub.s32 %v1235, %v1237
    %v1239 = vrot.slane %v1224, %v1238
    %v1241 = vunpack.c.l.s4 1966171168
    %v1242 = vunpack.c.0.s8 %v1241
    %v1243 = vlaneseq
    %v1244 = vshrl.u32 %v1243, 7
    %v1245 = vsub.s32 %v1242, %v1244
    %v1246 = vrot.slane %v1231, %v1245
    %v1248 = vunpack.c.l.s4 1966171168
    %v1249 = vunpack.c.0.s8 %v1248
    %v1250 = vlaneseq
    %v1251 = vshrl.u32 %v1250, 7
    %v1252 = vsub.s32 %v1249, %v1251
    %v1253 = vrot.slane %v1232, %v1252
    %v1254 = vcombine.high %v1239, %v1239
    %v1255 = vcombine.high %v1253, %v1253
    %v1261 = vsel %vm368, %v1246, 0
    %1263 = vmatprep.subr.bf16.mxu0 0
    %1264 = vmatpush1.bf16.msra.mxu0 %v303
    %1265 = vmatprep.subr.bf16.mxu0 0
    %1266 = vmatpush1.bf16.msra.mxu0 %v302
    %1267 = vmatprep.subr.bf16.mxu0 0
    %1268 = vmatpush1.bf16.msra.mxu0 %v301
    %1269 = vmatprep.subr.bf16.mxu0 0
    %1270 = vmatpush1.bf16.msra.mxu0 %v300
    %1271 = vmatprep.subr.bf16.mxu0 0
    %1272 = vmatpush1.bf16.msra.mxu0 %v299
    %1273 = vmatprep.subr.bf16.mxu0 0
    %1274 = vmatpush1.bf16.msra.mxu0 %v298
    %1275 = vmatprep.subr.bf16.mxu0 0
    %1276 = vmatpush1.bf16.msra.mxu0 %v297
    %1277 = vmatprep.subr.bf16.mxu0 0
    %1278 = vmatpush1.bf16.msra.mxu0 %v296
    %1279 = vmatprep.subr.bf16.mxu0 0
    %1280 = vmatpush2.bf16.msra.mxu0 %v311
    %1281 = vmatprep.subr.bf16.mxu0 0
    %1282 = vmatpush2.bf16.msra.mxu0 %v310
    %1283 = vmatprep.subr.bf16.mxu0 0
    %1284 = vmatpush2.bf16.msra.mxu0 %v309
    %1285 = vmatprep.subr.bf16.mxu0 0
    %1286 = vmatpush2.bf16.msra.mxu0 %v308
    %1287 = vmatprep.subr.bf16.mxu0 0
    %1288 = vmatpush2.bf16.msra.mxu0 %v307
    %1289 = vmatprep.subr.bf16.mxu0 0
    %1290 = vmatpush2.bf16.msra.mxu0 %v306
    %1291 = vmatprep.subr.bf16.mxu0 0
    %1292 = vmatpush2.bf16.msra.mxu0 %v305
    %1293 = vmatprep.subr.bf16.mxu0 0
    %1294 = vmatpush2.bf16.msra.mxu0 %v304
    %1295 = vmatprep.mubr.bf16.mxu0 %v1253
    %1296 = vmatmul.mubr.bf16.gmra.mxu0 %v1239
    %v1297 = vpop.f32.mrf.mxu0
    %v1298 = vadd.f32 %v106, %v1297
    %v1299 = vpop.f32.mrf.mxu0
    %v1300 = vpop.f32.mrf.mxu0
    %v1301 = vpop.f32.mrf.mxu0
    %1302 = vdwg.mxu0
    %1303 = vmatprep.subr.bf16.mxu0 0
    %1304 = vmatpush1.bf16.msra.mxu0 %v319
    %1305 = vmatprep.subr.bf16.mxu0 0
    %1306 = vmatpush1.bf16.msra.mxu0 %v318
    %1307 = vmatprep.subr.bf16.mxu0 0
    %1308 = vmatpush1.bf16.msra.mxu0 %v317
    %1309 = vmatprep.subr.bf16.mxu0 0
    %1310 = vmatpush1.bf16.msra.mxu0 %v316
    %1311 = vmatprep.subr.bf16.mxu0 0
    %1312 = vmatpush1.bf16.msra.mxu0 %v315
    %1313 = vmatprep.subr.bf16.mxu0 0
    %1314 = vmatpush1.bf16.msra.mxu0 %v314
    %1315 = vmatprep.subr.bf16.mxu0 0
    %1316 = vmatpush1.bf16.msra.mxu0 %v313
    %1317 = vmatprep.subr.bf16.mxu0 0
    %1318 = vmatpush1.bf16.msra.mxu0 %v312
    %1319 = vmatprep.subr.bf16.mxu0 0
    %1320 = vmatpush2.bf16.msra.mxu0 %v327
    %1321 = vmatprep.subr.bf16.mxu0 0
    %1322 = vmatpush2.bf16.msra.mxu0 %v326
    %1323 = vmatprep.subr.bf16.mxu0 0
    %1324 = vmatpush2.bf16.msra.mxu0 %v325
    %1325 = vmatprep.subr.bf16.mxu0 0
    %1326 = vmatpush2.bf16.msra.mxu0 %v324
    %1327 = vmatprep.subr.bf16.mxu0 0
    %1328 = vmatpush2.bf16.msra.mxu0 %v323
    %1329 = vmatprep.subr.bf16.mxu0 0
    %1330 = vmatpush2.bf16.msra.mxu0 %v322
    %1331 = vmatprep.subr.bf16.mxu0 0
    %1332 = vmatpush2.bf16.msra.mxu0 %v321
    %1333 = vmatprep.subr.bf16.mxu0 0
    %1334 = vmatpush2.bf16.msra.mxu0 %v320
    %1335 = vmatprep.mubr.bf16.mxu0 %v1255
    %1336 = vmatmul.mubr.bf16.gmra.mxu0 %v1254
    %v1337 = vpop.f32.mrf.mxu0
    %v1338 = vadd.f32 %v1298, %v1337
    %v1339 = vpop.f32.mrf.mxu0
    %v1340 = vpop.f32.mrf.mxu0
    %v1341 = vpop.f32.mrf.mxu0
    %1342 = vdwg.mxu0
    %1343 = vmatprep.subr.bf16.mxu0 0
    %1344 = vmatpush1.bf16.msra.mxu0 0
    %1345 = vmatprep.subr.bf16.mxu0 0
    %1346 = vmatpush1.bf16.msra.mxu0 0
    %1347 = vmatprep.subr.bf16.mxu0 0
    %1348 = vmatpush1.bf16.msra.mxu0 0
    %1349 = vmatprep.subr.bf16.mxu0 0
    %1350 = vmatpush1.bf16.msra.mxu0 0
    %1351 = vmatprep.subr.bf16.mxu0 0
    %1352 = vmatpush1.bf16.msra.mxu0 %v331
    %1353 = vmatprep.subr.bf16.mxu0 0
    %1354 = vmatpush1.bf16.msra.mxu0 %v330
    %1355 = vmatprep.subr.bf16.mxu0 0
    %1356 = vmatpush1.bf16.msra.mxu0 %v329
    %1357 = vmatprep.subr.bf16.mxu0 0
    %1358 = vmatpush1.bf16.msra.mxu0 %v328
    %1359 = vmatprep.subr.bf16.mxu0 0
    %1360 = vmatpush2.bf16.msra.mxu0 0
    %1361 = vmatprep.subr.bf16.mxu0 0
    %1362 = vmatpush2.bf16.msra.mxu0 0
    %1363 = vmatprep.subr.bf16.mxu0 0
    %1364 = vmatpush2.bf16.msra.mxu0 0
    %1365 = vmatprep.subr.bf16.mxu0 0
    %1366 = vmatpush2.bf16.msra.mxu0 0
    %1367 = vmatprep.subr.bf16.mxu0 0
    %1368 = vmatpush2.bf16.msra.mxu0 0
    %1369 = vmatprep.subr.bf16.mxu0 0
    %1370 = vmatpush2.bf16.msra.mxu0 0
    %1371 = vmatprep.subr.bf16.mxu0 0
    %1372 = vmatpush2.bf16.msra.mxu0 0
    %1373 = vmatprep.subr.bf16.mxu0 0
    %1374 = vmatpush2.bf16.msra.mxu0 0
    %1375 = vmatprep.mubr.bf16.mxu0 0
    %1376 = vmatmul.mubr.bf16.gmra.mxu0 %v1261
    %v1377 = vpop.f32.mrf.mxu0
    %v1378 = vadd.f32 %v1338, %v1377
    %v1379 = vpop.f32.mrf.mxu0
    %v1380 = vpop.f32.mrf.mxu0
    %v1381 = vpop.f32.mrf.mxu0
    %1382 = vdwg.mxu0
    %v1383 = vmax.f32 %v1378, 0.0
    %v1384 = vpack.c.bf16 %v1383, %v1383
    %s1385 = scalar_lea.vmem %s3, 512
    %v1386 = vld [vmem:[%s1385] sm:$0xff]
    %v1387 = vld [vmem:[%s1385 + $0x8] sm:$0xff]
    %v1388 = vld [vmem:[%s1385 + $0x10] sm:$0xff]
    %v1389 = vld [vmem:[%s1385 + $0x18] sm:$0xff]
    %v1390 = vld [vmem:[%s1385 + $0x20] sm:$0xff]
    %v1391 = vld [vmem:[%s1385 + $0x28] sm:$0xff]
    %v1392 = vld [vmem:[%s1385 + $0x30] sm:$0xff]
    %v1393 = vld [vmem:[%s1385 + $0x38] sm:$0xff]
    %v1394 = vld [vmem:[%s1385 + $0x40] sm:$0xff]
    %v1395 = vld [vmem:[%s1385 + $0x48] sm:$0xff]
    %v1396 = vld [vmem:[%s1385 + $0x50] sm:$0xff]
    %v1397 = vld [vmem:[%s1385 + $0x58] sm:$0xff]
    %v1398 = vld [vmem:[%s1385 + $0x60] sm:$0xff]
    %v1399 = vld [vmem:[%s1385 + $0x68] sm:$0xff]
    %v1400 = vld [vmem:[%s1385 + $0x70] sm:$0xff]
    %v1401 = vld [vmem:[%s1385 + $0x78] sm:$0xff]
    %v1402 = vld [vmem:[%s1385 + $0x80] sm:$0xff]
    %v1403 = vld [vmem:[%s1385 + $0x88] sm:$0xff]
    %v1404 = vld [vmem:[%s1385 + $0x90] sm:$0xff]
    %v1405 = vld [vmem:[%s1385 + $0x98] sm:$0xff]
    %v1406 = vld [vmem:[%s1385 + $0xa0] sm:$0xff]
    %v1407 = vld [vmem:[%s1385 + $0xa8] sm:$0xff]
    %v1408 = vld [vmem:[%s1385 + $0xb0] sm:$0xff]
    %v1409 = vld [vmem:[%s1385 + $0xb8] sm:$0xff]
    %v1410 = vld [vmem:[%s1385 + $0xc0] sm:$0xff]
    %v1411 = vld [vmem:[%s1385 + $0xc8] sm:$0xff]
    %v1412 = vld [vmem:[%s1385 + $0xd0] sm:$0xff]
    %v1413 = vld [vmem:[%s1385 + $0xd8] sm:$0xff]
    %v1414 = vld [vmem:[%s1385 + $0xe0] sm:$0xff]
    %v1415 = vld [vmem:[%s1385 + $0xe8] sm:$0xff]
    %v1416 = vld [vmem:[%s1385 + $0xf0] sm:$0xff]
    %v1417 = vld [vmem:[%s1385 + $0xf8] sm:$0xff]
    %v1450 = vunpack.c.l.b16 %v1386
    %v1451 = vunpack.c.h.b16 %v1386
    %v1452 = vunpack.c.l.b16 %v1387
    %v1453 = vunpack.c.h.b16 %v1387
    %v1454 = vunpack.c.l.b16 %v1388
    %v1455 = vunpack.c.h.b16 %v1388
    %v1456 = vunpack.c.l.b16 %v1389
    %v1457 = vunpack.c.h.b16 %v1389
    %v1458 = vunpack.c.l.b16 %v1390
    %v1459 = vunpack.c.h.b16 %v1390
    %v1460 = vunpack.c.l.b16 %v1391
    %v1461 = vunpack.c.h.b16 %v1391
    %v1462 = vunpack.c.l.b16 %v1392
    %v1463 = vunpack.c.h.b16 %v1392
    %v1464 = vunpack.c.l.b16 %v1393
    %v1465 = vunpack.c.h.b16 %v1393
    %v1466 = vunpack.c.l.b16 %v1394
    %v1467 = vunpack.c.h.b16 %v1394
    %v1468 = vunpack.c.l.b16 %v1395
    %v1469 = vunpack.c.h.b16 %v1395
    %v1470 = vunpack.c.l.b16 %v1396
    %v1471 = vunpack.c.h.b16 %v1396
    %v1472 = vunpack.c.l.b16 %v1397
    %v1473 = vunpack.c.h.b16 %v1397
    %v1474 = vunpack.c.l.b16 %v1398
    %v1475 = vunpack.c.h.b16 %v1398
    %v1476 = vunpack.c.l.b16 %v1399
    %v1477 = vunpack.c.h.b16 %v1399
    %v1478 = vunpack.c.l.b16 %v1400
    %v1479 = vunpack.c.h.b16 %v1400
    %v1480 = vunpack.c.l.b16 %v1401
    %v1481 = vunpack.c.h.b16 %v1401
    %v1482 = vunpack.c.l.b16 %v1402
    %v1483 = vunpack.c.h.b16 %v1402
    %v1484 = vunpack.c.l.b16 %v1403
    %v1485 = vunpack.c.h.b16 %v1403
    %v1486 = vunpack.c.l.b16 %v1404
    %v1487 = vunpack.c.h.b16 %v1404
    %v1488 = vunpack.c.l.b16 %v1405
    %v1489 = vunpack.c.h.b16 %v1405
    %v1490 = vunpack.c.l.b16 %v1406
    %v1491 = vunpack.c.h.b16 %v1406
    %v1492 = vunpack.c.l.b16 %v1407
    %v1493 = vunpack.c.h.b16 %v1407
    %v1494 = vunpack.c.l.b16 %v1408
    %v1495 = vunpack.c.h.b16 %v1408
    %v1496 = vunpack.c.l.b16 %v1409
    %v1497 = vunpack.c.h.b16 %v1409
    %v1498 = vunpack.c.l.b16 %v1410
    %v1499 = vunpack.c.h.b16 %v1410
    %v1500 = vunpack.c.l.b16 %v1411
    %v1501 = vunpack.c.h.b16 %v1411
    %v1502 = vunpack.c.l.b16 %v1412
    %v1503 = vunpack.c.h.b16 %v1412
    %v1504 = vunpack.c.l.b16 %v1413
    %v1505 = vunpack.c.h.b16 %v1413
    %v1506 = vunpack.c.l.b16 %v1414
    %v1507 = vunpack.c.h.b16 %v1414
    %v1508 = vunpack.c.l.b16 %v1415
    %v1509 = vunpack.c.h.b16 %v1415
    %v1510 = vunpack.c.l.b16 %v1416
    %v1511 = vunpack.c.h.b16 %v1416
    %v1512 = vunpack.c.l.b16 %v1417
    %v1513 = vunpack.c.h.b16 %v1417
    %v1514 = vpack.c.b16 %v1454, %v1450
    %v1515 = vpack.c.b16 %v1455, %v1451
    %v1516 = vpack.c.b16 %v1456, %v1452
    %v1517 = vpack.c.b16 %v1457, %v1453
    %v1518 = vpack.c.b16 %v1462, %v1458
    %v1519 = vpack.c.b16 %v1463, %v1459
    %v1520 = vpack.c.b16 %v1464, %v1460
    %v1521 = vpack.c.b16 %v1465, %v1461
    %v1522 = vpack.c.b16 %v1470, %v1466
    %v1523 = vpack.c.b16 %v1471, %v1467
    %v1524 = vpack.c.b16 %v1472, %v1468
    %v1525 = vpack.c.b16 %v1473, %v1469
    %v1526 = vpack.c.b16 %v1478, %v1474
    %v1527 = vpack.c.b16 %v1479, %v1475
    %v1528 = vpack.c.b16 %v1480, %v1476
    %v1529 = vpack.c.b16 %v1481, %v1477
    %v1530 = vpack.c.b16 %v1486, %v1482
    %v1531 = vpack.c.b16 %v1487, %v1483
    %v1532 = vpack.c.b16 %v1488, %v1484
    %v1533 = vpack.c.b16 %v1489, %v1485
    %v1534 = vpack.c.b16 %v1494, %v1490
    %v1535 = vpack.c.b16 %v1495, %v1491
    %v1536 = vpack.c.b16 %v1496, %v1492
    %v1537 = vpack.c.b16 %v1497, %v1493
    %v1538 = vpack.c.b16 %v1502, %v1498
    %v1539 = vpack.c.b16 %v1503, %v1499
    %v1540 = vpack.c.b16 %v1504, %v1500
    %v1541 = vpack.c.b16 %v1505, %v1501
    %v1542 = vpack.c.b16 %v1510, %v1506
    %v1543 = vpack.c.b16 %v1511, %v1507
    %v1544 = vpack.c.b16 %v1512, %v1508
    %v1545 = vpack.c.b16 %v1513, %v1509
    %1578 = vmatprep.subr.bf16.mxu0 %v1543
    %1579 = vmatpush1.bf16.msra.mxu0 %v1542
    %1580 = vmatprep.subr.bf16.mxu0 %v1539
    %1581 = vmatpush1.bf16.msra.mxu0 %v1538
    %1582 = vmatprep.subr.bf16.mxu0 %v1535
    %1583 = vmatpush1.bf16.msra.mxu0 %v1534
    %1584 = vmatprep.subr.bf16.mxu0 %v1531
    %1585 = vmatpush1.bf16.msra.mxu0 %v1530
    %1586 = vmatprep.subr.bf16.mxu0 %v1527
    %1587 = vmatpush1.bf16.msra.mxu0 %v1526
    %1588 = vmatprep.subr.bf16.mxu0 %v1523
    %1589 = vmatpush1.bf16.msra.mxu0 %v1522
    %1590 = vmatprep.subr.bf16.mxu0 %v1519
    %1591 = vmatpush1.bf16.msra.mxu0 %v1518
    %1592 = vmatprep.subr.bf16.mxu0 %v1515
    %1593 = vmatpush1.bf16.msra.mxu0 %v1514
    %1594 = vmatprep.subr.bf16.mxu0 0
    %1595 = vmatpush2.bf16.msra.mxu0 0
    %1596 = vmatprep.subr.bf16.mxu0 0
    %1597 = vmatpush2.bf16.msra.mxu0 0
    %1598 = vmatprep.subr.bf16.mxu0 0
    %1599 = vmatpush2.bf16.msra.mxu0 0
    %1600 = vmatprep.subr.bf16.mxu0 0
    %1601 = vmatpush2.bf16.msra.mxu0 0
    %1602 = vmatprep.subr.bf16.mxu0 0
    %1603 = vmatpush2.bf16.msra.mxu0 0
    %1604 = vmatprep.subr.bf16.mxu0 0
    %1605 = vmatpush2.bf16.msra.mxu0 0
    %1606 = vmatprep.subr.bf16.mxu0 0
    %1607 = vmatpush2.bf16.msra.mxu0 0
    %1608 = vmatprep.subr.bf16.mxu0 0
    %1609 = vmatpush2.bf16.msra.mxu0 0
    %1610 = vmatprep.mubr.bf16.mxu0 0
    %1611 = vmatmul.mubr.bf16.gmra.mxu0 %v1384
    %v1612 = vpop.f32.mrf.mxu0
    %v1613 = vadd.f32 0.0, %v1612
    %v1614 = vpop.f32.mrf.mxu0
    %v1615 = vadd.f32 0.0, %v1614
    %v1616 = vpop.f32.mrf.mxu0
    %v1617 = vpop.f32.mrf.mxu0
    %1618 = vdwg.mxu0
    %1619 = vmatprep.subr.bf16.mxu0 %v1545
    %1620 = vmatpush1.bf16.msra.mxu0 %v1544
    %1621 = vmatprep.subr.bf16.mxu0 %v1541
    %1622 = vmatpush1.bf16.msra.mxu0 %v1540
    %1623 = vmatprep.subr.bf16.mxu0 %v1537
    %1624 = vmatpush1.bf16.msra.mxu0 %v1536
    %1625 = vmatprep.subr.bf16.mxu0 %v1533
    %1626 = vmatpush1.bf16.msra.mxu0 %v1532
    %1627 = vmatprep.subr.bf16.mxu0 %v1529
    %1628 = vmatpush1.bf16.msra.mxu0 %v1528
    %1629 = vmatprep.subr.bf16.mxu0 %v1525
    %1630 = vmatpush1.bf16.msra.mxu0 %v1524
    %1631 = vmatprep.subr.bf16.mxu0 %v1521
    %1632 = vmatpush1.bf16.msra.mxu0 %v1520
    %1633 = vmatprep.subr.bf16.mxu0 %v1517
    %1634 = vmatpush1.bf16.msra.mxu0 %v1516
    %1635 = vmatprep.subr.bf16.mxu0 0
    %1636 = vmatpush2.bf16.msra.mxu0 0
    %1637 = vmatprep.subr.bf16.mxu0 0
    %1638 = vmatpush2.bf16.msra.mxu0 0
    %1639 = vmatprep.subr.bf16.mxu0 0
    %1640 = vmatpush2.bf16.msra.mxu0 0
    %1641 = vmatprep.subr.bf16.mxu0 0
    %1642 = vmatpush2.bf16.msra.mxu0 0
    %1643 = vmatprep.subr.bf16.mxu0 0
    %1644 = vmatpush2.bf16.msra.mxu0 0
    %1645 = vmatprep.subr.bf16.mxu0 0
    %1646 = vmatpush2.bf16.msra.mxu0 0
    %1647 = vmatprep.subr.bf16.mxu0 0
    %1648 = vmatpush2.bf16.msra.mxu0 0
    %1649 = vmatprep.subr.bf16.mxu0 0
    %1650 = vmatpush2.bf16.msra.mxu0 0
    %1651 = vmatprep.mubr.bf16.mxu0 0
    %1652 = vmatmul.mubr.bf16.gmra.mxu0 %v1384
    %v1653 = vpop.f32.mrf.mxu0
    %v1654 = vadd.f32 0.0, %v1653
    %v1655 = vpop.f32.mrf.mxu0
    %v1656 = vadd.f32 0.0, %v1655
    %v1657 = vpop.f32.mrf.mxu0
    %v1658 = vpop.f32.mrf.mxu0
    %1659 = vdwg.mxu0
    %v1660 = vadd.f32 %v1167, %v1613
    %v1661 = vadd.f32 %v1169, %v1615
    %v1662 = vadd.f32 %v1208, %v1654
    %v1663 = vadd.f32 %v1210, %v1656
    %s1664 = scalar_lea.vmem %s0, 15
    %v1665 = vld [vmem:[%s1664] sm:$0x1f]
    %v1667 = vcombine.high %v1665, %v1665
    %v1669 = vunpack.c.l.s4 1966171168
    %v1670 = vunpack.c.0.s8 %v1669
    %v1671 = vlaneseq
    %v1672 = vshrl.u32 %v1671, 7
    %v1673 = vsub.s32 %v1670, %v1672
    %v1674 = vrot.slane %v1665, %v1673
    %v1676 = vunpack.c.l.s4 1966171168
    %v1677 = vunpack.c.0.s8 %v1676
    %v1678 = vlaneseq
    %v1679 = vshrl.u32 %v1678, 7
    %v1680 = vsub.s32 %v1677, %v1679
    %v1681 = vrot.slane %v1667, %v1680
    %v1682 = vcombine.high %v1674, %v1674
    %v1684 = vunpack.c.l.s4 1966171168
    %v1685 = vunpack.c.0.s8 %v1684
    %v1686 = vlaneseq
    %v1687 = vshrl.u32 %v1686, 7
    %v1688 = vsub.s32 %v1685, %v1687
    %v1689 = vrot.slane %v1674, %v1688
    %v1691 = vunpack.c.l.s4 1966171168
    %v1692 = vunpack.c.0.s8 %v1691
    %v1693 = vlaneseq
    %v1694 = vshrl.u32 %v1693, 7
    %v1695 = vsub.s32 %v1692, %v1694
    %v1696 = vrot.slane %v1681, %v1695
    %v1698 = vunpack.c.l.s4 1966171168
    %v1699 = vunpack.c.0.s8 %v1698
    %v1700 = vlaneseq
    %v1701 = vshrl.u32 %v1700, 7
    %v1702 = vsub.s32 %v1699, %v1701
    %v1703 = vrot.slane %v1682, %v1702
    %v1704 = vcombine.high %v1689, %v1689
    %v1705 = vcombine.high %v1703, %v1703
    %v1711 = vsel %vm368, %v1696, 0
    %1713 = vmatprep.subr.bf16.mxu0 0
    %1714 = vmatpush1.bf16.msra.mxu0 %v303
    %1715 = vmatprep.subr.bf16.mxu0 0
    %1716 = vmatpush1.bf16.msra.mxu0 %v302
    %1717 = vmatprep.subr.bf16.mxu0 0
    %1718 = vmatpush1.bf16.msra.mxu0 %v301
    %1719 = vmatprep.subr.bf16.mxu0 0
    %1720 = vmatpush1.bf16.msra.mxu0 %v300
    %1721 = vmatprep.subr.bf16.mxu0 0
    %1722 = vmatpush1.bf16.msra.mxu0 %v299
    %1723 = vmatprep.subr.bf16.mxu0 0
    %1724 = vmatpush1.bf16.msra.mxu0 %v298
    %1725 = vmatprep.subr.bf16.mxu0 0
    %1726 = vmatpush1.bf16.msra.mxu0 %v297
    %1727 = vmatprep.subr.bf16.mxu0 0
    %1728 = vmatpush1.bf16.msra.mxu0 %v296
    %1729 = vmatprep.subr.bf16.mxu0 0
    %1730 = vmatpush2.bf16.msra.mxu0 %v311
    %1731 = vmatprep.subr.bf16.mxu0 0
    %1732 = vmatpush2.bf16.msra.mxu0 %v310
    %1733 = vmatprep.subr.bf16.mxu0 0
    %1734 = vmatpush2.bf16.msra.mxu0 %v309
    %1735 = vmatprep.subr.bf16.mxu0 0
    %1736 = vmatpush2.bf16.msra.mxu0 %v308
    %1737 = vmatprep.subr.bf16.mxu0 0
    %1738 = vmatpush2.bf16.msra.mxu0 %v307
    %1739 = vmatprep.subr.bf16.mxu0 0
    %1740 = vmatpush2.bf16.msra.mxu0 %v306
    %1741 = vmatprep.subr.bf16.mxu0 0
    %1742 = vmatpush2.bf16.msra.mxu0 %v305
    %1743 = vmatprep.subr.bf16.mxu0 0
    %1744 = vmatpush2.bf16.msra.mxu0 %v304
    %1745 = vmatprep.mubr.bf16.mxu0 %v1703
    %1746 = vmatmul.mubr.bf16.gmra.mxu0 %v1689
    %v1747 = vpop.f32.mrf.mxu0
    %v1748 = vadd.f32 %v106, %v1747
    %v1749 = vpop.f32.mrf.mxu0
    %v1750 = vpop.f32.mrf.mxu0
    %v1751 = vpop.f32.mrf.mxu0
    %1752 = vdwg.mxu0
    %1753 = vmatprep.subr.bf16.mxu0 0
    %1754 = vmatpush1.bf16.msra.mxu0 %v319
    %1755 = vmatprep.subr.bf16.mxu0 0
    %1756 = vmatpush1.bf16.msra.mxu0 %v318
    %1757 = vmatprep.subr.bf16.mxu0 0
    %1758 = vmatpush1.bf16.msra.mxu0 %v317
    %1759 = vmatprep.subr.bf16.mxu0 0
    %1760 = vmatpush1.bf16.msra.mxu0 %v316
    %1761 = vmatprep.subr.bf16.mxu0 0
    %1762 = vmatpush1.bf16.msra.mxu0 %v315
    %1763 = vmatprep.subr.bf16.mxu0 0
    %1764 = vmatpush1.bf16.msra.mxu0 %v314
    %1765 = vmatprep.subr.bf16.mxu0 0
    %1766 = vmatpush1.bf16.msra.mxu0 %v313
    %1767 = vmatprep.subr.bf16.mxu0 0
    %1768 = vmatpush1.bf16.msra.mxu0 %v312
    %1769 = vmatprep.subr.bf16.mxu0 0
    %1770 = vmatpush2.bf16.msra.mxu0 %v327
    %1771 = vmatprep.subr.bf16.mxu0 0
    %1772 = vmatpush2.bf16.msra.mxu0 %v326
    %1773 = vmatprep.subr.bf16.mxu0 0
    %1774 = vmatpush2.bf16.msra.mxu0 %v325
    %1775 = vmatprep.subr.bf16.mxu0 0
    %1776 = vmatpush2.bf16.msra.mxu0 %v324
    %1777 = vmatprep.subr.bf16.mxu0 0
    %1778 = vmatpush2.bf16.msra.mxu0 %v323
    %1779 = vmatprep.subr.bf16.mxu0 0
    %1780 = vmatpush2.bf16.msra.mxu0 %v322
    %1781 = vmatprep.subr.bf16.mxu0 0
    %1782 = vmatpush2.bf16.msra.mxu0 %v321
    %1783 = vmatprep.subr.bf16.mxu0 0
    %1784 = vmatpush2.bf16.msra.mxu0 %v320
    %1785 = vmatprep.mubr.bf16.mxu0 %v1705
    %1786 = vmatmul.mubr.bf16.gmra.mxu0 %v1704
    %v1787 = vpop.f32.mrf.mxu0
    %v1788 = vadd.f32 %v1748, %v1787
    %v1789 = vpop.f32.mrf.mxu0
    %v1790 = vpop.f32.mrf.mxu0
    %v1791 = vpop.f32.mrf.mxu0
    %1792 = vdwg.mxu0
    %1793 = vmatprep.subr.bf16.mxu0 0
    %1794 = vmatpush1.bf16.msra.mxu0 0
    %1795 = vmatprep.subr.bf16.mxu0 0
    %1796 = vmatpush1.bf16.msra.mxu0 0
    %1797 = vmatprep.subr.bf16.mxu0 0
    %1798 = vmatpush1.bf16.msra.mxu0 0
    %1799 = vmatprep.subr.bf16.mxu0 0
    %1800 = vmatpush1.bf16.msra.mxu0 0
    %1801 = vmatprep.subr.bf16.mxu0 0
    %1802 = vmatpush1.bf16.msra.mxu0 %v331
    %1803 = vmatprep.subr.bf16.mxu0 0
    %1804 = vmatpush1.bf16.msra.mxu0 %v330
    %1805 = vmatprep.subr.bf16.mxu0 0
    %1806 = vmatpush1.bf16.msra.mxu0 %v329
    %1807 = vmatprep.subr.bf16.mxu0 0
    %1808 = vmatpush1.bf16.msra.mxu0 %v328
    %1809 = vmatprep.subr.bf16.mxu0 0
    %1810 = vmatpush2.bf16.msra.mxu0 0
    %1811 = vmatprep.subr.bf16.mxu0 0
    %1812 = vmatpush2.bf16.msra.mxu0 0
    %1813 = vmatprep.subr.bf16.mxu0 0
    %1814 = vmatpush2.bf16.msra.mxu0 0
    %1815 = vmatprep.subr.bf16.mxu0 0
    %1816 = vmatpush2.bf16.msra.mxu0 0
    %1817 = vmatprep.subr.bf16.mxu0 0
    %1818 = vmatpush2.bf16.msra.mxu0 0
    %1819 = vmatprep.subr.bf16.mxu0 0
    %1820 = vmatpush2.bf16.msra.mxu0 0
    %1821 = vmatprep.subr.bf16.mxu0 0
    %1822 = vmatpush2.bf16.msra.mxu0 0
    %1823 = vmatprep.subr.bf16.mxu0 0
    %1824 = vmatpush2.bf16.msra.mxu0 0
    %1825 = vmatprep.mubr.bf16.mxu0 0
    %1826 = vmatmul.mubr.bf16.gmra.mxu0 %v1711
    %v1827 = vpop.f32.mrf.mxu0
    %v1828 = vadd.f32 %v1788, %v1827
    %v1829 = vpop.f32.mrf.mxu0
    %v1830 = vpop.f32.mrf.mxu0
    %v1831 = vpop.f32.mrf.mxu0
    %1832 = vdwg.mxu0
    %v1833 = vmax.f32 %v1828, 0.0
    %v1834 = vpack.c.bf16 %v1833, %v1833
    %s1835 = scalar_lea.vmem %s3, 768
    %v1836 = vld [vmem:[%s1835] sm:$0xff]
    %v1837 = vld [vmem:[%s1835 + $0x8] sm:$0xff]
    %v1838 = vld [vmem:[%s1835 + $0x10] sm:$0xff]
    %v1839 = vld [vmem:[%s1835 + $0x18] sm:$0xff]
    %v1840 = vld [vmem:[%s1835 + $0x20] sm:$0xff]
    %v1841 = vld [vmem:[%s1835 + $0x28] sm:$0xff]
    %v1842 = vld [vmem:[%s1835 + $0x30] sm:$0xff]
    %v1843 = vld [vmem:[%s1835 + $0x38] sm:$0xff]
    %v1844 = vld [vmem:[%s1835 + $0x40] sm:$0xff]
    %v1845 = vld [vmem:[%s1835 + $0x48] sm:$0xff]
    %v1846 = vld [vmem:[%s1835 + $0x50] sm:$0xff]
    %v1847 = vld [vmem:[%s1835 + $0x58] sm:$0xff]
    %v1848 = vld [vmem:[%s1835 + $0x60] sm:$0xff]
    %v1849 = vld [vmem:[%s1835 + $0x68] sm:$0xff]
    %v1850 = vld [vmem:[%s1835 + $0x70] sm:$0xff]
    %v1851 = vld [vmem:[%s1835 + $0x78] sm:$0xff]
    %v1852 = vld [vmem:[%s1835 + $0x80] sm:$0xff]
    %v1853 = vld [vmem:[%s1835 + $0x88] sm:$0xff]
    %v1854 = vld [vmem:[%s1835 + $0x90] sm:$0xff]
    %v1855 = vld [vmem:[%s1835 + $0x98] sm:$0xff]
    %v1856 = vld [vmem:[%s1835 + $0xa0] sm:$0xff]
    %v1857 = vld [vmem:[%s1835 + $0xa8] sm:$0xff]
    %v1858 = vld [vmem:[%s1835 + $0xb0] sm:$0xff]
    %v1859 = vld [vmem:[%s1835 + $0xb8] sm:$0xff]
    %v1860 = vld [vmem:[%s1835 + $0xc0] sm:$0xff]
    %v1861 = vld [vmem:[%s1835 + $0xc8] sm:$0xff]
    %v1862 = vld [vmem:[%s1835 + $0xd0] sm:$0xff]
    %v1863 = vld [vmem:[%s1835 + $0xd8] sm:$0xff]
    %v1864 = vld [vmem:[%s1835 + $0xe0] sm:$0xff]
    %v1865 = vld [vmem:[%s1835 + $0xe8] sm:$0xff]
    %v1866 = vld [vmem:[%s1835 + $0xf0] sm:$0xff]
    %v1867 = vld [vmem:[%s1835 + $0xf8] sm:$0xff]
    %v1900 = vunpack.c.l.b16 %v1836
    %v1901 = vunpack.c.h.b16 %v1836
    %v1902 = vunpack.c.l.b16 %v1837
    %v1903 = vunpack.c.h.b16 %v1837
    %v1904 = vunpack.c.l.b16 %v1838
    %v1905 = vunpack.c.h.b16 %v1838
    %v1906 = vunpack.c.l.b16 %v1839
    %v1907 = vunpack.c.h.b16 %v1839
    %v1908 = vunpack.c.l.b16 %v1840
    %v1909 = vunpack.c.h.b16 %v1840
    %v1910 = vunpack.c.l.b16 %v1841
    %v1911 = vunpack.c.h.b16 %v1841
    %v1912 = vunpack.c.l.b16 %v1842
    %v1913 = vunpack.c.h.b16 %v1842
    %v1914 = vunpack.c.l.b16 %v1843
    %v1915 = vunpack.c.h.b16 %v1843
    %v1916 = vunpack.c.l.b16 %v1844
    %v1917 = vunpack.c.h.b16 %v1844
    %v1918 = vunpack.c.l.b16 %v1845
    %v1919 = vunpack.c.h.b16 %v1845
    %v1920 = vunpack.c.l.b16 %v1846
    %v1921 = vunpack.c.h.b16 %v1846
    %v1922 = vunpack.c.l.b16 %v1847
    %v1923 = vunpack.c.h.b16 %v1847
    %v1924 = vunpack.c.l.b16 %v1848
    %v1925 = vunpack.c.h.b16 %v1848
    %v1926 = vunpack.c.l.b16 %v1849
    %v1927 = vunpack.c.h.b16 %v1849
    %v1928 = vunpack.c.l.b16 %v1850
    %v1929 = vunpack.c.h.b16 %v1850
    %v1930 = vunpack.c.l.b16 %v1851
    %v1931 = vunpack.c.h.b16 %v1851
    %v1932 = vunpack.c.l.b16 %v1852
    %v1933 = vunpack.c.h.b16 %v1852
    %v1934 = vunpack.c.l.b16 %v1853
    %v1935 = vunpack.c.h.b16 %v1853
    %v1936 = vunpack.c.l.b16 %v1854
    %v1937 = vunpack.c.h.b16 %v1854
    %v1938 = vunpack.c.l.b16 %v1855
    %v1939 = vunpack.c.h.b16 %v1855
    %v1940 = vunpack.c.l.b16 %v1856
    %v1941 = vunpack.c.h.b16 %v1856
    %v1942 = vunpack.c.l.b16 %v1857
    %v1943 = vunpack.c.h.b16 %v1857
    %v1944 = vunpack.c.l.b16 %v1858
    %v1945 = vunpack.c.h.b16 %v1858
    %v1946 = vunpack.c.l.b16 %v1859
    %v1947 = vunpack.c.h.b16 %v1859
    %v1948 = vunpack.c.l.b16 %v1860
    %v1949 = vunpack.c.h.b16 %v1860
    %v1950 = vunpack.c.l.b16 %v1861
    %v1951 = vunpack.c.h.b16 %v1861
    %v1952 = vunpack.c.l.b16 %v1862
    %v1953 = vunpack.c.h.b16 %v1862
    %v1954 = vunpack.c.l.b16 %v1863
    %v1955 = vunpack.c.h.b16 %v1863
    %v1956 = vunpack.c.l.b16 %v1864
    %v1957 = vunpack.c.h.b16 %v1864
    %v1958 = vunpack.c.l.b16 %v1865
    %v1959 = vunpack.c.h.b16 %v1865
    %v1960 = vunpack.c.l.b16 %v1866
    %v1961 = vunpack.c.h.b16 %v1866
    %v1962 = vunpack.c.l.b16 %v1867
    %v1963 = vunpack.c.h.b16 %v1867
    %v1964 = vpack.c.b16 %v1904, %v1900
    %v1965 = vpack.c.b16 %v1905, %v1901
    %v1966 = vpack.c.b16 %v1906, %v1902
    %v1967 = vpack.c.b16 %v1907, %v1903
    %v1968 = vpack.c.b16 %v1912, %v1908
    %v1969 = vpack.c.b16 %v1913, %v1909
    %v1970 = vpack.c.b16 %v1914, %v1910
    %v1971 = vpack.c.b16 %v1915, %v1911
    %v1972 = vpack.c.b16 %v1920, %v1916
    %v1973 = vpack.c.b16 %v1921, %v1917
    %v1974 = vpack.c.b16 %v1922, %v1918
    %v1975 = vpack.c.b16 %v1923, %v1919
    %v1976 = vpack.c.b16 %v1928, %v1924
    %v1977 = vpack.c.b16 %v1929, %v1925
    %v1978 = vpack.c.b16 %v1930, %v1926
    %v1979 = vpack.c.b16 %v1931, %v1927
    %v1980 = vpack.c.b16 %v1936, %v1932
    %v1981 = vpack.c.b16 %v1937, %v1933
    %v1982 = vpack.c.b16 %v1938, %v1934
    %v1983 = vpack.c.b16 %v1939, %v1935
    %v1984 = vpack.c.b16 %v1944, %v1940
    %v1985 = vpack.c.b16 %v1945, %v1941
    %v1986 = vpack.c.b16 %v1946, %v1942
    %v1987 = vpack.c.b16 %v1947, %v1943
    %v1988 = vpack.c.b16 %v1952, %v1948
    %v1989 = vpack.c.b16 %v1953, %v1949
    %v1990 = vpack.c.b16 %v1954, %v1950
    %v1991 = vpack.c.b16 %v1955, %v1951
    %v1992 = vpack.c.b16 %v1960, %v1956
    %v1993 = vpack.c.b16 %v1961, %v1957
    %v1994 = vpack.c.b16 %v1962, %v1958
    %v1995 = vpack.c.b16 %v1963, %v1959
    %2028 = vmatprep.subr.bf16.mxu0 %v1993
    %2029 = vmatpush1.bf16.msra.mxu0 %v1992
    %2030 = vmatprep.subr.bf16.mxu0 %v1989
    %2031 = vmatpush1.bf16.msra.mxu0 %v1988
    %2032 = vmatprep.subr.bf16.mxu0 %v1985
    %2033 = vmatpush1.bf16.msra.mxu0 %v1984
    %2034 = vmatprep.subr.bf16.mxu0 %v1981
    %2035 = vmatpush1.bf16.msra.mxu0 %v1980
    %2036 = vmatprep.subr.bf16.mxu0 %v1977
    %2037 = vmatpush1.bf16.msra.mxu0 %v1976
    %2038 = vmatprep.subr.bf16.mxu0 %v1973
    %2039 = vmatpush1.bf16.msra.mxu0 %v1972
    %2040 = vmatprep.subr.bf16.mxu0 %v1969
    %2041 = vmatpush1.bf16.msra.mxu0 %v1968
    %2042 = vmatprep.subr.bf16.mxu0 %v1965
    %2043 = vmatpush1.bf16.msra.mxu0 %v1964
    %2044 = vmatprep.subr.bf16.mxu0 0
    %2045 = vmatpush2.bf16.msra.mxu0 0
    %2046 = vmatprep.subr.bf16.mxu0 0
    %2047 = vmatpush2.bf16.msra.mxu0 0
    %2048 = vmatprep.subr.bf16.mxu0 0
    %2049 = vmatpush2.bf16.msra.mxu0 0
    %2050 = vmatprep.subr.bf16.mxu0 0
    %2051 = vmatpush2.bf16.msra.mxu0 0
    %2052 = vmatprep.subr.bf16.mxu0 0
    %2053 = vmatpush2.bf16.msra.mxu0 0
    %2054 = vmatprep.subr.bf16.mxu0 0
    %2055 = vmatpush2.bf16.msra.mxu0 0
    %2056 = vmatprep.subr.bf16.mxu0 0
    %2057 = vmatpush2.bf16.msra.mxu0 0
    %2058 = vmatprep.subr.bf16.mxu0 0
    %2059 = vmatpush2.bf16.msra.mxu0 0
    %2060 = vmatprep.mubr.bf16.mxu0 0
    %2061 = vmatmul.mubr.bf16.gmra.mxu0 %v1834
    %v2062 = vpop.f32.mrf.mxu0
    %v2063 = vadd.f32 0.0, %v2062
    %v2064 = vpop.f32.mrf.mxu0
    %v2065 = vadd.f32 0.0, %v2064
    %v2066 = vpop.f32.mrf.mxu0
    %v2067 = vpop.f32.mrf.mxu0
    %2068 = vdwg.mxu0
    %2069 = vmatprep.subr.bf16.mxu0 %v1995
    %2070 = vmatpush1.bf16.msra.mxu0 %v1994
    %2071 = vmatprep.subr.bf16.mxu0 %v1991
    %2072 = vmatpush1.bf16.msra.mxu0 %v1990
    %2073 = vmatprep.subr.bf16.mxu0 %v1987
    %2074 = vmatpush1.bf16.msra.mxu0 %v1986
    %2075 = vmatprep.subr.bf16.mxu0 %v1983
    %2076 = vmatpush1.bf16.msra.mxu0 %v1982
    %2077 = vmatprep.subr.bf16.mxu0 %v1979
    %2078 = vmatpush1.bf16.msra.mxu0 %v1978
    %2079 = vmatprep.subr.bf16.mxu0 %v1975
    %2080 = vmatpush1.bf16.msra.mxu0 %v1974
    %2081 = vmatprep.subr.bf16.mxu0 %v1971
    %2082 = vmatpush1.bf16.msra.mxu0 %v1970
    %2083 = vmatprep.subr.bf16.mxu0 %v1967
    %2084 = vmatpush1.bf16.msra.mxu0 %v1966
    %2085 = vmatprep.subr.bf16.mxu0 0
    %2086 = vmatpush2.bf16.msra.mxu0 0
    %2087 = vmatprep.subr.bf16.mxu0 0
    %2088 = vmatpush2.bf16.msra.mxu0 0
    %2089 = vmatprep.subr.bf16.mxu0 0
    %2090 = vmatpush2.bf16.msra.mxu0 0
    %2091 = vmatprep.subr.bf16.mxu0 0
    %2092 = vmatpush2.bf16.msra.mxu0 0
    %2093 = vmatprep.subr.bf16.mxu0 0
    %2094 = vmatpush2.bf16.msra.mxu0 0
    %2095 = vmatprep.subr.bf16.mxu0 0
    %2096 = vmatpush2.bf16.msra.mxu0 0
    %2097 = vmatprep.subr.bf16.mxu0 0
    %2098 = vmatpush2.bf16.msra.mxu0 0
    %2099 = vmatprep.subr.bf16.mxu0 0
    %2100 = vmatpush2.bf16.msra.mxu0 0
    %2101 = vmatprep.mubr.bf16.mxu0 0
    %2102 = vmatmul.mubr.bf16.gmra.mxu0 %v1834
    %v2103 = vpop.f32.mrf.mxu0
    %v2104 = vadd.f32 0.0, %v2103
    %v2105 = vpop.f32.mrf.mxu0
    %v2106 = vadd.f32 0.0, %v2105
    %v2107 = vpop.f32.mrf.mxu0
    %v2108 = vpop.f32.mrf.mxu0
    %2109 = vdwg.mxu0
    %v2110 = vadd.f32 %v1660, %v2063
    %v2111 = vadd.f32 %v1661, %v2065
    %v2112 = vadd.f32 %v1662, %v2104
    %v2113 = vadd.f32 %v1663, %v2106
    %v2114 = vld [vmem:[%s4] sm:$0xf]
    %v2116 = vlaneseq
    %v2117 = vshrl.u32 %v2116, 7
    %v2118 = vsub.s32 0, %v2117
    %v2119 = vrot.slane %v2114, %v2118
    %v2120 = vlaneseq
    %v2121 = vshrl.u32 %v2120, 7
    %v2122 = vsub.s32 1, %v2121
    %v2123 = vrot.slane %v2114, %v2122
    %v2124 = vlaneseq
    %v2125 = vshrl.u32 %v2124, 7
    %v2126 = vsub.s32 2, %v2125
    %v2127 = vrot.slane %v2114, %v2126
    %v2128 = vlaneseq
    %v2129 = vshrl.u32 %v2128, 7
    %v2130 = vsub.s32 3, %v2129
    %v2131 = vrot.slane %v2114, %v2130
    %v2136 = vadd.f32 %v2110, %v2119
    %v2137 = vadd.f32 %v2111, %v2123
    %v2138 = vadd.f32 %v2112, %v2127
    %v2139 = vadd.f32 %v2113, %v2131
    %v2140 = vmax.f32 %v2136, 0.0
    %v2141 = vmax.f32 %v2137, 0.0
    %v2142 = vmax.f32 %v2138, 0.0
    %v2143 = vmax.f32 %v2139, 0.0
    %v2144 = vpack.c.bf16 %v2140, %v2140
    %v2145 = vpack.c.bf16 %v2141, %v2141
    %v2146 = vpack.c.bf16 %v2142, %v2142
    %v2147 = vpack.c.bf16 %v2143, %v2143
    %v2148 = vld [vmem:[%s5] sm:$0xf]
    %v2149 = vld [vmem:[%s5 + $0x4] sm:$0xf]
    %v2150 = vld [vmem:[%s5 + $0x8] sm:$0xf]
    %v2151 = vld [vmem:[%s5 + $0xc] sm:$0xf]
    %v2152 = vld [vmem:[%s5 + $0x10] sm:$0xf]
    %v2153 = vld [vmem:[%s5 + $0x14] sm:$0xf]
    %v2154 = vld [vmem:[%s5 + $0x18] sm:$0xf]
    %v2155 = vld [vmem:[%s5 + $0x1c] sm:$0xf]
    %v2156 = vld [vmem:[%s5 + $0x20] sm:$0xf]
    %v2157 = vld [vmem:[%s5 + $0x24] sm:$0xf]
    %v2158 = vld [vmem:[%s5 + $0x28] sm:$0xf]
    %v2159 = vld [vmem:[%s5 + $0x2c] sm:$0xf]
    %v2160 = vld [vmem:[%s5 + $0x30] sm:$0xf]
    %v2161 = vld [vmem:[%s5 + $0x34] sm:$0xf]
    %v2162 = vld [vmem:[%s5 + $0x38] sm:$0xf]
    %v2163 = vld [vmem:[%s5 + $0x3c] sm:$0xf]
    %v2164 = vld [vmem:[%s5 + $0x40] sm:$0xf]
    %v2165 = vld [vmem:[%s5 + $0x44] sm:$0xf]
    %v2166 = vld [vmem:[%s5 + $0x48] sm:$0xf]
    %v2167 = vld [vmem:[%s5 + $0x4c] sm:$0xf]
    %v2168 = vld [vmem:[%s5 + $0x50] sm:$0xf]
    %v2169 = vld [vmem:[%s5 + $0x54] sm:$0xf]
    %v2170 = vld [vmem:[%s5 + $0x58] sm:$0xf]
    %v2171 = vld [vmem:[%s5 + $0x5c] sm:$0xf]
    %v2172 = vld [vmem:[%s5 + $0x60] sm:$0xf]
    %v2173 = vld [vmem:[%s5 + $0x64] sm:$0xf]
    %v2174 = vld [vmem:[%s5 + $0x68] sm:$0xf]
    %v2175 = vld [vmem:[%s5 + $0x6c] sm:$0xf]
    %v2176 = vld [vmem:[%s5 + $0x70] sm:$0xf]
    %v2177 = vld [vmem:[%s5 + $0x74] sm:$0xf]
    %v2178 = vld [vmem:[%s5 + $0x78] sm:$0xf]
    %v2179 = vld [vmem:[%s5 + $0x7c] sm:$0xf]
    %v2180 = vld [vmem:[%s5 + $0x80] sm:$0xf]
    %v2181 = vld [vmem:[%s5 + $0x84] sm:$0xf]
    %v2182 = vld [vmem:[%s5 + $0x88] sm:$0xf]
    %v2183 = vld [vmem:[%s5 + $0x8c] sm:$0xf]
    %v2184 = vld [vmem:[%s5 + $0x90] sm:$0xf]
    %v2185 = vld [vmem:[%s5 + $0x94] sm:$0xf]
    %v2186 = vld [vmem:[%s5 + $0x98] sm:$0xf]
    %v2187 = vld [vmem:[%s5 + $0x9c] sm:$0xf]
    %v2188 = vld [vmem:[%s5 + $0xa0] sm:$0xf]
    %v2189 = vld [vmem:[%s5 + $0xa4] sm:$0xf]
    %v2190 = vld [vmem:[%s5 + $0xa8] sm:$0xf]
    %v2191 = vld [vmem:[%s5 + $0xac] sm:$0xf]
    %v2192 = vld [vmem:[%s5 + $0xb0] sm:$0xf]
    %v2193 = vld [vmem:[%s5 + $0xb4] sm:$0xf]
    %v2194 = vld [vmem:[%s5 + $0xb8] sm:$0xf]
    %v2195 = vld [vmem:[%s5 + $0xbc] sm:$0xf]
    %v2196 = vld [vmem:[%s5 + $0xc0] sm:$0xf]
    %v2197 = vld [vmem:[%s5 + $0xc4] sm:$0xf]
    %v2198 = vld [vmem:[%s5 + $0xc8] sm:$0xf]
    %v2199 = vld [vmem:[%s5 + $0xcc] sm:$0xf]
    %v2200 = vld [vmem:[%s5 + $0xd0] sm:$0xf]
    %v2201 = vld [vmem:[%s5 + $0xd4] sm:$0xf]
    %v2202 = vld [vmem:[%s5 + $0xd8] sm:$0xf]
    %v2203 = vld [vmem:[%s5 + $0xdc] sm:$0xf]
    %v2204 = vld [vmem:[%s5 + $0xe0] sm:$0xf]
    %v2205 = vld [vmem:[%s5 + $0xe4] sm:$0xf]
    %v2206 = vld [vmem:[%s5 + $0xe8] sm:$0xf]
    %v2207 = vld [vmem:[%s5 + $0xec] sm:$0xf]
    %v2208 = vld [vmem:[%s5 + $0xf0] sm:$0xf]
    %v2209 = vld [vmem:[%s5 + $0xf4] sm:$0xf]
    %v2210 = vld [vmem:[%s5 + $0xf8] sm:$0xf]
    %v2211 = vld [vmem:[%s5 + $0xfc] sm:$0xf]
    %v2212 = vld [vmem:[%s6] sm:$0x1]
    %v2214 = vlaneseq
    %v2215 = vshrl.u32 %v2214, 7
    %v2216 = vsub.s32 0, %v2215
    %v2217 = vrot.slane %v2212, %v2216
    %v2283 = vunpack.c.l.b16 %v2148
    %v2284 = vunpack.c.l.b16 %v2149
    %v2285 = vunpack.c.l.b16 %v2150
    %v2286 = vunpack.c.l.b16 %v2151
    %v2287 = vunpack.c.l.b16 %v2152
    %v2288 = vunpack.c.l.b16 %v2153
    %v2289 = vunpack.c.l.b16 %v2154
    %v2290 = vunpack.c.l.b16 %v2155
    %v2291 = vunpack.c.l.b16 %v2156
    %v2292 = vunpack.c.l.b16 %v2157
    %v2293 = vunpack.c.l.b16 %v2158
    %v2294 = vunpack.c.l.b16 %v2159
    %v2295 = vunpack.c.l.b16 %v2160
    %v2296 = vunpack.c.l.b16 %v2161
    %v2297 = vunpack.c.l.b16 %v2162
    %v2298 = vunpack.c.l.b16 %v2163
    %v2299 = vunpack.c.l.b16 %v2164
    %v2300 = vunpack.c.l.b16 %v2165
    %v2301 = vunpack.c.l.b16 %v2166
    %v2302 = vunpack.c.l.b16 %v2167
    %v2303 = vunpack.c.l.b16 %v2168
    %v2304 = vunpack.c.l.b16 %v2169
    %v2305 = vunpack.c.l.b16 %v2170
    %v2306 = vunpack.c.l.b16 %v2171
    %v2307 = vunpack.c.l.b16 %v2172
    %v2308 = vunpack.c.l.b16 %v2173
    %v2309 = vunpack.c.l.b16 %v2174
    %v2310 = vunpack.c.l.b16 %v2175
    %v2311 = vunpack.c.l.b16 %v2176
    %v2312 = vunpack.c.l.b16 %v2177
    %v2313 = vunpack.c.l.b16 %v2178
    %v2314 = vunpack.c.l.b16 %v2179
    %v2315 = vunpack.c.l.b16 %v2180
    %v2316 = vunpack.c.l.b16 %v2181
    %v2317 = vunpack.c.l.b16 %v2182
    %v2318 = vunpack.c.l.b16 %v2183
    %v2319 = vunpack.c.l.b16 %v2184
    %v2320 = vunpack.c.l.b16 %v2185
    %v2321 = vunpack.c.l.b16 %v2186
    %v2322 = vunpack.c.l.b16 %v2187
    %v2323 = vunpack.c.l.b16 %v2188
    %v2324 = vunpack.c.l.b16 %v2189
    %v2325 = vunpack.c.l.b16 %v2190
    %v2326 = vunpack.c.l.b16 %v2191
    %v2327 = vunpack.c.l.b16 %v2192
    %v2328 = vunpack.c.l.b16 %v2193
    %v2329 = vunpack.c.l.b16 %v2194
    %v2330 = vunpack.c.l.b16 %v2195
    %v2331 = vunpack.c.l.b16 %v2196
    %v2332 = vunpack.c.l.b16 %v2197
    %v2333 = vunpack.c.l.b16 %v2198
    %v2334 = vunpack.c.l.b16 %v2199
    %v2335 = vunpack.c.l.b16 %v2200
    %v2336 = vunpack.c.l.b16 %v2201
    %v2337 = vunpack.c.l.b16 %v2202
    %v2338 = vunpack.c.l.b16 %v2203
    %v2339 = vunpack.c.l.b16 %v2204
    %v2340 = vunpack.c.l.b16 %v2205
    %v2341 = vunpack.c.l.b16 %v2206
    %v2342 = vunpack.c.l.b16 %v2207
    %v2343 = vunpack.c.l.b16 %v2208
    %v2344 = vunpack.c.l.b16 %v2209
    %v2345 = vunpack.c.l.b16 %v2210
    %v2346 = vunpack.c.l.b16 %v2211
    %v2347 = vpack.c.b16 %v2284, %v2283
    %v2348 = vpack.c.b16 %v2286, %v2285
    %v2349 = vpack.c.b16 %v2288, %v2287
    %v2350 = vpack.c.b16 %v2290, %v2289
    %v2351 = vpack.c.b16 %v2292, %v2291
    %v2352 = vpack.c.b16 %v2294, %v2293
    %v2353 = vpack.c.b16 %v2296, %v2295
    %v2354 = vpack.c.b16 %v2298, %v2297
    %v2355 = vpack.c.b16 %v2300, %v2299
    %v2356 = vpack.c.b16 %v2302, %v2301
    %v2357 = vpack.c.b16 %v2304, %v2303
    %v2358 = vpack.c.b16 %v2306, %v2305
    %v2359 = vpack.c.b16 %v2308, %v2307
    %v2360 = vpack.c.b16 %v2310, %v2309
    %v2361 = vpack.c.b16 %v2312, %v2311
    %v2362 = vpack.c.b16 %v2314, %v2313
    %v2363 = vpack.c.b16 %v2316, %v2315
    %v2364 = vpack.c.b16 %v2318, %v2317
    %v2365 = vpack.c.b16 %v2320, %v2319
    %v2366 = vpack.c.b16 %v2322, %v2321
    %v2367 = vpack.c.b16 %v2324, %v2323
    %v2368 = vpack.c.b16 %v2326, %v2325
    %v2369 = vpack.c.b16 %v2328, %v2327
    %v2370 = vpack.c.b16 %v2330, %v2329
    %v2371 = vpack.c.b16 %v2332, %v2331
    %v2372 = vpack.c.b16 %v2334, %v2333
    %v2373 = vpack.c.b16 %v2336, %v2335
    %v2374 = vpack.c.b16 %v2338, %v2337
    %v2375 = vpack.c.b16 %v2340, %v2339
    %v2376 = vpack.c.b16 %v2342, %v2341
    %v2377 = vpack.c.b16 %v2344, %v2343
    %v2378 = vpack.c.b16 %v2346, %v2345
    %2411 = vmatprep.subr.bf16.mxu0 0
    %2412 = vmatpush1.bf16.msra.mxu0 %v2354
    %2413 = vmatprep.subr.bf16.mxu0 0
    %2414 = vmatpush1.bf16.msra.mxu0 %v2353
    %2415 = vmatprep.subr.bf16.mxu0 0
    %2416 = vmatpush1.bf16.msra.mxu0 %v2352
    %2417 = vmatprep.subr.bf16.mxu0 0
    %2418 = vmatpush1.bf16.msra.mxu0 %v2351
    %2419 = vmatprep.subr.bf16.mxu0 0
    %2420 = vmatpush1.bf16.msra.mxu0 %v2350
    %2421 = vmatprep.subr.bf16.mxu0 0
    %2422 = vmatpush1.bf16.msra.mxu0 %v2349
    %2423 = vmatprep.subr.bf16.mxu0 0
    %2424 = vmatpush1.bf16.msra.mxu0 %v2348
    %2425 = vmatprep.subr.bf16.mxu0 0
    %2426 = vmatpush1.bf16.msra.mxu0 %v2347
    %2427 = vmatprep.subr.bf16.mxu0 0
    %2428 = vmatpush2.bf16.msra.mxu0 %v2362
    %2429 = vmatprep.subr.bf16.mxu0 0
    %2430 = vmatpush2.bf16.msra.mxu0 %v2361
    %2431 = vmatprep.subr.bf16.mxu0 0
    %2432 = vmatpush2.bf16.msra.mxu0 %v2360
    %2433 = vmatprep.subr.bf16.mxu0 0
    %2434 = vmatpush2.bf16.msra.mxu0 %v2359
    %2435 = vmatprep.subr.bf16.mxu0 0
    %2436 = vmatpush2.bf16.msra.mxu0 %v2358
    %2437 = vmatprep.subr.bf16.mxu0 0
    %2438 = vmatpush2.bf16.msra.mxu0 %v2357
    %2439 = vmatprep.subr.bf16.mxu0 0
    %2440 = vmatpush2.bf16.msra.mxu0 %v2356
    %2441 = vmatprep.subr.bf16.mxu0 0
    %2442 = vmatpush2.bf16.msra.mxu0 %v2355
    %2443 = vmatprep.mubr.bf16.mxu0 %v2145
    %2444 = vmatmul.mubr.bf16.gmra.mxu0 %v2144
    %v2445 = vpop.f32.mrf.mxu0
    %v2446 = vadd.f32 %v2217, %v2445
    %v2447 = vpop.f32.mrf.mxu0
    %v2448 = vpop.f32.mrf.mxu0
    %v2449 = vpop.f32.mrf.mxu0
    %2450 = vdwg.mxu0
    %2451 = vmatprep.subr.bf16.mxu0 0
    %2452 = vmatpush1.bf16.msra.mxu0 %v2370
    %2453 = vmatprep.subr.bf16.mxu0 0
    %2454 = vmatpush1.bf16.msra.mxu0 %v2369
    %2455 = vmatprep.subr.bf16.mxu0 0
    %2456 = vmatpush1.bf16.msra.mxu0 %v2368
    %2457 = vmatprep.subr.bf16.mxu0 0
    %2458 = vmatpush1.bf16.msra.mxu0 %v2367
    %2459 = vmatprep.subr.bf16.mxu0 0
    %2460 = vmatpush1.bf16.msra.mxu0 %v2366
    %2461 = vmatprep.subr.bf16.mxu0 0
    %2462 = vmatpush1.bf16.msra.mxu0 %v2365
    %2463 = vmatprep.subr.bf16.mxu0 0
    %2464 = vmatpush1.bf16.msra.mxu0 %v2364
    %2465 = vmatprep.subr.bf16.mxu0 0
    %2466 = vmatpush1.bf16.msra.mxu0 %v2363
    %2467 = vmatprep.subr.bf16.mxu0 0
    %2468 = vmatpush2.bf16.msra.mxu0 %v2378
    %2469 = vmatprep.subr.bf16.mxu0 0
    %2470 = vmatpush2.bf16.msra.mxu0 %v2377
    %2471 = vmatprep.subr.bf16.mxu0 0
    %2472 = vmatpush2.bf16.msra.mxu0 %v2376
    %2473 = vmatprep.subr.bf16.mxu0 0
    %2474 = vmatpush2.bf16.msra.mxu0 %v2375
    %2475 = vmatprep.subr.bf16.mxu0 0
    %2476 = vmatpush2.bf16.msra.mxu0 %v2374
    %2477 = vmatprep.subr.bf16.mxu0 0
    %2478 = vmatpush2.bf16.msra.mxu0 %v2373
    %2479 = vmatprep.subr.bf16.mxu0 0
    %2480 = vmatpush2.bf16.msra.mxu0 %v2372
    %2481 = vmatprep.subr.bf16.mxu0 0
    %2482 = vmatpush2.bf16.msra.mxu0 %v2371
    %2483 = vmatprep.mubr.bf16.mxu0 %v2147
    %2484 = vmatmul.mubr.bf16.gmra.mxu0 %v2146
    %v2485 = vpop.f32.mrf.mxu0
    %v2486 = vadd.f32 %v2446, %v2485
    %v2487 = vpop.f32.mrf.mxu0
    %v2488 = vpop.f32.mrf.mxu0
    %v2489 = vpop.f32.mrf.mxu0
    %2490 = vdwg.mxu0
    %2491 = vst [vmem:[#allocation2] sm:$0x3] %v2486
    // Predicated region
    $region30: #{dqn_forward.5} parent=1 // pred_check
      _
    $region31: #{dqn_forward.5} parent=1 // pred_check_branch
      %2493 = sbr.rel (0) target = $region33
    $region32: #{dqn_forward.5} parent=1 // pred_region
      %s2495 = ssub.s32 32, 32
      %2496 = vsyncadd [#allocation3], %s2495
      %s2498 = sshll.u32 [#allocation2], 4
      %s2499 = int_to_ptr.vmem [resolvable:$true] %s2498
      %2501 = dma.vmem_to_hbm [thread:$0]  %s2499, 32, %s7, [#allocation3]
    $region33: #{dqn_forward.5} parent=1 // pred_fallthru
      _
    // Predicated region
    $region34: #{dqn_forward.5} parent=1 // pred_check
      _
    $region35: #{dqn_forward.5} parent=1 // pred_check_branch
      %2503 = sbr.rel (0) target = $region37
    $region36: #{dqn_forward.5} parent=1 // pred_region
      %2504 = dma.done [#allocation3], 32
    $region37: #{dqn_forward.5} parent=1 // pred_fallthru
      _
    %2505 = vsyncpa [#allocation3], 1

</llo_original>
